<compile_context>
chip_gen: v7x
topology: tpu7x:2x2x1
jax: 0.10.0
libtpu: 0.0.40
codegen_flags: <defaults>
</compile_context>

<pallas_src>
import jax
import jax.numpy as jnp
from jax import lax
from jax.experimental import pallas as pl
from jax.experimental.pallas import tpu as pltpu

EPS = 1e-5


# ---------------------------------------------------------------------------
# Wrapper: three gridded pallas_calls + tiny per-channel XLA glue
# ---------------------------------------------------------------------------
def bottleneck_forward(x_nchw, params):
    w1, g1, b1 = params["w1"], params["g1"], params["b1"]
    w2, g2, b2 = params["w2"], params["g2"], params["b2"]

    N, Cin, H, W = x_nchw.shape
    Cmid = w1.shape[0]
    Cout = w2.shape[0]
    assert Cin == Cout, "identity residual requires inplanes == planes (downsample=None)"
    HW = H * W
    P = N * HW

    # ---- layout / weight prep (glue) --------------------------------------
    x_img = jnp.transpose(x_nchw, (0, 2, 3, 1)).reshape(N, HW, Cin)          # f32
    w1_bf = jnp.transpose(w1[:, :, 0, 0]).astype(jnp.bfloat16)               # (Cin, Cmid)
    # torch (Cout, Cin, kh, kw) -> (kh*kw*Cin, Cout): the 9 taps sit contiguously on K.
    w2_bf = jnp.transpose(w2, (2, 3, 1, 0)).reshape(9 * Cmid, Cout).astype(jnp.bfloat16)

    par = pltpu.CompilerParams(dimension_semantics=("parallel",))

    img_spec = lambda c: pl.BlockSpec((1, HW, c), lambda n: (n, 0, 0))
    full_spec = lambda r, c: pl.BlockSpec((r, c), lambda n: (0, 0))
    stat_spec = lambda c: pl.BlockSpec((1, 1, c), lambda n: (n, 0, 0))

    conv_scratch = [pltpu.VMEM((H + 2, W + 2, Cmid), jnp.float32),   # padded act
                    pltpu.VMEM((H, W, 9 * Cmid), jnp.bfloat16)]      # im2col patches

    # Shared fused body: conv1(1x1, bf16 MXU) -> folded bn1 + relu -> on-chip
    # zero-pad -> 9-tap patch build (bf16) -> conv2(3x3) as ONE MXU matmul.
    def conv2_from_x(x_ref, w1_ref, sc1_ref, sh1_ref, w2_ref, ybuf, pbuf):
        xb = x_ref[0].astype(jnp.bfloat16)                                   # (HW, Cin)
        y1 = jnp.dot(xb, w1_ref[...], preferred_element_type=jnp.float32)    # (HW, Cmid)
        y1a = jnp.maximum(y1 * sc1_ref[...] + sh1_ref[...], 0.0)

        # Zero-padded activation lives only in VMEM (no HBM pad / im2col copy).
        # Re-zeroed every step: scratch is per-core and uninitialised.
        ybuf[...] = jnp.zeros((H + 2, W + 2, Cmid), jnp.float32)
        ybuf[1:H + 1, 1:W + 1, :] = y1a.reshape(H, W, Cmid)

        # Lay the 9 shifted taps contiguously along K; bf16 cast fused here.
        for kk in range(9):
            ky, kx = kk // 3, kk % 3
            pbuf[:, :, kk * Cmid:(kk + 1) * Cmid] = (
                ybuf[ky:ky + H, kx:kx + W, :].astype(jnp.bfloat16))
        patch = pbuf[...].reshape(HW, 9 * Cmid)                              # bf16
        return jnp.dot(patch, w2_ref[...], preferred_element_type=jnp.float32)

    # ---- pass 1: conv1 (1x1) per-image partial BN1 statistics -------------
    def conv1_stats_kernel(x_ref, w1_ref, s_ref, ss_ref):
        xb = x_ref[0].astype(jnp.bfloat16)                                   # (HW, Cin)
        y = jnp.dot(xb, w1_ref[...], preferred_element_type=jnp.float32)
        s_ref[...] = jnp.sum(y, axis=0, keepdims=True).reshape(1, 1, Cmid)
        ss_ref[...] = jnp.sum(y * y, axis=0, keepdims=True).reshape(1, 1, Cmid)

    s1p, ss1p = pl.pallas_call(
        conv1_stats_kernel,
        grid=(N,),
        in_specs=[img_spec(Cin), full_spec(Cin, Cmid)],
        out_specs=(stat_spec(Cmid), stat_spec(Cmid)),
        out_shape=(jax.ShapeDtypeStruct((N, 1, Cmid), jnp.float32),
                   jax.ShapeDtypeStruct((N, 1, Cmid), jnp.float32)),
        compiler_params=par,
    )(x_img, w1_bf)

    # Tiny per-channel glue: fold BN1 into one scale/shift (rsqrt hoisted here).
    # NOTE: E[y^2]-E[y]^2 in f32; switch to centered sums if N*H*W gets huge.
    mean1 = jnp.sum(s1p, axis=(0, 1)) / P
    var1 = jnp.maximum(jnp.sum(ss1p, axis=(0, 1)) / P - mean1 * mean1, 0.0)
    inv1 = lax.rsqrt(var1 + EPS)
    scale1 = (g1 * inv1).reshape(1, Cmid)
    shift1 = (b1 - mean1 * g1 * inv1).reshape(1, Cmid)

    # ---- pass 2: fused conv1+bn1+relu+conv2, emit only BN2 partial stats ---
    def conv2_stats_kernel(x_ref, w1_ref, sc1_ref, sh1_ref, w2_ref,
                           s_ref, ss_ref, ybuf, pbuf):
        z = conv2_from_x(x_ref, w1_ref, sc1_ref, sh1_ref, w2_ref, ybuf, pbuf)
        s_ref[...] = jnp.sum(z, axis=0, keepdims=True).reshape(1, 1, Cout)
        ss_ref[...] = jnp.sum(z * z, axis=0, keepdims=True).reshape(1, 1, Cout)

    s2p, ss2p = pl.pallas_call(
        conv2_stats_kernel,
        grid=(N,),
        in_specs=[img_spec(Cin), full_spec(Cin, Cmid),
                  full_spec(1, Cmid), full_spec(1, Cmid),
                  full_spec(9 * Cmid, Cout)],
        out_specs=(stat_spec(Cout), stat_spec(Cout)),
        out_shape=(jax.ShapeDtypeStruct((N, 1, Cout), jnp.float32),
                   jax.ShapeDtypeStruct((N, 1, Cout), jnp.float32)),
        scratch_shapes=conv_scratch,
        compiler_params=par,
    )(x_img, w1_bf, scale1, shift1, w2_bf)

    mean2 = jnp.sum(s2p, axis=(0, 1)) / P
    var2 = jnp.maximum(jnp.sum(ss2p, axis=(0, 1)) / P - mean2 * mean2, 0.0)
    inv2 = lax.rsqrt(var2 + EPS)
    scale2 = (g2 * inv2).reshape(1, Cout)
    shift2 = (b2 - mean2 * g2 * inv2).reshape(1, Cout)

    # ---- pass 3: recompute fused pipeline + folded bn2 + residual + relu ---
    def conv2_bn2_res_kernel(x_ref, w1_ref, sc1_ref, sh1_ref, w2_ref,
                             sc2_ref, sh2_ref, o_ref, ybuf, pbuf):
        z = conv2_from_x(x_ref, w1_ref, sc1_ref, sh1_ref, w2_ref, ybuf, pbuf)
        r = x_ref[0]                                                         # residual
        o_ref[...] = jnp.maximum(z * sc2_ref[...] + sh2_ref[...] + r, 0.0)[None]

    out_img = pl.pallas_call(
        conv2_bn2_res_kernel,
        grid=(N,),
        in_specs=[img_spec(Cin), full_spec(Cin, Cmid),
                  full_spec(1, Cmid), full_spec(1, Cmid),
                  full_spec(9 * Cmid, Cout),
                  full_spec(1, Cout), full_spec(1, Cout)],
        out_specs=img_spec(Cout),
        out_shape=jax.ShapeDtypeStruct((N, HW, Cout), jnp.float32),
        scratch_shapes=conv_scratch,
        compiler_params=par,
    )(x_img, w1_bf, scale1, shift1, w2_bf, scale2, shift2)

    return jnp.transpose(out_img.reshape(N, H, W, Cout), (0, 3, 1, 2))       # NHWC -> NCHW


# ---------------------------------------------------------------------------
# Deterministic parameter init (shapes from Bottleneck.__init__)
# ---------------------------------------------------------------------------
def init_params(key, inplanes, planes):
    k1, k2, k3, k4, k5, k6 = jax.random.split(key, 6)
    return {
        "w1": jax.random.normal(k1, (planes, inplanes, 1, 1), jnp.float32) * 0.2,
        "w2": jax.random.normal(k2, (planes, planes, 3, 3), jnp.float32) * 0.2,
        "g1": 1.0 + 0.1 * jax.random.normal(k3, (planes,), jnp.float32),
        "b1": 0.1 * jax.random.normal(k4, (planes,), jnp.float32),
        "g2": 1.0 + 0.1 * jax.random.normal(k5, (planes,), jnp.float32),
        "b2": 0.1 * jax.random.normal(k6, (planes,), jnp.float32),
    }


# ---------------------------------------------------------------------------
# Pure-JAX f32 reference (correctness check only)
# ---------------------------------------------------------------------------
def reference_forward(x, params):
    def bn(y, g, b):
        mean = jnp.mean(y, axis=(0, 2, 3), keepdims=True)
        var = jnp.mean((y - mean) ** 2, axis=(0, 2, 3), keepdims=True)
        return ((y - mean) * lax.rsqrt(var + EPS) * g.reshape(1, -1, 1, 1)
                + b.reshape(1, -1, 1, 1))

    dn = ("NCHW", "OIHW", "NCHW")
    y = lax.conv_general_dilated(x, params["w1"], (1, 1), "VALID",
                                 dimension_numbers=dn)
    y = jnp.maximum(bn(y, params["g1"], params["b1"]), 0.0)
    y = lax.conv_general_dilated(y, params["w2"], (1, 1),
                                 ((1, 1), (1, 1)), dimension_numbers=dn)
    y = bn(y, params["g2"], params["b2"]) + x
    return jnp.maximum(y, 0.0)


if __name__ == "__main__":
    key = jax.random.PRNGKey(0)
    kx, kp = jax.random.split(key)

    N, C, H, W = 2, 4, 16, 16          # inplanes = planes = 4, stride = 1
    x = jax.random.normal(kx, (N, C, H, W), jnp.float32)
    params = init_params(kp, inplanes=C, planes=C)

    out = jax.block_until_ready(jax.jit(bottleneck_forward)(x, params))
    ref = jax.block_until_ready(reference_forward(x, params))

    assert out.shape == (N, C, H, W)
    # bf16 MXU operands (f32 accumulation) vs an all-f32 reference -> relaxed tol.
    assert jnp.allclose(out, ref, rtol=5e-2, atol=5e-2), "mismatch vs JAX reference"

    print("KERNEL_OK")
</pallas_src>

<mosaic_0001>
module attributes {stable_mosaic.version = 11 : i64} {
  func.func @conv1_stats_kernel(%arg0: i32, %arg1: memref<1x256x4xf32, #tpu.memory_space<vmem>>, %arg2: memref<4x4xbf16, #tpu.memory_space<vmem>>, %arg3: memref<1x1x4xf32, #tpu.memory_space<vmem>>, %arg4: memref<1x1x4xf32, #tpu.memory_space<vmem>>) attributes {dimension_semantics = [#tpu.dimension_semantics<parallel>], iteration_bounds = array<i64: 2>, scalar_prefetch = 0 : i64, scratch_operands = 0 : i64, tpu.core_type = #tpu.core_type<tc>, window_params = [{transform_indices = @transform_0, window_bounds = array<i64: 1, 256, 4>}, {pipeline_mode = #tpu.pipeline_mode<synchronous>, transform_indices = @transform_1, window_bounds = array<i64: 4, 4>}, {transform_indices = @transform_2, window_bounds = array<i64: 1, 1, 4>}, {transform_indices = @transform_3, window_bounds = array<i64: 1, 1, 4>}]} {
    %c0 = arith.constant 0 : index
    %c0_0 = arith.constant 0 : index
    %c0_1 = arith.constant 0 : index
    %0 = vector.load %arg1[%c0, %c0_0, %c0_1] : memref<1x256x4xf32, #tpu.memory_space<vmem>>, vector<1x256x4xf32>
    %1 = vector.shape_cast %0 : vector<1x256x4xf32> to vector<256x4xf32>
    %2 = arith.truncf %1 : vector<256x4xf32> to vector<256x4xbf16>
    %c0_2 = arith.constant 0 : index
    %c0_3 = arith.constant 0 : index
    %3 = vector.load %arg2[%c0_2, %c0_3] : memref<4x4xbf16, #tpu.memory_space<vmem>>, vector<4x4xbf16>
    %cst = arith.constant dense<0.000000e+00> : vector<256x4xf32>
    %4 = tpu.matmul %2, %3, %cst {dimension_numbers = #tpu.dot_dimension_numbers<[1], [0], [0], [1], [0, 0, 1, 1], [], []>} : vector<256x4xbf16>, vector<4x4xbf16>, vector<256x4xf32> -> vector<256x4xf32>
    %cst_4 = arith.constant dense<0.000000e+00> : vector<4xf32>
    %5 = vector.multi_reduction <add>, %4, %cst_4 [0] : vector<256x4xf32> to vector<4xf32>
    %6 = vector.shape_cast %5 : vector<4xf32> to vector<1x4xf32>
    %7 = vector.shape_cast %6 : vector<1x4xf32> to vector<1x1x4xf32>
    %c0_5 = arith.constant 0 : index
    %c0_6 = arith.constant 0 : index
    %c0_7 = arith.constant 0 : index
    %8 = vector.load %arg3[%c0_5, %c0_6, %c0_7] : memref<1x1x4xf32, #tpu.memory_space<vmem>>, vector<1x1x4xf32>
    tpu.vector_store %arg3[%c0_5, %c0_6, %c0_7], %7 {strides = array<i32>} : memref<1x1x4xf32, #tpu.memory_space<vmem>>, vector<1x1x4xf32>,
    %9 = arith.mulf %4, %4 : vector<256x4xf32>
    %cst_8 = arith.constant dense<0.000000e+00> : vector<4xf32>
    %10 = vector.multi_reduction <add>, %9, %cst_8 [0] : vector<256x4xf32> to vector<4xf32>
    %11 = vector.shape_cast %10 : vector<4xf32> to vector<1x4xf32>
    %12 = vector.shape_cast %11 : vector<1x4xf32> to vector<1x1x4xf32>
    %c0_9 = arith.constant 0 : index
    %c0_10 = arith.constant 0 : index
    %c0_11 = arith.constant 0 : index
    %13 = vector.load %arg4[%c0_9, %c0_10, %c0_11] : memref<1x1x4xf32, #tpu.memory_space<vmem>>, vector<1x1x4xf32>
    tpu.vector_store %arg4[%c0_9, %c0_10, %c0_11], %12 {strides = array<i32>} : memref<1x1x4xf32, #tpu.memory_space<vmem>>, vector<1x1x4xf32>,
    return
  }
  func.func @transform_0(%arg0: i32) -> (i32, i32, i32) {
    %c0_i32 = arith.constant 0 : i32
    %c0_i32_0 = arith.constant 0 : i32
    %c0_i32_1 = arith.constant 0 : i32
    return %arg0, %c0_i32, %c0_i32_0 : i32, i32, i32
  }
  func.func @transform_1(%arg0: i32) -> (i32, i32) {
    %c0_i32 = arith.constant 0 : i32
    %c0_i32_0 = arith.constant 0 : i32
    %c0_i32_1 = arith.constant 0 : i32
    return %c0_i32, %c0_i32_0 : i32, i32
  }
  func.func @transform_2(%arg0: i32) -> (i32, i32, i32) {
    %c0_i32 = arith.constant 0 : i32
    %c0_i32_0 = arith.constant 0 : i32
    %c0_i32_1 = arith.constant 0 : i32
    return %arg0, %c0_i32, %c0_i32_0 : i32, i32, i32
  }
  func.func @transform_3(%arg0: i32) -> (i32, i32, i32) {
    %c0_i32 = arith.constant 0 : i32
    %c0_i32_0 = arith.constant 0 : i32
    %c0_i32_1 = arith.constant 0 : i32
    return %arg0, %c0_i32, %c0_i32_0 : i32, i32, i32
  }
}

module attributes {stable_mosaic.version = 11 : i64} {
  func.func @conv2_stats_kernel(%arg0: i32, %arg1: memref<1x256x4xf32, #tpu.memory_space<vmem>>, %arg2: memref<4x4xbf16, #tpu.memory_space<vmem>>, %arg3: memref<1x4xf32, #tpu.memory_space<vmem>>, %arg4: memref<1x4xf32, #tpu.memory_space<vmem>>, %arg5: memref<36x4xbf16, #tpu.memory_space<vmem>>, %arg6: memref<1x1x4xf32, #tpu.memory_space<vmem>>, %arg7: memref<1x1x4xf32, #tpu.memory_space<vmem>>, %arg8: memref<18x18x4xf32, #tpu.memory_space<vmem>>, %arg9: memref<16x16x36xbf16, #tpu.memory_space<vmem>>) attributes {dimension_semantics = [#tpu.dimension_semantics<parallel>], iteration_bounds = array<i64: 2>, scalar_prefetch = 0 : i64, scratch_operands = 2 : i64, tpu.core_type = #tpu.core_type<tc>, window_params = [{transform_indices = @transform_0, window_bounds = array<i64: 1, 256, 4>}, {pipeline_mode = #tpu.pipeline_mode<synchronous>, transform_indices = @transform_1, window_bounds = array<i64: 4, 4>}, {pipeline_mode = #tpu.pipeline_mode<synchronous>, transform_indices = @transform_2, window_bounds = array<i64: 1, 4>}, {pipeline_mode = #tpu.pipeline_mode<synchronous>, transform_indices = @transform_3, window_bounds = array<i64: 1, 4>}, {pipeline_mode = #tpu.pipeline_mode<synchronous>, transform_indices = @transform_4, window_bounds = array<i64: 36, 4>}, {transform_indices = @transform_5, window_bounds = array<i64: 1, 1, 4>}, {transform_indices = @transform_6, window_bounds = array<i64: 1, 1, 4>}]} {
    %c0 = arith.constant 0 : index
    %c0_0 = arith.constant 0 : index
    %c0_1 = arith.constant 0 : index
    %0 = vector.load %arg1[%c0, %c0_0, %c0_1] : memref<1x256x4xf32, #tpu.memory_space<vmem>>, vector<1x256x4xf32>
    %1 = vector.shape_cast %0 : vector<1x256x4xf32> to vector<256x4xf32>
    %2 = arith.truncf %1 : vector<256x4xf32> to vector<256x4xbf16>
    %c0_2 = arith.constant 0 : index
    %c0_3 = arith.constant 0 : index
    %3 = vector.load %arg2[%c0_2, %c0_3] : memref<4x4xbf16, #tpu.memory_space<vmem>>, vector<4x4xbf16>
    %cst = arith.constant dense<0.000000e+00> : vector<256x4xf32>
    %4 = tpu.matmul %2, %3, %cst {dimension_numbers = #tpu.dot_dimension_numbers<[1], [0], [0], [1], [0, 0, 1, 1], [], []>} : vector<256x4xbf16>, vector<4x4xbf16>, vector<256x4xf32> -> vector<256x4xf32>
    %c0_4 = arith.constant 0 : index
    %c0_5 = arith.constant 0 : index
    %5 = vector.load %arg3[%c0_4, %c0_5] : memref<1x4xf32, #tpu.memory_space<vmem>>, vector<1x4xf32>
    %6 = vector.broadcast %5 : vector<1x4xf32> to vector<256x4xf32>
    %7 = arith.mulf %4, %6 : vector<256x4xf32>
    %c0_6 = arith.constant 0 : index
    %c0_7 = arith.constant 0 : index
    %8 = vector.load %arg4[%c0_6, %c0_7] : memref<1x4xf32, #tpu.memory_space<vmem>>, vector<1x4xf32>
    %9 = vector.broadcast %8 : vector<1x4xf32> to vector<256x4xf32>
    %10 = arith.addf %7, %9 : vector<256x4xf32>
    %cst_8 = arith.constant 0.000000e+00 : f32
    %11 = vector.broadcast %cst_8 : f32 to vector<256x4xf32>
    %12 = arith.maximumf %10, %11 : vector<256x4xf32>
    %cst_9 = arith.constant 0.000000e+00 : f32
    %13 = vector.broadcast %cst_9 : f32 to vector<18x18x4xf32>
    %c0_10 = arith.constant 0 : index
    %c0_11 = arith.constant 0 : index
    %c0_12 = arith.constant 0 : index
    %14 = vector.load %arg8[%c0_10, %c0_11, %c0_12] : memref<18x18x4xf32, #tpu.memory_space<vmem>>, vector<18x18x4xf32>
    tpu.vector_store %arg8[%c0_10, %c0_11, %c0_12], %13 {strides = array<i32>} : memref<18x18x4xf32, #tpu.memory_space<vmem>>, vector<18x18x4xf32>,
    %15 = vector.shape_cast %12 : vector<256x4xf32> to vector<16x16x4xf32>
    %c1 = arith.constant 1 : index
    %c1_13 = arith.constant 1 : index
    %c0_14 = arith.constant 0 : index
    %16 = vector.load %arg8[%c1, %c1_13, %c0_14] : memref<18x18x4xf32, #tpu.memory_space<vmem>>, vector<16x16x4xf32>
    tpu.vector_store %arg8[%c1, %c1_13, %c0_14], %15 {strides = array<i32>} : memref<18x18x4xf32, #tpu.memory_space<vmem>>, vector<16x16x4xf32>,
    %c0_15 = arith.constant 0 : index
    %c0_16 = arith.constant 0 : index
    %c0_17 = arith.constant 0 : index
    %17 = vector.load %arg8[%c0_15, %c0_16, %c0_17] : memref<18x18x4xf32, #tpu.memory_space<vmem>>, vector<16x16x4xf32>
    %18 = arith.truncf %17 : vector<16x16x4xf32> to vector<16x16x4xbf16>
    %c0_18 = arith.constant 0 : index
    %c0_19 = arith.constant 0 : index
    %c0_20 = arith.constant 0 : index
    %19 = vector.load %arg9[%c0_18, %c0_19, %c0_20] : memref<16x16x36xbf16, #tpu.memory_space<vmem>>, vector<16x16x4xbf16>
    tpu.vector_store %arg9[%c0_18, %c0_19, %c0_20], %18 {strides = array<i32>} : memref<16x16x36xbf16, #tpu.memory_space<vmem>>, vector<16x16x4xbf16>,
    %c0_21 = arith.constant 0 : index
    %c1_22 = arith.constant 1 : index
    %c0_23 = arith.constant 0 : index
    %20 = vector.load %arg8[%c0_21, %c1_22, %c0_23] : memref<18x18x4xf32, #tpu.memory_space<vmem>>, vector<16x16x4xf32>
    %21 = arith.truncf %20 : vector<16x16x4xf32> to vector<16x16x4xbf16>
    %c0_24 = arith.constant 0 : index
    %c0_25 = arith.constant 0 : index
    %c4 = arith.constant 4 : index
    %22 = vector.load %arg9[%c0_24, %c0_25, %c4] : memref<16x16x36xbf16, #tpu.memory_space<vmem>>, vector<16x16x4xbf16>
    tpu.vector_store %arg9[%c0_24, %c0_25, %c4], %21 {strides = array<i32>} : memref<16x16x36xbf16, #tpu.memory_space<vmem>>, vector<16x16x4xbf16>,
    %c0_26 = arith.constant 0 : index
    %c2 = arith.constant 2 : index
    %c0_27 = arith.constant 0 : index
    %23 = vector.load %arg8[%c0_26, %c2, %c0_27] : memref<18x18x4xf32, #tpu.memory_space<vmem>>, vector<16x16x4xf32>
    %24 = arith.truncf %23 : vector<16x16x4xf32> to vector<16x16x4xbf16>
    %c0_28 = arith.constant 0 : index
    %c0_29 = arith.constant 0 : index
    %c8 = arith.constant 8 : index
    %25 = vector.load %arg9[%c0_28, %c0_29, %c8] : memref<16x16x36xbf16, #tpu.memory_space<vmem>>, vector<16x16x4xbf16>
    tpu.vector_store %arg9[%c0_28, %c0_29, %c8], %24 {strides = array<i32>} : memref<16x16x36xbf16, #tpu.memory_space<vmem>>, vector<16x16x4xbf16>,
    %c1_30 = arith.constant 1 : index
    %c0_31 = arith.constant 0 : index
    %c0_32 = arith.constant 0 : index
    %26 = vector.load %arg8[%c1_30, %c0_31, %c0_32] : memref<18x18x4xf32, #tpu.memory_space<vmem>>, vector<16x16x4xf32>
    %27 = arith.truncf %26 : vector<16x16x4xf32> to vector<16x16x4xbf16>
    %c0_33 = arith.constant 0 : index
    %c0_34 = arith.constant 0 : index
    %c12 = arith.constant 12 : index
    %28 = vector.load %arg9[%c0_33, %c0_34, %c12] : memref<16x16x36xbf16, #tpu.memory_space<vmem>>, vector<16x16x4xbf16>
    tpu.vector_store %arg9[%c0_33, %c0_34, %c12], %27 {strides = array<i32>} : memref<16x16x36xbf16, #tpu.memory_space<vmem>>, vector<16x16x4xbf16>,
    %c1_35 = arith.constant 1 : index
    %c1_36 = arith.constant 1 : index
    %c0_37 = arith.constant 0 : index
    %29 = vector.load %arg8[%c1_35, %c1_36, %c0_37] : memref<18x18x4xf32, #tpu.memory_space<vmem>>, vector<16x16x4xf32>
    %30 = arith.truncf %29 : vector<16x16x4xf32> to vector<16x16x4xbf16>
    %c0_38 = arith.constant 0 : index
    %c0_39 = arith.constant 0 : index
    %c16 = arith.constant 16 : index
    %31 = vector.load %arg9[%c0_38, %c0_39, %c16] : memref<16x16x36xbf16, #tpu.memory_space<vmem>>, vector<16x16x4xbf16>
    tpu.vector_store %arg9[%c0_38, %c0_39, %c16], %30 {strides = array<i32>} : memref<16x16x36xbf16, #tpu.memory_space<vmem>>, vector<16x16x4xbf16>,
    %c1_40 = arith.constant 1 : index
    %c2_41 = arith.constant 2 : index
    %c0_42 = arith.constant 0 : index
    %32 = vector.load %arg8[%c1_40, %c2_41, %c0_42] : memref<18x18x4xf32, #tpu.memory_space<vmem>>, vector<16x16x4xf32>
    %33 = arith.truncf %32 : vector<16x16x4xf32> to vector<16x16x4xbf16>
    %c0_43 = arith.constant 0 : index
    %c0_44 = arith.constant 0 : index
    %c20 = arith.constant 20 : index
    %34 = vector.load %arg9[%c0_43, %c0_44, %c20] : memref<16x16x36xbf16, #tpu.memory_space<vmem>>, vector<16x16x4xbf16>
    tpu.vector_store %arg9[%c0_43, %c0_44, %c20], %33 {strides = array<i32>} : memref<16x16x36xbf16, #tpu.memory_space<vmem>>, vector<16x16x4xbf16>,
    %c2_45 = arith.constant 2 : index
    %c0_46 = arith.constant 0 : index
    %c0_47 = arith.constant 0 : index
    %35 = vector.load %arg8[%c2_45, %c0_46, %c0_47] : memref<18x18x4xf32, #tpu.memory_space<vmem>>, vector<16x16x4xf32>
    %36 = arith.truncf %35 : vector<16x16x4xf32> to vector<16x16x4xbf16>
    %c0_48 = arith.constant 0 : index
    %c0_49 = arith.constant 0 : index
    %c24 = arith.constant 24 : index
    %37 = vector.load %arg9[%c0_48, %c0_49, %c24] : memref<16x16x36xbf16, #tpu.memory_space<vmem>>, vector<16x16x4xbf16>
    tpu.vector_store %arg9[%c0_48, %c0_49, %c24], %36 {strides = array<i32>} : memref<16x16x36xbf16, #tpu.memory_space<vmem>>, vector<16x16x4xbf16>,
    %c2_50 = arith.constant 2 : index
    %c1_51 = arith.constant 1 : index
    %c0_52 = arith.constant 0 : index
    %38 = vector.load %arg8[%c2_50, %c1_51, %c0_52] : memref<18x18x4xf32, #tpu.memory_space<vmem>>, vector<16x16x4xf32>
    %39 = arith.truncf %38 : vector<16x16x4xf32> to vector<16x16x4xbf16>
    %c0_53 = arith.constant 0 : index
    %c0_54 = arith.constant 0 : index
    %c28 = arith.constant 28 : index
    %40 = vector.load %arg9[%c0_53, %c0_54, %c28] : memref<16x16x36xbf16, #tpu.memory_space<vmem>>, vector<16x16x4xbf16>
    tpu.vector_store %arg9[%c0_53, %c0_54, %c28], %39 {strides = array<i32>} : memref<16x16x36xbf16, #tpu.memory_space<vmem>>, vector<16x16x4xbf16>,
    %c2_55 = arith.constant 2 : index
    %c2_56 = arith.constant 2 : index
    %c0_57 = arith.constant 0 : index
    %41 = vector.load %arg8[%c2_55, %c2_56, %c0_57] : memref<18x18x4xf32, #tpu.memory_space<vmem>>, vector<16x16x4xf32>
    %42 = arith.truncf %41 : vector<16x16x4xf32> to vector<16x16x4xbf16>
    %c0_58 = arith.constant 0 : index
    %c0_59 = arith.constant 0 : index
    %c32 = arith.constant 32 : index
    %43 = vector.load %arg9[%c0_58, %c0_59, %c32] : memref<16x16x36xbf16, #tpu.memory_space<vmem>>, vector<16x16x4xbf16>
    tpu.vector_store %arg9[%c0_58, %c0_59, %c32], %42 {strides = array<i32>} : memref<16x16x36xbf16, #tpu.memory_space<vmem>>, vector<16x16x4xbf16>,
    %c0_60 = arith.constant 0 : index
    %c0_61 = arith.constant 0 : index
    %c0_62 = arith.constant 0 : index
    %44 = vector.load %arg9[%c0_60, %c0_61, %c0_62] : memref<16x16x36xbf16, #tpu.memory_space<vmem>>, vector<16x16x36xbf16>
    %45 = vector.shape_cast %44 : vector<16x16x36xbf16> to vector<256x36xbf16>
    %c0_63 = arith.constant 0 : index
    %c0_64 = arith.constant 0 : index
    %46 = vector.load %arg5[%c0_63, %c0_64] : memref<36x4xbf16, #tpu.memory_space<vmem>>, vector<36x4xbf16>
    %cst_65 = arith.constant dense<0.000000e+00> : vector<256x4xf32>
    %47 = tpu.matmul %45, %46, %cst_65 {dimension_numbers = #tpu.dot_dimension_numbers<[1], [0], [0], [1], [0, 0, 1, 1], [], []>} : vector<256x36xbf16>, vector<36x4xbf16>, vector<256x4xf32> -> vector<256x4xf32>
    %cst_66 = arith.constant dense<0.000000e+00> : vector<4xf32>
    %48 = vector.multi_reduction <add>, %47, %cst_66 [0] : vector<256x4xf32> to vector<4xf32>
    %49 = vector.shape_cast %48 : vector<4xf32> to vector<1x4xf32>
    %50 = vector.shape_cast %49 : vector<1x4xf32> to vector<1x1x4xf32>
    %c0_67 = arith.constant 0 : index
    %c0_68 = arith.constant 0 : index
    %c0_69 = arith.constant 0 : index
    %51 = vector.load %arg6[%c0_67, %c0_68, %c0_69] : memref<1x1x4xf32, #tpu.memory_space<vmem>>, vector<1x1x4xf32>
    tpu.vector_store %arg6[%c0_67, %c0_68, %c0_69], %50 {strides = array<i32>} : memref<1x1x4xf32, #tpu.memory_space<vmem>>, vector<1x1x4xf32>,
    %52 = arith.mulf %47, %47 : vector<256x4xf32>
    %cst_70 = arith.constant dense<0.000000e+00> : vector<4xf32>
    %53 = vector.multi_reduction <add>, %52, %cst_70 [0] : vector<256x4xf32> to vector<4xf32>
    %54 = vector.shape_cast %53 : vector<4xf32> to vector<1x4xf32>
    %55 = vector.shape_cast %54 : vector<1x4xf32> to vector<1x1x4xf32>
    %c0_71 = arith.constant 0 : index
    %c0_72 = arith.constant 0 : index
    %c0_73 = arith.constant 0 : index
    %56 = vector.load %arg7[%c0_71, %c0_72, %c0_73] : memref<1x1x4xf32, #tpu.memory_space<vmem>>, vector<1x1x4xf32>
    tpu.vector_store %arg7[%c0_71, %c0_72, %c0_73], %55 {strides = array<i32>} : memref<1x1x4xf32, #tpu.memory_space<vmem>>, vector<1x1x4xf32>,
    return
  }
  func.func @transform_0(%arg0: i32) -> (i32, i32, i32) {
    %c0_i32 = arith.constant 0 : i32
    %c0_i32_0 = arith.constant 0 : i32
    %c0_i32_1 = arith.constant 0 : i32
    return %arg0, %c0_i32, %c0_i32_0 : i32, i32, i32
  }
  func.func @transform_1(%arg0: i32) -> (i32, i32) {
    %c0_i32 = arith.constant 0 : i32
    %c0_i32_0 = arith.constant 0 : i32
    %c0_i32_1 = arith.constant 0 : i32
    return %c0_i32, %c0_i32_0 : i32, i32
  }
  func.func @transform_2(%arg0: i32) -> (i32, i32) {
    %c0_i32 = arith.constant 0 : i32
    %c0_i32_0 = arith.constant 0 : i32
    %c0_i32_1 = arith.constant 0 : i32
    return %c0_i32, %c0_i32_0 : i32, i32
  }
  func.func @transform_3(%arg0: i32) -> (i32, i32) {
    %c0_i32 = arith.constant 0 : i32
    %c0_i32_0 = arith.constant 0 : i32
    %c0_i32_1 = arith.constant 0 : i32
    return %c0_i32, %c0_i32_0 : i32, i32
  }
  func.func @transform_4(%arg0: i32) -> (i32, i32) {
    %c0_i32 = arith.constant 0 : i32
    %c0_i32_0 = arith.constant 0 : i32
    %c0_i32_1 = arith.constant 0 : i32
    return %c0_i32, %c0_i32_0 : i32, i32
  }
  func.func @transform_5(%arg0: i32) -> (i32, i32, i32) {
    %c0_i32 = arith.constant 0 : i32
    %c0_i32_0 = arith.constant 0 : i32
    %c0_i32_1 = arith.constant 0 : i32
    return %arg0, %c0_i32, %c0_i32_0 : i32, i32, i32
  }
  func.func @transform_6(%arg0: i32) -> (i32, i32, i32) {
    %c0_i32 = arith.constant 0 : i32
    %c0_i32_0 = arith.constant 0 : i32
    %c0_i32_1 = arith.constant 0 : i32
    return %arg0, %c0_i32, %c0_i32_0 : i32, i32, i32
  }
}

module attributes {stable_mosaic.version = 11 : i64} {
  func.func @conv2_bn2_res_kernel(%arg0: i32, %arg1: memref<1x256x4xf32, #tpu.memory_space<vmem>>, %arg2: memref<4x4xbf16, #tpu.memory_space<vmem>>, %arg3: memref<1x4xf32, #tpu.memory_space<vmem>>, %arg4: memref<1x4xf32, #tpu.memory_space<vmem>>, %arg5: memref<36x4xbf16, #tpu.memory_space<vmem>>, %arg6: memref<1x4xf32, #tpu.memory_space<vmem>>, %arg7: memref<1x4xf32, #tpu.memory_space<vmem>>, %arg8: memref<1x256x4xf32, #tpu.memory_space<vmem>>, %arg9: memref<18x18x4xf32, #tpu.memory_space<vmem>>, %arg10: memref<16x16x36xbf16, #tpu.memory_space<vmem>>) attributes {dimension_semantics = [#tpu.dimension_semantics<parallel>], iteration_bounds = array<i64: 2>, scalar_prefetch = 0 : i64, scratch_operands = 2 : i64, tpu.core_type = #tpu.core_type<tc>, window_params = [{transform_indices = @transform_0, window_bounds = array<i64: 1, 256, 4>}, {pipeline_mode = #tpu.pipeline_mode<synchronous>, transform_indices = @transform_1, window_bounds = array<i64: 4, 4>}, {pipeline_mode = #tpu.pipeline_mode<synchronous>, transform_indices = @transform_2, window_bounds = array<i64: 1, 4>}, {pipeline_mode = #tpu.pipeline_mode<synchronous>, transform_indices = @transform_3, window_bounds = array<i64: 1, 4>}, {pipeline_mode = #tpu.pipeline_mode<synchronous>, transform_indices = @transform_4, window_bounds = array<i64: 36, 4>}, {pipeline_mode = #tpu.pipeline_mode<synchronous>, transform_indices = @transform_5, window_bounds = array<i64: 1, 4>}, {pipeline_mode = #tpu.pipeline_mode<synchronous>, transform_indices = @transform_6, window_bounds = array<i64: 1, 4>}, {transform_indices = @transform_7, window_bounds = array<i64: 1, 256, 4>}]} {
    %c0 = arith.constant 0 : index
    %c0_0 = arith.constant 0 : index
    %c0_1 = arith.constant 0 : index
    %0 = vector.load %arg1[%c0, %c0_0, %c0_1] : memref<1x256x4xf32, #tpu.memory_space<vmem>>, vector<1x256x4xf32>
    %1 = vector.shape_cast %0 : vector<1x256x4xf32> to vector<256x4xf32>
    %2 = arith.truncf %1 : vector<256x4xf32> to vector<256x4xbf16>
    %c0_2 = arith.constant 0 : index
    %c0_3 = arith.constant 0 : index
    %3 = vector.load %arg2[%c0_2, %c0_3] : memref<4x4xbf16, #tpu.memory_space<vmem>>, vector<4x4xbf16>
    %cst = arith.constant dense<0.000000e+00> : vector<256x4xf32>
    %4 = tpu.matmul %2, %3, %cst {dimension_numbers = #tpu.dot_dimension_numbers<[1], [0], [0], [1], [0, 0, 1, 1], [], []>} : vector<256x4xbf16>, vector<4x4xbf16>, vector<256x4xf32> -> vector<256x4xf32>
    %c0_4 = arith.constant 0 : index
    %c0_5 = arith.constant 0 : index
    %5 = vector.load %arg3[%c0_4, %c0_5] : memref<1x4xf32, #tpu.memory_space<vmem>>, vector<1x4xf32>
    %6 = vector.broadcast %5 : vector<1x4xf32> to vector<256x4xf32>
    %7 = arith.mulf %4, %6 : vector<256x4xf32>
    %c0_6 = arith.constant 0 : index
    %c0_7 = arith.constant 0 : index
    %8 = vector.load %arg4[%c0_6, %c0_7] : memref<1x4xf32, #tpu.memory_space<vmem>>, vector<1x4xf32>
    %9 = vector.broadcast %8 : vector<1x4xf32> to vector<256x4xf32>
    %10 = arith.addf %7, %9 : vector<256x4xf32>
    %cst_8 = arith.constant 0.000000e+00 : f32
    %11 = vector.broadcast %cst_8 : f32 to vector<256x4xf32>
    %12 = arith.maximumf %10, %11 : vector<256x4xf32>
    %cst_9 = arith.constant 0.000000e+00 : f32
    %13 = vector.broadcast %cst_9 : f32 to vector<18x18x4xf32>
    %c0_10 = arith.constant 0 : index
    %c0_11 = arith.constant 0 : index
    %c0_12 = arith.constant 0 : index
    %14 = vector.load %arg9[%c0_10, %c0_11, %c0_12] : memref<18x18x4xf32, #tpu.memory_space<vmem>>, vector<18x18x4xf32>
    tpu.vector_store %arg9[%c0_10, %c0_11, %c0_12], %13 {strides = array<i32>} : memref<18x18x4xf32, #tpu.memory_space<vmem>>, vector<18x18x4xf32>,
    %15 = vector.shape_cast %12 : vector<256x4xf32> to vector<16x16x4xf32>
    %c1 = arith.constant 1 : index
    %c1_13 = arith.constant 1 : index
    %c0_14 = arith.constant 0 : index
    %16 = vector.load %arg9[%c1, %c1_13, %c0_14] : memref<18x18x4xf32, #tpu.memory_space<vmem>>, vector<16x16x4xf32>
    tpu.vector_store %arg9[%c1, %c1_13, %c0_14], %15 {strides = array<i32>} : memref<18x18x4xf32, #tpu.memory_space<vmem>>, vector<16x16x4xf32>,
    %c0_15 = arith.constant 0 : index
    %c0_16 = arith.constant 0 : index
    %c0_17 = arith.constant 0 : index
    %17 = vector.load %arg9[%c0_15, %c0_16, %c0_17] : memref<18x18x4xf32, #tpu.memory_space<vmem>>, vector<16x16x4xf32>
    %18 = arith.truncf %17 : vector<16x16x4xf32> to vector<16x16x4xbf16>
    %c0_18 = arith.constant 0 : index
    %c0_19 = arith.constant 0 : index
    %c0_20 = arith.constant 0 : index
    %19 = vector.load %arg10[%c0_18, %c0_19, %c0_20] : memref<16x16x36xbf16, #tpu.memory_space<vmem>>, vector<16x16x4xbf16>
    tpu.vector_store %arg10[%c0_18, %c0_19, %c0_20], %18 {strides = array<i32>} : memref<16x16x36xbf16, #tpu.memory_space<vmem>>, vector<16x16x4xbf16>,
    %c0_21 = arith.constant 0 : index
    %c1_22 = arith.constant 1 : index
    %c0_23 = arith.constant 0 : index
    %20 = vector.load %arg9[%c0_21, %c1_22, %c0_23] : memref<18x18x4xf32, #tpu.memory_space<vmem>>, vector<16x16x4xf32>
    %21 = arith.truncf %20 : vector<16x16x4xf32> to vector<16x16x4xbf16>
    %c0_24 = arith.constant 0 : index
    %c0_25 = arith.constant 0 : index
    %c4 = arith.constant 4 : index
    %22 = vector.load %arg10[%c0_24, %c0_25, %c4] : memref<16x16x36xbf16, #tpu.memory_space<vmem>>, vector<16x16x4xbf16>
    tpu.vector_store %arg10[%c0_24, %c0_25, %c4], %21 {strides = array<i32>} : memref<16x16x36xbf16, #tpu.memory_space<vmem>>, vector<16x16x4xbf16>,
    %c0_26 = arith.constant 0 : index
    %c2 = arith.constant 2 : index
    %c0_27 = arith.constant 0 : index
    %23 = vector.load %arg9[%c0_26, %c2, %c0_27] : memref<18x18x4xf32, #tpu.memory_space<vmem>>, vector<16x16x4xf32>
    %24 = arith.truncf %23 : vector<16x16x4xf32> to vector<16x16x4xbf16>
    %c0_28 = arith.constant 0 : index
    %c0_29 = arith.constant 0 : index
    %c8 = arith.constant 8 : index
    %25 = vector.load %arg10[%c0_28, %c0_29, %c8] : memref<16x16x36xbf16, #tpu.memory_space<vmem>>, vector<16x16x4xbf16>
    tpu.vector_store %arg10[%c0_28, %c0_29, %c8], %24 {strides = array<i32>} : memref<16x16x36xbf16, #tpu.memory_space<vmem>>, vector<16x16x4xbf16>,
    %c1_30 = arith.constant 1 : index
    %c0_31 = arith.constant 0 : index
    %c0_32 = arith.constant 0 : index
    %26 = vector.load %arg9[%c1_30, %c0_31, %c0_32] : memref<18x18x4xf32, #tpu.memory_space<vmem>>, vector<16x16x4xf32>
    %27 = arith.truncf %26 : vector<16x16x4xf32> to vector<16x16x4xbf16>
    %c0_33 = arith.constant 0 : index
    %c0_34 = arith.constant 0 : index
    %c12 = arith.constant 12 : index
    %28 = vector.load %arg10[%c0_33, %c0_34, %c12] : memref<16x16x36xbf16, #tpu.memory_space<vmem>>, vector<16x16x4xbf16>
    tpu.vector_store %arg10[%c0_33, %c0_34, %c12], %27 {strides = array<i32>} : memref<16x16x36xbf16, #tpu.memory_space<vmem>>, vector<16x16x4xbf16>,
    %c1_35 = arith.constant 1 : index
    %c1_36 = arith.constant 1 : index
    %c0_37 = arith.constant 0 : index
    %29 = vector.load %arg9[%c1_35, %c1_36, %c0_37] : memref<18x18x4xf32, #tpu.memory_space<vmem>>, vector<16x16x4xf32>
    %30 = arith.truncf %29 : vector<16x16x4xf32> to vector<16x16x4xbf16>
    %c0_38 = arith.constant 0 : index
    %c0_39 = arith.constant 0 : index
    %c16 = arith.constant 16 : index
    %31 = vector.load %arg10[%c0_38, %c0_39, %c16] : memref<16x16x36xbf16, #tpu.memory_space<vmem>>, vector<16x16x4xbf16>
    tpu.vector_store %arg10[%c0_38, %c0_39, %c16], %30 {strides = array<i32>} : memref<16x16x36xbf16, #tpu.memory_space<vmem>>, vector<16x16x4xbf16>,
    %c1_40 = arith.constant 1 : index
    %c2_41 = arith.constant 2 : index
    %c0_42 = arith.constant 0 : index
    %32 = vector.load %arg9[%c1_40, %c2_41, %c0_42] : memref<18x18x4xf32, #tpu.memory_space<vmem>>, vector<16x16x4xf32>
    %33 = arith.truncf %32 : vector<16x16x4xf32> to vector<16x16x4xbf16>
    %c0_43 = arith.constant 0 : index
    %c0_44 = arith.constant 0 : index
    %c20 = arith.constant 20 : index
    %34 = vector.load %arg10[%c0_43, %c0_44, %c20] : memref<16x16x36xbf16, #tpu.memory_space<vmem>>, vector<16x16x4xbf16>
    tpu.vector_store %arg10[%c0_43, %c0_44, %c20], %33 {strides = array<i32>} : memref<16x16x36xbf16, #tpu.memory_space<vmem>>, vector<16x16x4xbf16>,
    %c2_45 = arith.constant 2 : index
    %c0_46 = arith.constant 0 : index
    %c0_47 = arith.constant 0 : index
    %35 = vector.load %arg9[%c2_45, %c0_46, %c0_47] : memref<18x18x4xf32, #tpu.memory_space<vmem>>, vector<16x16x4xf32>
    %36 = arith.truncf %35 : vector<16x16x4xf32> to vector<16x16x4xbf16>
    %c0_48 = arith.constant 0 : index
    %c0_49 = arith.constant 0 : index
    %c24 = arith.constant 24 : index
    %37 = vector.load %arg10[%c0_48, %c0_49, %c24] : memref<16x16x36xbf16, #tpu.memory_space<vmem>>, vector<16x16x4xbf16>
    tpu.vector_store %arg10[%c0_48, %c0_49, %c24], %36 {strides = array<i32>} : memref<16x16x36xbf16, #tpu.memory_space<vmem>>, vector<16x16x4xbf16>,
    %c2_50 = arith.constant 2 : index
    %c1_51 = arith.constant 1 : index
    %c0_52 = arith.constant 0 : index
    %38 = vector.load %arg9[%c2_50, %c1_51, %c0_52] : memref<18x18x4xf32, #tpu.memory_space<vmem>>, vector<16x16x4xf32>
    %39 = arith.truncf %38 : vector<16x16x4xf32> to vector<16x16x4xbf16>
    %c0_53 = arith.constant 0 : index
    %c0_54 = arith.constant 0 : index
    %c28 = arith.constant 28 : index
    %40 = vector.load %arg10[%c0_53, %c0_54, %c28] : memref<16x16x36xbf16, #tpu.memory_space<vmem>>, vector<16x16x4xbf16>
    tpu.vector_store %arg10[%c0_53, %c0_54, %c28], %39 {strides = array<i32>} : memref<16x16x36xbf16, #tpu.memory_space<vmem>>, vector<16x16x4xbf16>,
    %c2_55 = arith.constant 2 : index
    %c2_56 = arith.constant 2 : index
    %c0_57 = arith.constant 0 : index
    %41 = vector.load %arg9[%c2_55, %c2_56, %c0_57] : memref<18x18x4xf32, #tpu.memory_space<vmem>>, vector<16x16x4xf32>
    %42 = arith.truncf %41 : vector<16x16x4xf32> to vector<16x16x4xbf16>
    %c0_58 = arith.constant 0 : index
    %c0_59 = arith.constant 0 : index
    %c32 = arith.constant 32 : index
    %43 = vector.load %arg10[%c0_58, %c0_59, %c32] : memref<16x16x36xbf16, #tpu.memory_space<vmem>>, vector<16x16x4xbf16>
    tpu.vector_store %arg10[%c0_58, %c0_59, %c32], %42 {strides = array<i32>} : memref<16x16x36xbf16, #tpu.memory_space<vmem>>, vector<16x16x4xbf16>,
    %c0_60 = arith.constant 0 : index
    %c0_61 = arith.constant 0 : index
    %c0_62 = arith.constant 0 : index
    %44 = vector.load %arg10[%c0_60, %c0_61, %c0_62] : memref<16x16x36xbf16, #tpu.memory_space<vmem>>, vector<16x16x36xbf16>
    %45 = vector.shape_cast %44 : vector<16x16x36xbf16> to vector<256x36xbf16>
    %c0_63 = arith.constant 0 : index
    %c0_64 = arith.constant 0 : index
    %46 = vector.load %arg5[%c0_63, %c0_64] : memref<36x4xbf16, #tpu.memory_space<vmem>>, vector<36x4xbf16>
    %cst_65 = arith.constant dense<0.000000e+00> : vector<256x4xf32>
    %47 = tpu.matmul %45, %46, %cst_65 {dimension_numbers = #tpu.dot_dimension_numbers<[1], [0], [0], [1], [0, 0, 1, 1], [], []>} : vector<256x36xbf16>, vector<36x4xbf16>, vector<256x4xf32> -> vector<256x4xf32>
    %c0_66 = arith.constant 0 : index
    %c0_67 = arith.constant 0 : index
    %c0_68 = arith.constant 0 : index
    %48 = vector.load %arg1[%c0_66, %c0_67, %c0_68] : memref<1x256x4xf32, #tpu.memory_space<vmem>>, vector<1x256x4xf32>
    %49 = vector.shape_cast %48 : vector<1x256x4xf32> to vector<256x4xf32>
    %c0_69 = arith.constant 0 : index
    %c0_70 = arith.constant 0 : index
    %50 = vector.load %arg6[%c0_69, %c0_70] : memref<1x4xf32, #tpu.memory_space<vmem>>, vector<1x4xf32>
    %51 = vector.broadcast %50 : vector<1x4xf32> to vector<256x4xf32>
    %52 = arith.mulf %47, %51 : vector<256x4xf32>
    %c0_71 = arith.constant 0 : index
    %c0_72 = arith.constant 0 : index
    %53 = vector.load %arg7[%c0_71, %c0_72] : memref<1x4xf32, #tpu.memory_space<vmem>>, vector<1x4xf32>
    %54 = vector.broadcast %53 : vector<1x4xf32> to vector<256x4xf32>
    %55 = arith.addf %52, %54 : vector<256x4xf32>
    %56 = arith.addf %55, %49 : vector<256x4xf32>
    %cst_73 = arith.constant 0.000000e+00 : f32
    %57 = vector.broadcast %cst_73 : f32 to vector<256x4xf32>
    %58 = arith.maximumf %56, %57 : vector<256x4xf32>
    %59 = vector.shape_cast %58 : vector<256x4xf32> to vector<1x256x4xf32>
    %c0_74 = arith.constant 0 : index
    %c0_75 = arith.constant 0 : index
    %c0_76 = arith.constant 0 : index
    %60 = vector.load %arg8[%c0_74, %c0_75, %c0_76] : memref<1x256x4xf32, #tpu.memory_space<vmem>>, vector<1x256x4xf32>
    tpu.vector_store %arg8[%c0_74, %c0_75, %c0_76], %59 {strides = array<i32>} : memref<1x256x4xf32, #tpu.memory_space<vmem>>, vector<1x256x4xf32>,
    return
  }
  func.func @transform_0(%arg0: i32) -> (i32, i32, i32) {
    %c0_i32 = arith.constant 0 : i32
    %c0_i32_0 = arith.constant 0 : i32
    %c0_i32_1 = arith.constant 0 : i32
    return %arg0, %c0_i32, %c0_i32_0 : i32, i32, i32
  }
  func.func @transform_1(%arg0: i32) -> (i32, i32) {
    %c0_i32 = arith.constant 0 : i32
    %c0_i32_0 = arith.constant 0 : i32
    %c0_i32_1 = arith.constant 0 : i32
    return %c0_i32, %c0_i32_0 : i32, i32
  }
  func.func @transform_2(%arg0: i32) -> (i32, i32) {
    %c0_i32 = arith.constant 0 : i32
    %c0_i32_0 = arith.constant 0 : i32
    %c0_i32_1 = arith.constant 0 : i32
    return %c0_i32, %c0_i32_0 : i32, i32
  }
  func.func @transform_3(%arg0: i32) -> (i32, i32) {
    %c0_i32 = arith.constant 0 : i32
    %c0_i32_0 = arith.constant 0 : i32
    %c0_i32_1 = arith.constant 0 : i32
    return %c0_i32, %c0_i32_0 : i32, i32
  }
  func.func @transform_4(%arg0: i32) -> (i32, i32) {
    %c0_i32 = arith.constant 0 : i32
    %c0_i32_0 = arith.constant 0 : i32
    %c0_i32_1 = arith.constant 0 : i32
    return %c0_i32, %c0_i32_0 : i32, i32
  }
  func.func @transform_5(%arg0: i32) -> (i32, i32) {
    %c0_i32 = arith.constant 0 : i32
    %c0_i32_0 = arith.constant 0 : i32
    %c0_i32_1 = arith.constant 0 : i32
    return %c0_i32, %c0_i32_0 : i32, i32
  }
  func.func @transform_6(%arg0: i32) -> (i32, i32) {
    %c0_i32 = arith.constant 0 : i32
    %c0_i32_0 = arith.constant 0 : i32
    %c0_i32_1 = arith.constant 0 : i32
    return %c0_i32, %c0_i32_0 : i32, i32
  }
  func.func @transform_7(%arg0: i32) -> (i32, i32, i32) {
    %c0_i32 = arith.constant 0 : i32
    %c0_i32_0 = arith.constant 0 : i32
    %c0_i32_1 = arith.constant 0 : i32
    return %arg0, %c0_i32, %c0_i32_0 : i32, i32, i32
  }
}

</mosaic_0001>

<llo_original>
// kernel: bottleneck_forward.3
$region0: #{bottleneck_forward.3}
  #allocation0 [shape = 'u32[]', space=smem, size = 0x4, offset = 0x4, fixed_abs, tag = 'smem constant byte address 0x4 - core index']
  #allocation1 [shape = 'u32[144,128]{1,0:T(1,128)}', space=vmem, size = 0x12000, scoped, tag = 'internal scratch']
  %s0 = inlined_call_operand.vmem [shape: f32[2,256,4], index: 0, kind: input, shape index: {}]
  %s1 = inlined_call_operand.vmem [shape: bf16[4,4], index: 1, kind: input, shape index: {}]
  %s2 = inlined_call_operand.vmem [shape: f32[2,1,4], index: 2, kind: output, shape index: {0}]
  %s3 = inlined_call_operand.vmem [shape: f32[2,1,4], index: 3, kind: output, shape index: {1}]
  %4 = xla_tuple %s2, %s3
  %s5 = sld [smem:[#allocation0]]
  $region49: #{bottleneck_forward.3} parent=0
    _
  %s7 = ssub.s32 1, %s5
  %s8 = scalar_select 0, %s7, %s5
  loop: start=0, step=1, limit=4
  $region2: #{bottleneck_forward.3} parent=0 // loop_pre_header
    _
  $region3: #{bottleneck_forward.3} parent=0 // loop_header
    %s10 = sphi 0, %s14
    %p11 = scmp.ge.s32.totalorder %s10, 4
    %s20 = sphi 0, %s22
    %s23 = sphi 0, %s20
    %s24 = sphi 0, %s23
    %s40 = sphi 0, %s24
    %s44 = sphi 0, %s44
    %s46 = sphi 0, %s44
    %s47 = sphi 0, %s46
    %s61 = sphi 0, %s47
    %s67 = sphi 0, %s69
    %s70 = sphi 0, %s67
    %s71 = sphi 0, %s70
    %s87 = sphi 0, %s71
    %s93 = sphi 0, %s95
    %s96 = sphi 0, %s93
    %s97 = sphi 0, %s96
    %s113 = sphi 0, %s97
  $region4: #{bottleneck_forward.3} parent=0 // loop_header_branch
    %13 = sbr.rel (%p11) target = $region8
  $region5: #{bottleneck_forward.3} parent=0 // loop_body
    %s15 = ssub.s32 %s10, 1
    %s16 = ssub.s32 %s10, 2
    %s17 = sadd.s32 %s10, 1
    %s18 = ssub.s32 %s10, %s17
    %p19 = scmp.eq.s32.totalorder %s18, 0
    %s21 = sadd.s32 %s20, 1
    %s22 = scalar_select %p19, %s20, %s21
    %p25 = pneg %p19
    %p26 = scmp.eq.s32.totalorder %s10, 1
    %p27 = por %p25, %p26
    %p28 = scmp.ne.s32.totalorder %s20, %s23
    %p29 = scmp.eq.s32.totalorder %s10, 0
    %p30 = por %p28, %p29
    %p31 = scmp.ne.s32.totalorder %s20, %s23
    %p32 = scmp.eq.s32.totalorder %s15, 1
    %p33 = por %p31, %p32
    %p34 = scmp.ne.s32.totalorder %s23, %s24
    %p35 = scmp.eq.s32.totalorder %s15, 0
    %p36 = por %p34, %p35
    %p37 = scmp.ne.s32.totalorder %s23, %s24
    %p38 = scmp.eq.s32.totalorder %s16, 1
    %p39 = por %p37, %p38
    %p41 = scmp.ne.s32.totalorder %s24, %s40
    %p42 = scmp.eq.s32.totalorder %s16, 0
    %p43 = por %p41, %p42
    %s45 = sadd.s32 %s44, 1
    %p48 = scmp.eq.s32.totalorder %s10, 1
    %p49 = scmp.ne.s32.totalorder %s44, %s46
    %p50 = scmp.eq.s32.totalorder %s10, 0
    %p51 = por %p49, %p50
    %p52 = scmp.ne.s32.totalorder %s44, %s46
    %p53 = scmp.eq.s32.totalorder %s15, 1
    %p54 = por %p52, %p53
    %p55 = scmp.ne.s32.totalorder %s46, %s47
    %p56 = scmp.eq.s32.totalorder %s15, 0
    %p57 = por %p55, %p56
    %p58 = scmp.ne.s32.totalorder %s46, %s47
    %p59 = scmp.eq.s32.totalorder %s16, 1
    %p60 = por %p58, %p59
    %p62 = scmp.ne.s32.totalorder %s47, %s61
    %p63 = scmp.eq.s32.totalorder %s16, 0
    %p64 = por %p62, %p63
    %s65 = ssub.s32 %s10, %s17
    %p66 = scmp.eq.s32.totalorder %s65, 0
    %s68 = sadd.s32 %s67, 1
    %s69 = scalar_select %p66, %s67, %s68
    %p72 = pneg %p66
    %p73 = scmp.eq.s32.totalorder %s10, 1
    %p74 = por %p72, %p73
    %p75 = scmp.ne.s32.totalorder %s67, %s70
    %p76 = scmp.eq.s32.totalorder %s10, 0
    %p77 = por %p75, %p76
    %p78 = scmp.ne.s32.totalorder %s67, %s70
    %p79 = scmp.eq.s32.totalorder %s15, 1
    %p80 = por %p78, %p79
    %p81 = scmp.ne.s32.totalorder %s70, %s71
    %p82 = scmp.eq.s32.totalorder %s15, 0
    %p83 = por %p81, %p82
    %p84 = scmp.ne.s32.totalorder %s70, %s71
    %p85 = scmp.eq.s32.totalorder %s16, 1
    %p86 = por %p84, %p85
    %p88 = scmp.ne.s32.totalorder %s71, %s87
    %p89 = scmp.eq.s32.totalorder %s16, 0
    %p90 = por %p88, %p89
    %s91 = ssub.s32 %s10, %s17
    %p92 = scmp.eq.s32.totalorder %s91, 0
    %s94 = sadd.s32 %s93, 1
    %s95 = scalar_select %p92, %s93, %s94
    %p98 = pneg %p92
    %p99 = scmp.eq.s32.totalorder %s10, 1
    %p100 = por %p98, %p99
    %p101 = scmp.ne.s32.totalorder %s93, %s96
    %p102 = scmp.eq.s32.totalorder %s10, 0
    %p103 = por %p101, %p102
    %p104 = scmp.ne.s32.totalorder %s93, %s96
    %p105 = scmp.eq.s32.totalorder %s15, 1
    %p106 = por %p104, %p105
    %p107 = scmp.ne.s32.totalorder %s96, %s97
    %p108 = scmp.eq.s32.totalorder %s15, 0
    %p109 = por %p107, %p108
    %p110 = scmp.ne.s32.totalorder %s96, %s97
    %p111 = scmp.eq.s32.totalorder %s16, 1
    %p112 = por %p110, %p111
    %p114 = scmp.ne.s32.totalorder %s97, %s113
    %p115 = scmp.eq.s32.totalorder %s16, 0
    %p116 = por %p114, %p115
    %p117 = scmp.le.s32.totalorder 1, %s10
    %p118 = scmp.lt.s32.totalorder %s10, 3
    %p119 = pnand %p117, %p118
    %p120 = pneg %p119
    // Predicated region
    $region9: #{bottleneck_forward.3} parent=5 // pred_check
      _
    $region10: #{bottleneck_forward.3} parent=5 // pred_check_branch
      %122 = sbr.rel (%p119) target = $region12
    $region11: #{bottleneck_forward.3} parent=5 // pred_region
      %s123 = ssub.s32 %s10, 1
      // Predicated region
      $region13: #{bottleneck_forward.3} parent=11 // pred_check
        %p124 = pneg %p57
      $region14: #{bottleneck_forward.3} parent=11 // pred_check_branch
        %126 = sbr.rel (%p124) target = $region16
      $region15: #{bottleneck_forward.3} parent=11 // pred_region
        _
      $region16: #{bottleneck_forward.3} parent=11 // pred_fallthru
        _
    $region12: #{bottleneck_forward.3} parent=5 // pred_fallthru
      _
    %p127 = scmp.lt.s32.totalorder %s10, 2
    // Predicated region
    $region17: #{bottleneck_forward.3} parent=5 // pred_check
      %p128 = pneg %p127
    $region18: #{bottleneck_forward.3} parent=5 // pred_check_branch
      %130 = sbr.rel (%p128) target = $region20
    $region19: #{bottleneck_forward.3} parent=5 // pred_region
      // Predicated region
      $region21: #{bottleneck_forward.3} parent=19 // pred_check
        %p131 = pneg %p30
      $region22: #{bottleneck_forward.3} parent=19 // pred_check_branch
        %133 = sbr.rel (%p131) target = $region24
      $region23: #{bottleneck_forward.3} parent=19 // pred_region
        %p134 = scmp.lt.s32.totalorder %s10, 1
        %s135 = scalar_select %p134, %s10, 1
        %s136 = smul.addr %s135, 32
        %s137 = smul.addr %s136, 8
        %s138 = scalar_lea.vmem %s0, %s137
      $region24: #{bottleneck_forward.3} parent=19 // pred_fallthru
        _
    $region20: #{bottleneck_forward.3} parent=5 // pred_fallthru
      _
    %p139 = scmp.le.s32.totalorder 1, %s10
    %p140 = scmp.lt.s32.totalorder %s10, 3
    %p141 = pnand %p139, %p140
    %p142 = pneg %p141
    // Predicated region
    $region25: #{bottleneck_forward.3} parent=5 // pred_check
      _
    $region26: #{bottleneck_forward.3} parent=5 // pred_check_branch
      %144 = sbr.rel (%p141) target = $region28
    $region27: #{bottleneck_forward.3} parent=5 // pred_region
      %s145 = ssub.s32 %s10, 1
      %p146 = scmp.lt.s32.totalorder %s15, 1
      %s147 = scalar_select %p146, %s15, 1
      %s148 = smul.addr %s147, 32
      %s149 = smul.addr %s148, 8
      %s150 = scalar_lea.vmem %s0, %s149
      %p151 = pneg %p36
      %p152 = pneg %p33
      %p153 = pneg %p57
      %p154 = pneg %p54
      %p155 = pneg %p83
      %p156 = pneg %p80
      %p157 = scmp.lt.s32.totalorder %s15, 1
      %s158 = scalar_select %p157, %s15, 1
      %s159 = scalar_lea.vmem %s2, %s158
      %p160 = pneg %p109
      %p161 = pneg %p106
      %p162 = scmp.lt.s32.totalorder %s15, 1
      %s163 = scalar_select %p162, %s15, 1
      %s164 = scalar_lea.vmem %s3, %s163
      %p165 = scmp.lt.s32.totalorder %s15, 1
      %s166 = scalar_select %p165, %s15, 1
      %s167 = smul.addr %s166, 32
      %s168 = smul.addr %s167, 8
      %s169 = scalar_lea.vmem %s0, %s168
      %p170 = scmp.lt.s32.totalorder %s15, 1
      %s171 = scalar_select %p170, %s15, 1
      %s172 = scalar_lea.vmem %s2, %s171
      %p173 = scmp.lt.s32.totalorder %s15, 1
      %s174 = scalar_select %p173, %s15, 1
      %s175 = scalar_lea.vmem %s3, %s174
      %v177 = vld [vmem:[%s169] sm:$0xff]
      %v178 = vld [vmem:[%s169 + $0x8] sm:$0xff]
      %v179 = vld [vmem:[%s169 + $0x10] sm:$0xff]
      %v180 = vld [vmem:[%s169 + $0x18] sm:$0xff]
      %v181 = vld [vmem:[%s169 + $0x20] sm:$0xff]
      %v182 = vld [vmem:[%s169 + $0x28] sm:$0xff]
      %v183 = vld [vmem:[%s169 + $0x30] sm:$0xff]
      %v184 = vld [vmem:[%s169 + $0x38] sm:$0xff]
      %v185 = vld [vmem:[%s169 + $0x40] sm:$0xff]
      %v186 = vld [vmem:[%s169 + $0x48] sm:$0xff]
      %v187 = vld [vmem:[%s169 + $0x50] sm:$0xff]
      %v188 = vld [vmem:[%s169 + $0x58] sm:$0xff]
      %v189 = vld [vmem:[%s169 + $0x60] sm:$0xff]
      %v190 = vld [vmem:[%s169 + $0x68] sm:$0xff]
      %v191 = vld [vmem:[%s169 + $0x70] sm:$0xff]
      %v192 = vld [vmem:[%s169 + $0x78] sm:$0xff]
      %v193 = vld [vmem:[%s169 + $0x80] sm:$0xff]
      %v194 = vld [vmem:[%s169 + $0x88] sm:$0xff]
      %v195 = vld [vmem:[%s169 + $0x90] sm:$0xff]
      %v196 = vld [vmem:[%s169 + $0x98] sm:$0xff]
      %v197 = vld [vmem:[%s169 + $0xa0] sm:$0xff]
      %v198 = vld [vmem:[%s169 + $0xa8] sm:$0xff]
      %v199 = vld [vmem:[%s169 + $0xb0] sm:$0xff]
      %v200 = vld [vmem:[%s169 + $0xb8] sm:$0xff]
      %v201 = vld [vmem:[%s169 + $0xc0] sm:$0xff]
      %v202 = vld [vmem:[%s169 + $0xc8] sm:$0xff]
      %v203 = vld [vmem:[%s169 + $0xd0] sm:$0xff]
      %v204 = vld [vmem:[%s169 + $0xd8] sm:$0xff]
      %v205 = vld [vmem:[%s169 + $0xe0] sm:$0xff]
      %v206 = vld [vmem:[%s169 + $0xe8] sm:$0xff]
      %v207 = vld [vmem:[%s169 + $0xf0] sm:$0xff]
      %v208 = vld [vmem:[%s169 + $0xf8] sm:$0xff]
      %v209 = vpack.c.bf16 %v178, %v177
      %v210 = vpack.c.bf16 %v180, %v179
      %v211 = vpack.c.bf16 %v182, %v181
      %v212 = vpack.c.bf16 %v184, %v183
      %v213 = vpack.c.bf16 %v186, %v185
      %v214 = vpack.c.bf16 %v188, %v187
      %v215 = vpack.c.bf16 %v190, %v189
      %v216 = vpack.c.bf16 %v192, %v191
      %v217 = vpack.c.bf16 %v194, %v193
      %v218 = vpack.c.bf16 %v196, %v195
      %v219 = vpack.c.bf16 %v198, %v197
      %v220 = vpack.c.bf16 %v200, %v199
      %v221 = vpack.c.bf16 %v202, %v201
      %v222 = vpack.c.bf16 %v204, %v203
      %v223 = vpack.c.bf16 %v206, %v205
      %v224 = vpack.c.bf16 %v208, %v207
      %v225 = vld [vmem:[%s1] sm:$0x3]
      %vm226 = vcmask 31744
      %v228 = vsel %vm226, %v209, 0
      %v231 = vsel %vm226, %v210, 0
      %v234 = vsel %vm226, %v211, 0
      %v237 = vsel %vm226, %v212, 0
      %v240 = vsel %vm226, %v213, 0
      %v243 = vsel %vm226, %v214, 0
      %v246 = vsel %vm226, %v215, 0
      %v249 = vsel %vm226, %v216, 0
      %v252 = vsel %vm226, %v217, 0
      %v255 = vsel %vm226, %v218, 0
      %v258 = vsel %vm226, %v219, 0
      %v261 = vsel %vm226, %v220, 0
      %v264 = vsel %vm226, %v221, 0
      %v267 = vsel %vm226, %v222, 0
      %v270 = vsel %vm226, %v223, 0
      %v273 = vsel %vm226, %v224, 0
      %vm275 = vcmask 1041408
      %v277 = vsel %vm275, %v225, 0
      %279 = vmatprep.subr.bf16.mxu0 0
      %280 = vmatpush1.bf16.msra.mxu0 %v277
      %281 = vmatprep.subr.bf16.mxu0 0
      %282 = vmatpush1.bf16.msra.mxu0 0
      %283 = vmatprep.subr.bf16.mxu0 0
      %284 = vmatpush1.bf16.msra.mxu0 0
      %285 = vmatprep.subr.bf16.mxu0 0
      %286 = vmatpush1.bf16.msra.mxu0 0
      %287 = vmatprep.subr.bf16.mxu0 0
      %288 = vmatpush1.bf16.msra.mxu0 0
      %289 = vmatprep.subr.bf16.mxu0 0
      %290 = vmatpush1.bf16.msra.mxu0 0
      %291 = vmatprep.subr.bf16.mxu0 0
      %292 = vmatpush1.bf16.msra.mxu0 0
      %293 = vmatprep.subr.bf16.mxu0 0
      %294 = vmatpush1.bf16.msra.mxu0 0
      %295 = vmatprep.subr.bf16.mxu0 0
      %296 = vmatpush1.bf16.msra.mxu0 0
      %297 = vmatprep.subr.bf16.mxu0 0
      %298 = vmatpush1.bf16.msra.mxu0 0
      %299 = vmatprep.subr.bf16.mxu0 0
      %300 = vmatpush1.bf16.msra.mxu0 0
      %301 = vmatprep.subr.bf16.mxu0 0
      %302 = vmatpush1.bf16.msra.mxu0 0
      %303 = vmatprep.subr.bf16.mxu0 0
      %304 = vmatpush1.bf16.msra.mxu0 0
      %305 = vmatprep.subr.bf16.mxu0 0
      %306 = vmatpush1.bf16.msra.mxu0 0
      %307 = vmatprep.subr.bf16.mxu0 0
      %308 = vmatpush1.bf16.msra.mxu0 0
      %309 = vmatprep.subr.bf16.mxu0 0
      %310 = vmatpush1.bf16.msra.mxu0 0
      %311 = vmatprep.mubr.bf16.mxu0 0
      %312 = vmatmul.mubr.bf16.gmra.mrb[0].mxu0 %v228
      %v313 = vpop.f32.mrb[0].mxu0
      %v314 = vadd.f32 0.0, %v313
      %v315 = vpop.f32.mrb[0].mxu0
      %v316 = vpop.f32.mrb[0].mxu0
      %v317 = vadd.f32 0.0, %v316
      %v318 = vpop.f32.mrb[0].mxu0
      %319 = vmatprep.mubr.bf16.mxu0 0
      %320 = vmatmul.mubr.bf16.gmra.mrb[0].mxu0 %v231
      %v321 = vpop.f32.mrb[0].mxu0
      %v322 = vadd.f32 0.0, %v321
      %v323 = vpop.f32.mrb[0].mxu0
      %v324 = vpop.f32.mrb[0].mxu0
      %v325 = vadd.f32 0.0, %v324
      %v326 = vpop.f32.mrb[0].mxu0
      %327 = vmatprep.mubr.bf16.mxu0 0
      %328 = vmatmul.mubr.bf16.gmra.mrb[0].mxu0 %v234
      %v329 = vpop.f32.mrb[0].mxu0
      %v330 = vadd.f32 0.0, %v329
      %v331 = vpop.f32.mrb[0].mxu0
      %v332 = vpop.f32.mrb[0].mxu0
      %v333 = vadd.f32 0.0, %v332
      %v334 = vpop.f32.mrb[0].mxu0
      %335 = vmatprep.mubr.bf16.mxu0 0
      %336 = vmatmul.mubr.bf16.gmra.mrb[0].mxu0 %v237
      %v337 = vpop.f32.mrb[0].mxu0
      %v338 = vadd.f32 0.0, %v337
      %v339 = vpop.f32.mrb[0].mxu0
      %v340 = vpop.f32.mrb[0].mxu0
      %v341 = vadd.f32 0.0, %v340
      %v342 = vpop.f32.mrb[0].mxu0
      %343 = vmatprep.mubr.bf16.mxu0 0
      %344 = vmatmul.mubr.bf16.gmra.mrb[0].mxu0 %v240
      %v345 = vpop.f32.mrb[0].mxu0
      %v346 = vadd.f32 0.0, %v345
      %v347 = vpop.f32.mrb[0].mxu0
      %v348 = vpop.f32.mrb[0].mxu0
      %v349 = vadd.f32 0.0, %v348
      %v350 = vpop.f32.mrb[0].mxu0
      %351 = vmatprep.mubr.bf16.mxu0 0
      %352 = vmatmul.mubr.bf16.gmra.mrb[0].mxu0 %v243
      %v353 = vpop.f32.mrb[0].mxu0
      %v354 = vadd.f32 0.0, %v353
      %v355 = vpop.f32.mrb[0].mxu0
      %v356 = vpop.f32.mrb[0].mxu0
      %v357 = vadd.f32 0.0, %v356
      %v358 = vpop.f32.mrb[0].mxu0
      %359 = vmatprep.mubr.bf16.mxu0 0
      %360 = vmatmul.mubr.bf16.gmra.mrb[0].mxu0 %v246
      %v361 = vpop.f32.mrb[0].mxu0
      %v362 = vadd.f32 0.0, %v361
      %v363 = vpop.f32.mrb[0].mxu0
      %v364 = vpop.f32.mrb[0].mxu0
      %v365 = vadd.f32 0.0, %v364
      %v366 = vpop.f32.mrb[0].mxu0
      %367 = vmatprep.mubr.bf16.mxu0 0
      %368 = vmatmul.mubr.bf16.gmra.mrb[0].mxu0 %v249
      %v369 = vpop.f32.mrb[0].mxu0
      %v370 = vadd.f32 0.0, %v369
      %v371 = vpop.f32.mrb[0].mxu0
      %v372 = vpop.f32.mrb[0].mxu0
      %v373 = vadd.f32 0.0, %v372
      %v374 = vpop.f32.mrb[0].mxu0
      %375 = vmatprep.mubr.bf16.mxu0 0
      %376 = vmatmul.mubr.bf16.gmra.mrb[0].mxu0 %v252
      %v377 = vpop.f32.mrb[0].mxu0
      %v378 = vadd.f32 0.0, %v377
      %v379 = vpop.f32.mrb[0].mxu0
      %v380 = vpop.f32.mrb[0].mxu0
      %v381 = vadd.f32 0.0, %v380
      %v382 = vpop.f32.mrb[0].mxu0
      %383 = vmatprep.mubr.bf16.mxu0 0
      %384 = vmatmul.mubr.bf16.gmra.mrb[0].mxu0 %v255
      %v385 = vpop.f32.mrb[0].mxu0
      %v386 = vadd.f32 0.0, %v385
      %v387 = vpop.f32.mrb[0].mxu0
      %v388 = vpop.f32.mrb[0].mxu0
      %v389 = vadd.f32 0.0, %v388
      %v390 = vpop.f32.mrb[0].mxu0
      %391 = vmatprep.mubr.bf16.mxu0 0
      %392 = vmatmul.mubr.bf16.gmra.mrb[0].mxu0 %v258
      %v393 = vpop.f32.mrb[0].mxu0
      %v394 = vadd.f32 0.0, %v393
      %v395 = vpop.f32.mrb[0].mxu0
      %v396 = vpop.f32.mrb[0].mxu0
      %v397 = vadd.f32 0.0, %v396
      %v398 = vpop.f32.mrb[0].mxu0
      %399 = vmatprep.mubr.bf16.mxu0 0
      %400 = vmatmul.mubr.bf16.gmra.mrb[0].mxu0 %v261
      %v401 = vpop.f32.mrb[0].mxu0
      %v402 = vadd.f32 0.0, %v401
      %v403 = vpop.f32.mrb[0].mxu0
      %v404 = vpop.f32.mrb[0].mxu0
      %v405 = vadd.f32 0.0, %v404
      %v406 = vpop.f32.mrb[0].mxu0
      %407 = vmatprep.mubr.bf16.mxu0 0
      %408 = vmatmul.mubr.bf16.gmra.mrb[0].mxu0 %v264
      %v409 = vpop.f32.mrb[0].mxu0
      %v410 = vadd.f32 0.0, %v409
      %v411 = vpop.f32.mrb[0].mxu0
      %v412 = vpop.f32.mrb[0].mxu0
      %v413 = vadd.f32 0.0, %v412
      %v414 = vpop.f32.mrb[0].mxu0
      %415 = vmatprep.mubr.bf16.mxu0 0
      %416 = vmatmul.mubr.bf16.gmra.mrb[0].mxu0 %v267
      %v417 = vpop.f32.mrb[0].mxu0
      %v418 = vadd.f32 0.0, %v417
      %v419 = vpop.f32.mrb[0].mxu0
      %v420 = vpop.f32.mrb[0].mxu0
      %v421 = vadd.f32 0.0, %v420
      %v422 = vpop.f32.mrb[0].mxu0
      %423 = vmatprep.mubr.bf16.mxu0 0
      %424 = vmatmul.mubr.bf16.gmra.mrb[0].mxu0 %v270
      %v425 = vpop.f32.mrb[0].mxu0
      %v426 = vadd.f32 0.0, %v425
      %v427 = vpop.f32.mrb[0].mxu0
      %v428 = vpop.f32.mrb[0].mxu0
      %v429 = vadd.f32 0.0, %v428
      %v430 = vpop.f32.mrb[0].mxu0
      %431 = vmatprep.mubr.bf16.mxu0 0
      %432 = vmatmul.mubr.bf16.gmra.mrb[0].mxu0 %v273
      %v433 = vpop.f32.mrb[0].mxu0
      %v434 = vadd.f32 0.0, %v433
      %v435 = vpop.f32.mrb[0].mxu0
      %v436 = vpop.f32.mrb[0].mxu0
      %v437 = vadd.f32 0.0, %v436
      %v438 = vpop.f32.mrb[0].mxu0
      %439 = vdwg.mxu0
      %v440 = vsel %vm226, %v314, 0.0
      %v441 = vsel %vm226, %v317, 0.0
      %v442 = vadd.f32 %v440, %v441
      %v443 = vsel %vm226, %v322, 0.0
      %v444 = vadd.f32 %v442, %v443
      %v445 = vsel %vm226, %v325, 0.0
      %v446 = vadd.f32 %v444, %v445
      %v447 = vsel %vm226, %v330, 0.0
      %v448 = vadd.f32 %v446, %v447
      %v449 = vsel %vm226, %v333, 0.0
      %v450 = vadd.f32 %v448, %v449
      %v451 = vsel %vm226, %v338, 0.0
      %v452 = vadd.f32 %v450, %v451
      %v453 = vsel %vm226, %v341, 0.0
      %v454 = vadd.f32 %v452, %v453
      %v455 = vsel %vm226, %v346, 0.0
      %v456 = vadd.f32 %v454, %v455
      %v457 = vsel %vm226, %v349, 0.0
      %v458 = vadd.f32 %v456, %v457
      %v459 = vsel %vm226, %v354, 0.0
      %v460 = vadd.f32 %v458, %v459
      %v461 = vsel %vm226, %v357, 0.0
      %v462 = vadd.f32 %v460, %v461
      %v463 = vsel %vm226, %v362, 0.0
      %v464 = vadd.f32 %v462, %v463
      %v465 = vsel %vm226, %v365, 0.0
      %v466 = vadd.f32 %v464, %v465
      %v467 = vsel %vm226, %v370, 0.0
      %v468 = vadd.f32 %v466, %v467
      %v469 = vsel %vm226, %v373, 0.0
      %v470 = vadd.f32 %v468, %v469
      %v471 = vsel %vm226, %v378, 0.0
      %v472 = vadd.f32 %v470, %v471
      %v473 = vsel %vm226, %v381, 0.0
      %v474 = vadd.f32 %v472, %v473
      %v475 = vsel %vm226, %v386, 0.0
      %v476 = vadd.f32 %v474, %v475
      %v477 = vsel %vm226, %v389, 0.0
      %v478 = vadd.f32 %v476, %v477
      %v479 = vsel %vm226, %v394, 0.0
      %v480 = vadd.f32 %v478, %v479
      %v481 = vsel %vm226, %v397, 0.0
      %v482 = vadd.f32 %v480, %v481
      %v483 = vsel %vm226, %v402, 0.0
      %v484 = vadd.f32 %v482, %v483
      %v485 = vsel %vm226, %v405, 0.0
      %v486 = vadd.f32 %v484, %v485
      %v487 = vsel %vm226, %v410, 0.0
      %v488 = vadd.f32 %v486, %v487
      %v489 = vsel %vm226, %v413, 0.0
      %v490 = vadd.f32 %v488, %v489
      %v491 = vsel %vm226, %v418, 0.0
      %v492 = vadd.f32 %v490, %v491
      %v493 = vsel %vm226, %v421, 0.0
      %v494 = vadd.f32 %v492, %v493
      %v495 = vsel %vm226, %v426, 0.0
      %v496 = vadd.f32 %v494, %v495
      %v497 = vsel %vm226, %v429, 0.0
      %v498 = vadd.f32 %v496, %v497
      %v499 = vsel %vm226, %v434, 0.0
      %v500 = vadd.f32 %v498, %v499
      %v501 = vsel %vm226, %v437, 0.0
      %v502 = vadd.f32 %v500, %v501
      %v503 = vrot.slane %v502, 4
      %v504 = vadd.f32 %v502, %v503
      %v505 = vrot.slane %v504, 2
      %v506 = vadd.f32 %v504, %v505
      %v507 = vrot.slane %v506, 1
      %v508 = vadd.f32 %v506, %v507
      %vm509 = vcmask 24576
      %510 = vst.msk [vmem:[%s172] sm:$0x1] %vm509, %v508
      %v511 = vmul.f32 %v314, %v314
      %v512 = vmul.f32 %v317, %v317
      %v513 = vmul.f32 %v322, %v322
      %v514 = vmul.f32 %v325, %v325
      %v515 = vmul.f32 %v330, %v330
      %v516 = vmul.f32 %v333, %v333
      %v517 = vmul.f32 %v338, %v338
      %v518 = vmul.f32 %v341, %v341
      %v519 = vmul.f32 %v346, %v346
      %v520 = vmul.f32 %v349, %v349
      %v521 = vmul.f32 %v354, %v354
      %v522 = vmul.f32 %v357, %v357
      %v523 = vmul.f32 %v362, %v362
      %v524 = vmul.f32 %v365, %v365
      %v525 = vmul.f32 %v370, %v370
      %v526 = vmul.f32 %v373, %v373
      %v527 = vmul.f32 %v378, %v378
      %v528 = vmul.f32 %v381, %v381
      %v529 = vmul.f32 %v386, %v386
      %v530 = vmul.f32 %v389, %v389
      %v531 = vmul.f32 %v394, %v394
      %v532 = vmul.f32 %v397, %v397
      %v533 = vmul.f32 %v402, %v402
      %v534 = vmul.f32 %v405, %v405
      %v535 = vmul.f32 %v410, %v410
      %v536 = vmul.f32 %v413, %v413
      %v537 = vmul.f32 %v418, %v418
      %v538 = vmul.f32 %v421, %v421
      %v539 = vmul.f32 %v426, %v426
      %v540 = vmul.f32 %v429, %v429
      %v541 = vmul.f32 %v434, %v434
      %v542 = vmul.f32 %v437, %v437
      %v543 = vsel %vm226, %v511, 0.0
      %v544 = vsel %vm226, %v512, 0.0
      %v545 = vadd.f32 %v543, %v544
      %v546 = vsel %vm226, %v513, 0.0
      %v547 = vadd.f32 %v545, %v546
      %v548 = vsel %vm226, %v514, 0.0
      %v549 = vadd.f32 %v547, %v548
      %v550 = vsel %vm226, %v515, 0.0
      %v551 = vadd.f32 %v549, %v550
      %v552 = vsel %vm226, %v516, 0.0
      %v553 = vadd.f32 %v551, %v552
      %v554 = vsel %vm226, %v517, 0.0
      %v555 = vadd.f32 %v553, %v554
      %v556 = vsel %vm226, %v518, 0.0
      %v557 = vadd.f32 %v555, %v556
      %v558 = vsel %vm226, %v519, 0.0
      %v559 = vadd.f32 %v557, %v558
      %v560 = vsel %vm226, %v520, 0.0
      %v561 = vadd.f32 %v559, %v560
      %v562 = vsel %vm226, %v521, 0.0
      %v563 = vadd.f32 %v561, %v562
      %v564 = vsel %vm226, %v522, 0.0
      %v565 = vadd.f32 %v563, %v564
      %v566 = vsel %vm226, %v523, 0.0
      %v567 = vadd.f32 %v565, %v566
      %v568 = vsel %vm226, %v524, 0.0
      %v569 = vadd.f32 %v567, %v568
      %v570 = vsel %vm226, %v525, 0.0
      %v571 = vadd.f32 %v569, %v570
      %v572 = vsel %vm226, %v526, 0.0
      %v573 = vadd.f32 %v571, %v572
      %v574 = vsel %vm226, %v527, 0.0
      %v575 = vadd.f32 %v573, %v574
      %v576 = vsel %vm226, %v528, 0.0
      %v577 = vadd.f32 %v575, %v576
      %v578 = vsel %vm226, %v529, 0.0
      %v579 = vadd.f32 %v577, %v578
      %v580 = vsel %vm226, %v530, 0.0
      %v581 = vadd.f32 %v579, %v580
      %v582 = vsel %vm226, %v531, 0.0
      %v583 = vadd.f32 %v581, %v582
      %v584 = vsel %vm226, %v532, 0.0
      %v585 = vadd.f32 %v583, %v584
      %v586 = vsel %vm226, %v533, 0.0
      %v587 = vadd.f32 %v585, %v586
      %v588 = vsel %vm226, %v534, 0.0
      %v589 = vadd.f32 %v587, %v588
      %v590 = vsel %vm226, %v535, 0.0
      %v591 = vadd.f32 %v589, %v590
      %v592 = vsel %vm226, %v536, 0.0
      %v593 = vadd.f32 %v591, %v592
      %v594 = vsel %vm226, %v537, 0.0
      %v595 = vadd.f32 %v593, %v594
      %v596 = vsel %vm226, %v538, 0.0
      %v597 = vadd.f32 %v595, %v596
      %v598 = vsel %vm226, %v539, 0.0
      %v599 = vadd.f32 %v597, %v598
      %v600 = vsel %vm226, %v540, 0.0
      %v601 = vadd.f32 %v599, %v600
      %v602 = vsel %vm226, %v541, 0.0
      %v603 = vadd.f32 %v601, %v602
      %v604 = vsel %vm226, %v542, 0.0
      %v605 = vadd.f32 %v603, %v604
      %v606 = vrot.slane %v605, 4
      %v607 = vadd.f32 %v605, %v606
      %v608 = vrot.slane %v607, 2
      %v609 = vadd.f32 %v607, %v608
      %v610 = vrot.slane %v609, 1
      %v611 = vadd.f32 %v609, %v610
      %612 = vst.msk [vmem:[%s175] sm:$0x1] %vm509, %v611
      %p613 = scmp.lt.s32.totalorder %s15, 1
      %s614 = scalar_select %p613, %s15, 1
      %s615 = scalar_lea.vmem %s2, %s614
      %p616 = scmp.lt.s32.totalorder %s15, 1
      %s617 = scalar_select %p616, %s15, 1
      %s618 = scalar_lea.vmem %s3, %s617
      // Predicated region
      $region29: #{bottleneck_forward.3} parent=27 // pred_check
        %p619 = pneg %p80
      $region30: #{bottleneck_forward.3} parent=27 // pred_check_branch
        %621 = sbr.rel (%p619) target = $region32
      $region31: #{bottleneck_forward.3} parent=27 // pred_region
        _
      $region32: #{bottleneck_forward.3} parent=27 // pred_fallthru
        _
      // Predicated region
      $region33: #{bottleneck_forward.3} parent=27 // pred_check
        %p622 = pneg %p106
      $region34: #{bottleneck_forward.3} parent=27 // pred_check_branch
        %624 = sbr.rel (%p622) target = $region36
      $region35: #{bottleneck_forward.3} parent=27 // pred_region
        _
      $region36: #{bottleneck_forward.3} parent=27 // pred_fallthru
        _
    $region28: #{bottleneck_forward.3} parent=5 // pred_fallthru
      _
    %p625 = scmp.le.s32.totalorder 2, %s10
    // Predicated region
    $region37: #{bottleneck_forward.3} parent=5 // pred_check
      %p626 = pneg %p625
    $region38: #{bottleneck_forward.3} parent=5 // pred_check_branch
      %628 = sbr.rel (%p626) target = $region40
    $region39: #{bottleneck_forward.3} parent=5 // pred_region
      %s629 = ssub.s32 %s10, 2
      // Predicated region
      $region41: #{bottleneck_forward.3} parent=39 // pred_check
        %p630 = pneg %p86
      $region42: #{bottleneck_forward.3} parent=39 // pred_check_branch
        %632 = sbr.rel (%p630) target = $region44
      $region43: #{bottleneck_forward.3} parent=39 // pred_region
        %p633 = scmp.lt.s32.totalorder %s16, 1
        %s634 = scalar_select %p633, %s16, 1
        %s635 = scalar_lea.vmem %s2, %s634
      $region44: #{bottleneck_forward.3} parent=39 // pred_fallthru
        _
      // Predicated region
      $region45: #{bottleneck_forward.3} parent=39 // pred_check
        %p636 = pneg %p112
      $region46: #{bottleneck_forward.3} parent=39 // pred_check_branch
        %638 = sbr.rel (%p636) target = $region48
      $region47: #{bottleneck_forward.3} parent=39 // pred_region
        %p639 = scmp.lt.s32.totalorder %s16, 1
        %s640 = scalar_select %p639, %s16, 1
        %s641 = scalar_lea.vmem %s3, %s640
      $region48: #{bottleneck_forward.3} parent=39 // pred_fallthru
        _
    $region40: #{bottleneck_forward.3} parent=5 // pred_fallthru
      _
  $region6: #{bottleneck_forward.3} parent=0 // loop_footer
    %s14 = sadd.s32 1, %s10
  $region7: #{bottleneck_forward.3} parent=0 // loop_footer_branch
    %9 = sbr.rel target = $region3
  $region8: #{bottleneck_forward.3} parent=0 // loop_exit
    _

// kernel: bottleneck_forward.4
$region0: #{bottleneck_forward.4}
  #allocation0 [shape = 'u32[]', space=smem, size = 0x4, offset = 0x4, fixed_abs, tag = 'smem constant byte address 0x4 - core index']
  #allocation1 [shape = 'u32[144,128]{1,0:T(1,128)}', space=vmem, size = 0x12000, scoped, tag = 'internal scratch']
  #allocation2 [shape = 'f32[18,18,4]{2,1,0:T(8,128)}', space=vmem, size = 0x36000, scoped, tag = 'scratch operand']
  #allocation3 [shape = 'bf16[16,16,36]{2,1,0:T(16,128)(2,1)}', space=vmem, size = 0x10000, scoped, tag = 'scratch operand']
  %s0 = inlined_call_operand.vmem [shape: f32[2,256,4], index: 0, kind: input, shape index: {}]
  %s1 = inlined_call_operand.vmem [shape: bf16[4,4], index: 1, kind: input, shape index: {}]
  %s2 = inlined_call_operand.vmem [shape: f32[1,4], index: 2, kind: input, shape index: {}]
  %s3 = inlined_call_operand.vmem [shape: f32[1,4], index: 3, kind: input, shape index: {}]
  %s4 = inlined_call_operand.vmem [shape: bf16[36,4], index: 4, kind: input, shape index: {}]
  %s5 = inlined_call_operand.vmem [shape: f32[2,1,4], index: 5, kind: output, shape index: {0}]
  %s6 = inlined_call_operand.vmem [shape: f32[2,1,4], index: 6, kind: output, shape index: {1}]
  %7 = xla_tuple %s5, %s6
  %s8 = sld [smem:[#allocation0]]
  $region61: #{bottleneck_forward.4} parent=0
    _
  %s10 = ssub.s32 1, %s8
  %s11 = scalar_select 0, %s10, %s8
  loop: start=0, step=1, limit=4
  $region2: #{bottleneck_forward.4} parent=0 // loop_pre_header
    _
  $region3: #{bottleneck_forward.4} parent=0 // loop_header
    %s13 = sphi 0, %s17
    %p14 = scmp.ge.s32.totalorder %s13, 4
    %s23 = sphi 0, %s25
    %s26 = sphi 0, %s23
    %s27 = sphi 0, %s26
    %s43 = sphi 0, %s27
    %s47 = sphi 0, %s47
    %s49 = sphi 0, %s47
    %s50 = sphi 0, %s49
    %s64 = sphi 0, %s50
    %s68 = sphi 0, %s68
    %s70 = sphi 0, %s68
    %s71 = sphi 0, %s70
    %s85 = sphi 0, %s71
    %s89 = sphi 0, %s89
    %s91 = sphi 0, %s89
    %s92 = sphi 0, %s91
    %s106 = sphi 0, %s92
    %s110 = sphi 0, %s110
    %s112 = sphi 0, %s110
    %s113 = sphi 0, %s112
    %s127 = sphi 0, %s113
    %s133 = sphi 0, %s135
    %s136 = sphi 0, %s133
    %s137 = sphi 0, %s136
    %s153 = sphi 0, %s137
    %s159 = sphi 0, %s161
    %s162 = sphi 0, %s159
    %s163 = sphi 0, %s162
    %s179 = sphi 0, %s163
  $region4: #{bottleneck_forward.4} parent=0 // loop_header_branch
    %16 = sbr.rel (%p14) target = $region8
  $region5: #{bottleneck_forward.4} parent=0 // loop_body
    %s18 = ssub.s32 %s13, 1
    %s19 = ssub.s32 %s13, 2
    %s20 = sadd.s32 %s13, 1
    %s21 = ssub.s32 %s13, %s20
    %p22 = scmp.eq.s32.totalorder %s21, 0
    %s24 = sadd.s32 %s23, 1
    %s25 = scalar_select %p22, %s23, %s24
    %p28 = pneg %p22
    %p29 = scmp.eq.s32.totalorder %s13, 1
    %p30 = por %p28, %p29
    %p31 = scmp.ne.s32.totalorder %s23, %s26
    %p32 = scmp.eq.s32.totalorder %s13, 0
    %p33 = por %p31, %p32
    %p34 = scmp.ne.s32.totalorder %s23, %s26
    %p35 = scmp.eq.s32.totalorder %s18, 1
    %p36 = por %p34, %p35
    %p37 = scmp.ne.s32.totalorder %s26, %s27
    %p38 = scmp.eq.s32.totalorder %s18, 0
    %p39 = por %p37, %p38
    %p40 = scmp.ne.s32.totalorder %s26, %s27
    %p41 = scmp.eq.s32.totalorder %s19, 1
    %p42 = por %p40, %p41
    %p44 = scmp.ne.s32.totalorder %s27, %s43
    %p45 = scmp.eq.s32.totalorder %s19, 0
    %p46 = por %p44, %p45
    %s48 = sadd.s32 %s47, 1
    %p51 = scmp.eq.s32.totalorder %s13, 1
    %p52 = scmp.ne.s32.totalorder %s47, %s49
    %p53 = scmp.eq.s32.totalorder %s13, 0
    %p54 = por %p52, %p53
    %p55 = scmp.ne.s32.totalorder %s47, %s49
    %p56 = scmp.eq.s32.totalorder %s18, 1
    %p57 = por %p55, %p56
    %p58 = scmp.ne.s32.totalorder %s49, %s50
    %p59 = scmp.eq.s32.totalorder %s18, 0
    %p60 = por %p58, %p59
    %p61 = scmp.ne.s32.totalorder %s49, %s50
    %p62 = scmp.eq.s32.totalorder %s19, 1
    %p63 = por %p61, %p62
    %p65 = scmp.ne.s32.totalorder %s50, %s64
    %p66 = scmp.eq.s32.totalorder %s19, 0
    %p67 = por %p65, %p66
    %s69 = sadd.s32 %s68, 1
    %p72 = scmp.eq.s32.totalorder %s13, 1
    %p73 = scmp.ne.s32.totalorder %s68, %s70
    %p74 = scmp.eq.s32.totalorder %s13, 0
    %p75 = por %p73, %p74
    %p76 = scmp.ne.s32.totalorder %s68, %s70
    %p77 = scmp.eq.s32.totalorder %s18, 1
    %p78 = por %p76, %p77
    %p79 = scmp.ne.s32.totalorder %s70, %s71
    %p80 = scmp.eq.s32.totalorder %s18, 0
    %p81 = por %p79, %p80
    %p82 = scmp.ne.s32.totalorder %s70, %s71
    %p83 = scmp.eq.s32.totalorder %s19, 1
    %p84 = por %p82, %p83
    %p86 = scmp.ne.s32.totalorder %s71, %s85
    %p87 = scmp.eq.s32.totalorder %s19, 0
    %p88 = por %p86, %p87
    %s90 = sadd.s32 %s89, 1
    %p93 = scmp.eq.s32.totalorder %s13, 1
    %p94 = scmp.ne.s32.totalorder %s89, %s91
    %p95 = scmp.eq.s32.totalorder %s13, 0
    %p96 = por %p94, %p95
    %p97 = scmp.ne.s32.totalorder %s89, %s91
    %p98 = scmp.eq.s32.totalorder %s18, 1
    %p99 = por %p97, %p98
    %p100 = scmp.ne.s32.totalorder %s91, %s92
    %p101 = scmp.eq.s32.totalorder %s18, 0
    %p102 = por %p100, %p101
    %p103 = scmp.ne.s32.totalorder %s91, %s92
    %p104 = scmp.eq.s32.totalorder %s19, 1
    %p105 = por %p103, %p104
    %p107 = scmp.ne.s32.totalorder %s92, %s106
    %p108 = scmp.eq.s32.totalorder %s19, 0
    %p109 = por %p107, %p108
    %s111 = sadd.s32 %s110, 1
    %p114 = scmp.eq.s32.totalorder %s13, 1
    %p115 = scmp.ne.s32.totalorder %s110, %s112
    %p116 = scmp.eq.s32.totalorder %s13, 0
    %p117 = por %p115, %p116
    %p118 = scmp.ne.s32.totalorder %s110, %s112
    %p119 = scmp.eq.s32.totalorder %s18, 1
    %p120 = por %p118, %p119
    %p121 = scmp.ne.s32.totalorder %s112, %s113
    %p122 = scmp.eq.s32.totalorder %s18, 0
    %p123 = por %p121, %p122
    %p124 = scmp.ne.s32.totalorder %s112, %s113
    %p125 = scmp.eq.s32.totalorder %s19, 1
    %p126 = por %p124, %p125
    %p128 = scmp.ne.s32.totalorder %s113, %s127
    %p129 = scmp.eq.s32.totalorder %s19, 0
    %p130 = por %p128, %p129
    %s131 = ssub.s32 %s13, %s20
    %p132 = scmp.eq.s32.totalorder %s131, 0
    %s134 = sadd.s32 %s133, 1
    %s135 = scalar_select %p132, %s133, %s134
    %p138 = pneg %p132
    %p139 = scmp.eq.s32.totalorder %s13, 1
    %p140 = por %p138, %p139
    %p141 = scmp.ne.s32.totalorder %s133, %s136
    %p142 = scmp.eq.s32.totalorder %s13, 0
    %p143 = por %p141, %p142
    %p144 = scmp.ne.s32.totalorder %s133, %s136
    %p145 = scmp.eq.s32.totalorder %s18, 1
    %p146 = por %p144, %p145
    %p147 = scmp.ne.s32.totalorder %s136, %s137
    %p148 = scmp.eq.s32.totalorder %s18, 0
    %p149 = por %p147, %p148
    %p150 = scmp.ne.s32.totalorder %s136, %s137
    %p151 = scmp.eq.s32.totalorder %s19, 1
    %p152 = por %p150, %p151
    %p154 = scmp.ne.s32.totalorder %s137, %s153
    %p155 = scmp.eq.s32.totalorder %s19, 0
    %p156 = por %p154, %p155
    %s157 = ssub.s32 %s13, %s20
    %p158 = scmp.eq.s32.totalorder %s157, 0
    %s160 = sadd.s32 %s159, 1
    %s161 = scalar_select %p158, %s159, %s160
    %p164 = pneg %p158
    %p165 = scmp.eq.s32.totalorder %s13, 1
    %p166 = por %p164, %p165
    %p167 = scmp.ne.s32.totalorder %s159, %s162
    %p168 = scmp.eq.s32.totalorder %s13, 0
    %p169 = por %p167, %p168
    %p170 = scmp.ne.s32.totalorder %s159, %s162
    %p171 = scmp.eq.s32.totalorder %s18, 1
    %p172 = por %p170, %p171
    %p173 = scmp.ne.s32.totalorder %s162, %s163
    %p174 = scmp.eq.s32.totalorder %s18, 0
    %p175 = por %p173, %p174
    %p176 = scmp.ne.s32.totalorder %s162, %s163
    %p177 = scmp.eq.s32.totalorder %s19, 1
    %p178 = por %p176, %p177
    %p180 = scmp.ne.s32.totalorder %s163, %s179
    %p181 = scmp.eq.s32.totalorder %s19, 0
    %p182 = por %p180, %p181
    %p183 = scmp.le.s32.totalorder 1, %s13
    %p184 = scmp.lt.s32.totalorder %s13, 3
    %p185 = pnand %p183, %p184
    %p186 = pneg %p185
    // Predicated region
    $region9: #{bottleneck_forward.4} parent=5 // pred_check
      _
    $region10: #{bottleneck_forward.4} parent=5 // pred_check_branch
      %188 = sbr.rel (%p185) target = $region12
    $region11: #{bottleneck_forward.4} parent=5 // pred_region
      %s189 = ssub.s32 %s13, 1
      // Predicated region
      $region13: #{bottleneck_forward.4} parent=11 // pred_check
        %p190 = pneg %p60
      $region14: #{bottleneck_forward.4} parent=11 // pred_check_branch
        %192 = sbr.rel (%p190) target = $region16
      $region15: #{bottleneck_forward.4} parent=11 // pred_region
        _
      $region16: #{bottleneck_forward.4} parent=11 // pred_fallthru
        _
      // Predicated region
      $region17: #{bottleneck_forward.4} parent=11 // pred_check
        %p193 = pneg %p81
      $region18: #{bottleneck_forward.4} parent=11 // pred_check_branch
        %195 = sbr.rel (%p193) target = $region20
      $region19: #{bottleneck_forward.4} parent=11 // pred_region
        _
      $region20: #{bottleneck_forward.4} parent=11 // pred_fallthru
        _
      // Predicated region
      $region21: #{bottleneck_forward.4} parent=11 // pred_check
        %p196 = pneg %p102
      $region22: #{bottleneck_forward.4} parent=11 // pred_check_branch
        %198 = sbr.rel (%p196) target = $region24
      $region23: #{bottleneck_forward.4} parent=11 // pred_region
        _
      $region24: #{bottleneck_forward.4} parent=11 // pred_fallthru
        _
      // Predicated region
      $region25: #{bottleneck_forward.4} parent=11 // pred_check
        %p199 = pneg %p123
      $region26: #{bottleneck_forward.4} parent=11 // pred_check_branch
        %201 = sbr.rel (%p199) target = $region28
      $region27: #{bottleneck_forward.4} parent=11 // pred_region
        _
      $region28: #{bottleneck_forward.4} parent=11 // pred_fallthru
        _
    $region12: #{bottleneck_forward.4} parent=5 // pred_fallthru
      _
    %p202 = scmp.lt.s32.totalorder %s13, 2
    // Predicated region
    $region29: #{bottleneck_forward.4} parent=5 // pred_check
      %p203 = pneg %p202
    $region30: #{bottleneck_forward.4} parent=5 // pred_check_branch
      %205 = sbr.rel (%p203) target = $region32
    $region31: #{bottleneck_forward.4} parent=5 // pred_region
      // Predicated region
      $region33: #{bottleneck_forward.4} parent=31 // pred_check
        %p206 = pneg %p33
      $region34: #{bottleneck_forward.4} parent=31 // pred_check_branch
        %208 = sbr.rel (%p206) target = $region36
      $region35: #{bottleneck_forward.4} parent=31 // pred_region
        %p209 = scmp.lt.s32.totalorder %s13, 1
        %s210 = scalar_select %p209, %s13, 1
        %s211 = smul.addr %s210, 32
        %s212 = smul.addr %s211, 8
        %s213 = scalar_lea.vmem %s0, %s212
      $region36: #{bottleneck_forward.4} parent=31 // pred_fallthru
        _
    $region32: #{bottleneck_forward.4} parent=5 // pred_fallthru
      _
    %p214 = scmp.le.s32.totalorder 1, %s13
    %p215 = scmp.lt.s32.totalorder %s13, 3
    %p216 = pnand %p214, %p215
    %p217 = pneg %p216
    // Predicated region
    $region37: #{bottleneck_forward.4} parent=5 // pred_check
      _
    $region38: #{bottleneck_forward.4} parent=5 // pred_check_branch
      %219 = sbr.rel (%p216) target = $region40
    $region39: #{bottleneck_forward.4} parent=5 // pred_region
      %s220 = ssub.s32 %s13, 1
      %p221 = scmp.lt.s32.totalorder %s18, 1
      %s222 = scalar_select %p221, %s18, 1
      %s223 = smul.addr %s222, 32
      %s224 = smul.addr %s223, 8
      %s225 = scalar_lea.vmem %s0, %s224
      %p226 = pneg %p39
      %p227 = pneg %p36
      %p228 = pneg %p60
      %p229 = pneg %p57
      %p230 = pneg %p81
      %p231 = pneg %p78
      %p232 = pneg %p102
      %p233 = pneg %p99
      %p234 = pneg %p123
      %p235 = pneg %p120
      %p236 = pneg %p149
      %p237 = pneg %p146
      %p238 = scmp.lt.s32.totalorder %s18, 1
      %s239 = scalar_select %p238, %s18, 1
      %s240 = scalar_lea.vmem %s5, %s239
      %p241 = pneg %p175
      %p242 = pneg %p172
      %p243 = scmp.lt.s32.totalorder %s18, 1
      %s244 = scalar_select %p243, %s18, 1
      %s245 = scalar_lea.vmem %s6, %s244
      %p246 = scmp.lt.s32.totalorder %s18, 1
      %s247 = scalar_select %p246, %s18, 1
      %s248 = smul.addr %s247, 32
      %s249 = smul.addr %s248, 8
      %s250 = scalar_lea.vmem %s0, %s249
      %p251 = scmp.lt.s32.totalorder %s18, 1
      %s252 = scalar_select %p251, %s18, 1
      %s253 = scalar_lea.vmem %s5, %s252
      %p254 = scmp.lt.s32.totalorder %s18, 1
      %s255 = scalar_select %p254, %s18, 1
      %s256 = scalar_lea.vmem %s6, %s255
      %v258 = vld [vmem:[%s250] sm:$0xff]
      %v259 = vld [vmem:[%s250 + $0x8] sm:$0xff]
      %v260 = vld [vmem:[%s250 + $0x10] sm:$0xff]
      %v261 = vld [vmem:[%s250 + $0x18] sm:$0xff]
      %v262 = vld [vmem:[%s250 + $0x20] sm:$0xff]
      %v263 = vld [vmem:[%s250 + $0x28] sm:$0xff]
      %v264 = vld [vmem:[%s250 + $0x30] sm:$0xff]
      %v265 = vld [vmem:[%s250 + $0x38] sm:$0xff]
      %v266 = vld [vmem:[%s250 + $0x40] sm:$0xff]
      %v267 = vld [vmem:[%s250 + $0x48] sm:$0xff]
      %v268 = vld [vmem:[%s250 + $0x50] sm:$0xff]
      %v269 = vld [vmem:[%s250 + $0x58] sm:$0xff]
      %v270 = vld [vmem:[%s250 + $0x60] sm:$0xff]
      %v271 = vld [vmem:[%s250 + $0x68] sm:$0xff]
      %v272 = vld [vmem:[%s250 + $0x70] sm:$0xff]
      %v273 = vld [vmem:[%s250 + $0x78] sm:$0xff]
      %v274 = vld [vmem:[%s250 + $0x80] sm:$0xff]
      %v275 = vld [vmem:[%s250 + $0x88] sm:$0xff]
      %v276 = vld [vmem:[%s250 + $0x90] sm:$0xff]
      %v277 = vld [vmem:[%s250 + $0x98] sm:$0xff]
      %v278 = vld [vmem:[%s250 + $0xa0] sm:$0xff]
      %v279 = vld [vmem:[%s250 + $0xa8] sm:$0xff]
      %v280 = vld [vmem:[%s250 + $0xb0] sm:$0xff]
      %v281 = vld [vmem:[%s250 + $0xb8] sm:$0xff]
      %v282 = vld [vmem:[%s250 + $0xc0] sm:$0xff]
      %v283 = vld [vmem:[%s250 + $0xc8] sm:$0xff]
      %v284 = vld [vmem:[%s250 + $0xd0] sm:$0xff]
      %v285 = vld [vmem:[%s250 + $0xd8] sm:$0xff]
      %v286 = vld [vmem:[%s250 + $0xe0] sm:$0xff]
      %v287 = vld [vmem:[%s250 + $0xe8] sm:$0xff]
      %v288 = vld [vmem:[%s250 + $0xf0] sm:$0xff]
      %v289 = vld [vmem:[%s250 + $0xf8] sm:$0xff]
      %v290 = vpack.c.bf16 %v259, %v258
      %v291 = vpack.c.bf16 %v261, %v260
      %v292 = vpack.c.bf16 %v263, %v262
      %v293 = vpack.c.bf16 %v265, %v264
      %v294 = vpack.c.bf16 %v267, %v266
      %v295 = vpack.c.bf16 %v269, %v268
      %v296 = vpack.c.bf16 %v271, %v270
      %v297 = vpack.c.bf16 %v273, %v272
      %v298 = vpack.c.bf16 %v275, %v274
      %v299 = vpack.c.bf16 %v277, %v276
      %v300 = vpack.c.bf16 %v279, %v278
      %v301 = vpack.c.bf16 %v281, %v280
      %v302 = vpack.c.bf16 %v283, %v282
      %v303 = vpack.c.bf16 %v285, %v284
      %v304 = vpack.c.bf16 %v287, %v286
      %v305 = vpack.c.bf16 %v289, %v288
      %v306 = vld [vmem:[%s1] sm:$0x3]
      %vm307 = vcmask 31744
      %v309 = vsel %vm307, %v290, 0
      %v312 = vsel %vm307, %v291, 0
      %v315 = vsel %vm307, %v292, 0
      %v318 = vsel %vm307, %v293, 0
      %v321 = vsel %vm307, %v294, 0
      %v324 = vsel %vm307, %v295, 0
      %v327 = vsel %vm307, %v296, 0
      %v330 = vsel %vm307, %v297, 0
      %v333 = vsel %vm307, %v298, 0
      %v336 = vsel %vm307, %v299, 0
      %v339 = vsel %vm307, %v300, 0
      %v342 = vsel %vm307, %v301, 0
      %v345 = vsel %vm307, %v302, 0
      %v348 = vsel %vm307, %v303, 0
      %v351 = vsel %vm307, %v304, 0
      %v354 = vsel %vm307, %v305, 0
      %vm356 = vcmask 1041408
      %v358 = vsel %vm356, %v306, 0
      %360 = vmatprep.subr.bf16.mxu0 0
      %361 = vmatpush1.bf16.msra.mxu0 %v358
      %362 = vmatprep.subr.bf16.mxu0 0
      %363 = vmatpush1.bf16.msra.mxu0 0
      %364 = vmatprep.subr.bf16.mxu0 0
      %365 = vmatpush1.bf16.msra.mxu0 0
      %366 = vmatprep.subr.bf16.mxu0 0
      %367 = vmatpush1.bf16.msra.mxu0 0
      %368 = vmatprep.subr.bf16.mxu0 0
      %369 = vmatpush1.bf16.msra.mxu0 0
      %370 = vmatprep.subr.bf16.mxu0 0
      %371 = vmatpush1.bf16.msra.mxu0 0
      %372 = vmatprep.subr.bf16.mxu0 0
      %373 = vmatpush1.bf16.msra.mxu0 0
      %374 = vmatprep.subr.bf16.mxu0 0
      %375 = vmatpush1.bf16.msra.mxu0 0
      %376 = vmatprep.subr.bf16.mxu0 0
      %377 = vmatpush1.bf16.msra.mxu0 0
      %378 = vmatprep.subr.bf16.mxu0 0
      %379 = vmatpush1.bf16.msra.mxu0 0
      %380 = vmatprep.subr.bf16.mxu0 0
      %381 = vmatpush1.bf16.msra.mxu0 0
      %382 = vmatprep.subr.bf16.mxu0 0
      %383 = vmatpush1.bf16.msra.mxu0 0
      %384 = vmatprep.subr.bf16.mxu0 0
      %385 = vmatpush1.bf16.msra.mxu0 0
      %386 = vmatprep.subr.bf16.mxu0 0
      %387 = vmatpush1.bf16.msra.mxu0 0
      %388 = vmatprep.subr.bf16.mxu0 0
      %389 = vmatpush1.bf16.msra.mxu0 0
      %390 = vmatprep.subr.bf16.mxu0 0
      %391 = vmatpush1.bf16.msra.mxu0 0
      %392 = vmatprep.mubr.bf16.mxu0 0
      %393 = vmatmul.mubr.bf16.gmra.mrb[0].mxu0 %v309
      %v394 = vpop.f32.mrb[0].mxu0
      %v395 = vadd.f32 0.0, %v394
      %v396 = vpop.f32.mrb[0].mxu0
      %v397 = vpop.f32.mrb[0].mxu0
      %v398 = vadd.f32 0.0, %v397
      %v399 = vpop.f32.mrb[0].mxu0
      %400 = vmatprep.mubr.bf16.mxu0 0
      %401 = vmatmul.mubr.bf16.gmra.mrb[0].mxu0 %v312
      %v402 = vpop.f32.mrb[0].mxu0
      %v403 = vadd.f32 0.0, %v402
      %v404 = vpop.f32.mrb[0].mxu0
      %v405 = vpop.f32.mrb[0].mxu0
      %v406 = vadd.f32 0.0, %v405
      %v407 = vpop.f32.mrb[0].mxu0
      %408 = vmatprep.mubr.bf16.mxu0 0
      %409 = vmatmul.mubr.bf16.gmra.mrb[0].mxu0 %v315
      %v410 = vpop.f32.mrb[0].mxu0
      %v411 = vadd.f32 0.0, %v410
      %v412 = vpop.f32.mrb[0].mxu0
      %v413 = vpop.f32.mrb[0].mxu0
      %v414 = vadd.f32 0.0, %v413
      %v415 = vpop.f32.mrb[0].mxu0
      %416 = vmatprep.mubr.bf16.mxu0 0
      %417 = vmatmul.mubr.bf16.gmra.mrb[0].mxu0 %v318
      %v418 = vpop.f32.mrb[0].mxu0
      %v419 = vadd.f32 0.0, %v418
      %v420 = vpop.f32.mrb[0].mxu0
      %v421 = vpop.f32.mrb[0].mxu0
      %v422 = vadd.f32 0.0, %v421
      %v423 = vpop.f32.mrb[0].mxu0
      %424 = vmatprep.mubr.bf16.mxu0 0
      %425 = vmatmul.mubr.bf16.gmra.mrb[0].mxu0 %v321
      %v426 = vpop.f32.mrb[0].mxu0
      %v427 = vadd.f32 0.0, %v426
      %v428 = vpop.f32.mrb[0].mxu0
      %v429 = vpop.f32.mrb[0].mxu0
      %v430 = vadd.f32 0.0, %v429
      %v431 = vpop.f32.mrb[0].mxu0
      %432 = vmatprep.mubr.bf16.mxu0 0
      %433 = vmatmul.mubr.bf16.gmra.mrb[0].mxu0 %v324
      %v434 = vpop.f32.mrb[0].mxu0
      %v435 = vadd.f32 0.0, %v434
      %v436 = vpop.f32.mrb[0].mxu0
      %v437 = vpop.f32.mrb[0].mxu0
      %v438 = vadd.f32 0.0, %v437
      %v439 = vpop.f32.mrb[0].mxu0
      %440 = vmatprep.mubr.bf16.mxu0 0
      %441 = vmatmul.mubr.bf16.gmra.mrb[0].mxu0 %v327
      %v442 = vpop.f32.mrb[0].mxu0
      %v443 = vadd.f32 0.0, %v442
      %v444 = vpop.f32.mrb[0].mxu0
      %v445 = vpop.f32.mrb[0].mxu0
      %v446 = vadd.f32 0.0, %v445
      %v447 = vpop.f32.mrb[0].mxu0
      %448 = vmatprep.mubr.bf16.mxu0 0
      %449 = vmatmul.mubr.bf16.gmra.mrb[0].mxu0 %v330
      %v450 = vpop.f32.mrb[0].mxu0
      %v451 = vadd.f32 0.0, %v450
      %v452 = vpop.f32.mrb[0].mxu0
      %v453 = vpop.f32.mrb[0].mxu0
      %v454 = vadd.f32 0.0, %v453
      %v455 = vpop.f32.mrb[0].mxu0
      %456 = vmatprep.mubr.bf16.mxu0 0
      %457 = vmatmul.mubr.bf16.gmra.mrb[0].mxu0 %v333
      %v458 = vpop.f32.mrb[0].mxu0
      %v459 = vadd.f32 0.0, %v458
      %v460 = vpop.f32.mrb[0].mxu0
      %v461 = vpop.f32.mrb[0].mxu0
      %v462 = vadd.f32 0.0, %v461
      %v463 = vpop.f32.mrb[0].mxu0
      %464 = vmatprep.mubr.bf16.mxu0 0
      %465 = vmatmul.mubr.bf16.gmra.mrb[0].mxu0 %v336
      %v466 = vpop.f32.mrb[0].mxu0
      %v467 = vadd.f32 0.0, %v466
      %v468 = vpop.f32.mrb[0].mxu0
      %v469 = vpop.f32.mrb[0].mxu0
      %v470 = vadd.f32 0.0, %v469
      %v471 = vpop.f32.mrb[0].mxu0
      %472 = vmatprep.mubr.bf16.mxu0 0
      %473 = vmatmul.mubr.bf16.gmra.mrb[0].mxu0 %v339
      %v474 = vpop.f32.mrb[0].mxu0
      %v475 = vadd.f32 0.0, %v474
      %v476 = vpop.f32.mrb[0].mxu0
      %v477 = vpop.f32.mrb[0].mxu0
      %v478 = vadd.f32 0.0, %v477
      %v479 = vpop.f32.mrb[0].mxu0
      %480 = vmatprep.mubr.bf16.mxu0 0
      %481 = vmatmul.mubr.bf16.gmra.mrb[0].mxu0 %v342
      %v482 = vpop.f32.mrb[0].mxu0
      %v483 = vadd.f32 0.0, %v482
      %v484 = vpop.f32.mrb[0].mxu0
      %v485 = vpop.f32.mrb[0].mxu0
      %v486 = vadd.f32 0.0, %v485
      %v487 = vpop.f32.mrb[0].mxu0
      %488 = vmatprep.mubr.bf16.mxu0 0
      %489 = vmatmul.mubr.bf16.gmra.mrb[0].mxu0 %v345
      %v490 = vpop.f32.mrb[0].mxu0
      %v491 = vadd.f32 0.0, %v490
      %v492 = vpop.f32.mrb[0].mxu0
      %v493 = vpop.f32.mrb[0].mxu0
      %v494 = vadd.f32 0.0, %v493
      %v495 = vpop.f32.mrb[0].mxu0
      %496 = vmatprep.mubr.bf16.mxu0 0
      %497 = vmatmul.mubr.bf16.gmra.mrb[0].mxu0 %v348
      %v498 = vpop.f32.mrb[0].mxu0
      %v499 = vadd.f32 0.0, %v498
      %v500 = vpop.f32.mrb[0].mxu0
      %v501 = vpop.f32.mrb[0].mxu0
      %v502 = vadd.f32 0.0, %v501
      %v503 = vpop.f32.mrb[0].mxu0
      %504 = vmatprep.mubr.bf16.mxu0 0
      %505 = vmatmul.mubr.bf16.gmra.mrb[0].mxu0 %v351
      %v506 = vpop.f32.mrb[0].mxu0
      %v507 = vadd.f32 0.0, %v506
      %v508 = vpop.f32.mrb[0].mxu0
      %v509 = vpop.f32.mrb[0].mxu0
      %v510 = vadd.f32 0.0, %v509
      %v511 = vpop.f32.mrb[0].mxu0
      %512 = vmatprep.mubr.bf16.mxu0 0
      %513 = vmatmul.mubr.bf16.gmra.mrb[0].mxu0 %v354
      %v514 = vpop.f32.mrb[0].mxu0
      %v515 = vadd.f32 0.0, %v514
      %v516 = vpop.f32.mrb[0].mxu0
      %v517 = vpop.f32.mrb[0].mxu0
      %v518 = vadd.f32 0.0, %v517
      %v519 = vpop.f32.mrb[0].mxu0
      %520 = vdwg.mxu0
      %v521 = vld [vmem:[%s2] sm:$0x1]
      %v523 = vlaneseq
      %v524 = vshrl.u32 %v523, 7
      %v525 = vsub.s32 0, %v524
      %v526 = vrot.slane %v521, %v525
      %v528 = vmul.f32 %v395, %v526
      %v529 = vmul.f32 %v398, %v526
      %v530 = vmul.f32 %v403, %v526
      %v531 = vmul.f32 %v406, %v526
      %v532 = vmul.f32 %v411, %v526
      %v533 = vmul.f32 %v414, %v526
      %v534 = vmul.f32 %v419, %v526
      %v535 = vmul.f32 %v422, %v526
      %v536 = vmul.f32 %v427, %v526
      %v537 = vmul.f32 %v430, %v526
      %v538 = vmul.f32 %v435, %v526
      %v539 = vmul.f32 %v438, %v526
      %v540 = vmul.f32 %v443, %v526
      %v541 = vmul.f32 %v446, %v526
      %v542 = vmul.f32 %v451, %v526
      %v543 = vmul.f32 %v454, %v526
      %v544 = vmul.f32 %v459, %v526
      %v545 = vmul.f32 %v462, %v526
      %v546 = vmul.f32 %v467, %v526
      %v547 = vmul.f32 %v470, %v526
      %v548 = vmul.f32 %v475, %v526
      %v549 = vmul.f32 %v478, %v526
      %v550 = vmul.f32 %v483, %v526
      %v551 = vmul.f32 %v486, %v526
      %v552 = vmul.f32 %v491, %v526
      %v553 = vmul.f32 %v494, %v526
      %v554 = vmul.f32 %v499, %v526
      %v555 = vmul.f32 %v502, %v526
      %v556 = vmul.f32 %v507, %v526
      %v557 = vmul.f32 %v510, %v526
      %v558 = vmul.f32 %v515, %v526
      %v559 = vmul.f32 %v518, %v526
      %v560 = vld [vmem:[%s3] sm:$0x1]
      %v562 = vlaneseq
      %v563 = vshrl.u32 %v562, 7
      %v564 = vsub.s32 0, %v563
      %v565 = vrot.slane %v560, %v564
      %v567 = vadd.f32 %v528, %v565
      %v568 = vadd.f32 %v529, %v565
      %v569 = vadd.f32 %v530, %v565
      %v570 = vadd.f32 %v531, %v565
      %v571 = vadd.f32 %v532, %v565
      %v572 = vadd.f32 %v533, %v565
      %v573 = vadd.f32 %v534, %v565
      %v574 = vadd.f32 %v535, %v565
      %v575 = vadd.f32 %v536, %v565
      %v576 = vadd.f32 %v537, %v565
      %v577 = vadd.f32 %v538, %v565
      %v578 = vadd.f32 %v539, %v565
      %v579 = vadd.f32 %v540, %v565
      %v580 = vadd.f32 %v541, %v565
      %v581 = vadd.f32 %v542, %v565
      %v582 = vadd.f32 %v543, %v565
      %v583 = vadd.f32 %v544, %v565
      %v584 = vadd.f32 %v545, %v565
      %v585 = vadd.f32 %v546, %v565
      %v586 = vadd.f32 %v547, %v565
      %v587 = vadd.f32 %v548, %v565
      %v588 = vadd.f32 %v549, %v565
      %v589 = vadd.f32 %v550, %v565
      %v590 = vadd.f32 %v551, %v565
      %v591 = vadd.f32 %v552, %v565
      %v592 = vadd.f32 %v553, %v565
      %v593 = vadd.f32 %v554, %v565
      %v594 = vadd.f32 %v555, %v565
      %v595 = vadd.f32 %v556, %v565
      %v596 = vadd.f32 %v557, %v565
      %v597 = vadd.f32 %v558, %v565
      %v598 = vadd.f32 %v559, %v565
      %v599 = vmax.f32 %v567, 0.0
      %v600 = vmax.f32 %v568, 0.0
      %v601 = vmax.f32 %v569, 0.0
      %v602 = vmax.f32 %v570, 0.0
      %v603 = vmax.f32 %v571, 0.0
      %v604 = vmax.f32 %v572, 0.0
      %v605 = vmax.f32 %v573, 0.0
      %v606 = vmax.f32 %v574, 0.0
      %v607 = vmax.f32 %v575, 0.0
      %v608 = vmax.f32 %v576, 0.0
      %v609 = vmax.f32 %v577, 0.0
      %v610 = vmax.f32 %v578, 0.0
      %v611 = vmax.f32 %v579, 0.0
      %v612 = vmax.f32 %v580, 0.0
      %v613 = vmax.f32 %v581, 0.0
      %v614 = vmax.f32 %v582, 0.0
      %v615 = vmax.f32 %v583, 0.0
      %v616 = vmax.f32 %v584, 0.0
      %v617 = vmax.f32 %v585, 0.0
      %v618 = vmax.f32 %v586, 0.0
      %v619 = vmax.f32 %v587, 0.0
      %v620 = vmax.f32 %v588, 0.0
      %v621 = vmax.f32 %v589, 0.0
      %v622 = vmax.f32 %v590, 0.0
      %v623 = vmax.f32 %v591, 0.0
      %v624 = vmax.f32 %v592, 0.0
      %v625 = vmax.f32 %v593, 0.0
      %v626 = vmax.f32 %v594, 0.0
      %v627 = vmax.f32 %v595, 0.0
      %v628 = vmax.f32 %v596, 0.0
      %v629 = vmax.f32 %v597, 0.0
      %v630 = vmax.f32 %v598, 0.0
      %631 = vst.msk [vmem:[#allocation2] sm:$0xff] %vm307, 0.0
      %632 = vst.msk [vmem:[#allocation2 + $0x8] sm:$0xff] %vm307, 0.0
      %vm633 = vcmask 25600
      %634 = vst.msk [vmem:[#allocation2 + $0x10] sm:$0x3] %vm633, 0.0
      %635 = vst.msk [vmem:[#allocation2 + $0x18] sm:$0xff] %vm307, 0.0
      %636 = vst.msk [vmem:[#allocation2 + $0x20] sm:$0xff] %vm307, 0.0
      %637 = vst.msk [vmem:[#allocation2 + $0x28] sm:$0x3] %vm633, 0.0
      %638 = vst.msk [vmem:[#allocation2 + $0x30] sm:$0xff] %vm307, 0.0
      %639 = vst.msk [vmem:[#allocation2 + $0x38] sm:$0xff] %vm307, 0.0
      %640 = vst.msk [vmem:[#allocation2 + $0x40] sm:$0x3] %vm633, 0.0
      %641 = vst.msk [vmem:[#allocation2 + $0x48] sm:$0xff] %vm307, 0.0
      %642 = vst.msk [vmem:[#allocation2 + $0x50] sm:$0xff] %vm307, 0.0
      %643 = vst.msk [vmem:[#allocation2 + $0x58] sm:$0x3] %vm633, 0.0
      %644 = vst.msk [vmem:[#allocation2 + $0x60] sm:$0xff] %vm307, 0.0
      %645 = vst.msk [vmem:[#allocation2 + $0x68] sm:$0xff] %vm307, 0.0
      %646 = vst.msk [vmem:[#allocation2 + $0x70] sm:$0x3] %vm633, 0.0
      %647 = vst.msk [vmem:[#allocation2 + $0x78] sm:$0xff] %vm307, 0.0
      %648 = vst.msk [vmem:[#allocation2 + $0x80] sm:$0xff] %vm307, 0.0
      %649 = vst.msk [vmem:[#allocation2 + $0x88] sm:$0x3] %vm633, 0.0
      %650 = vst.msk [vmem:[#allocation2 + $0x90] sm:$0xff] %vm307, 0.0
      %651 = vst.msk [vmem:[#allocation2 + $0x98] sm:$0xff] %vm307, 0.0
      %652 = vst.msk [vmem:[#allocation2 + $0xa0] sm:$0x3] %vm633, 0.0
      %653 = vst.msk [vmem:[#allocation2 + $0xa8] sm:$0xff] %vm307, 0.0
      %654 = vst.msk [vmem:[#allocation2 + $0xb0] sm:$0xff] %vm307, 0.0
      %655 = vst.msk [vmem:[#allocation2 + $0xb8] sm:$0x3] %vm633, 0.0
      %656 = vst.msk [vmem:[#allocation2 + $0xc0] sm:$0xff] %vm307, 0.0
      %657 = vst.msk [vmem:[#allocation2 + $0xc8] sm:$0xff] %vm307, 0.0
      %658 = vst.msk [vmem:[#allocation2 + $0xd0] sm:$0x3] %vm633, 0.0
      %659 = vst.msk [vmem:[#allocation2 + $0xd8] sm:$0xff] %vm307, 0.0
      %660 = vst.msk [vmem:[#allocation2 + $0xe0] sm:$0xff] %vm307, 0.0
      %661 = vst.msk [vmem:[#allocation2 + $0xe8] sm:$0x3] %vm633, 0.0
      %662 = vst.msk [vmem:[#allocation2 + $0xf0] sm:$0xff] %vm307, 0.0
      %663 = vst.msk [vmem:[#allocation2 + $0xf8] sm:$0xff] %vm307, 0.0
      %664 = vst.msk [vmem:[#allocation2 + $0x100] sm:$0x3] %vm633, 0.0
      %665 = vst.msk [vmem:[#allocation2 + $0x108] sm:$0xff] %vm307, 0.0
      %666 = vst.msk [vmem:[#allocation2 + $0x110] sm:$0xff] %vm307, 0.0
      %667 = vst.msk [vmem:[#allocation2 + $0x118] sm:$0x3] %vm633, 0.0
      %668 = vst.msk [vmem:[#allocation2 + $0x120] sm:$0xff] %vm307, 0.0
      %669 = vst.msk [vmem:[#allocation2 + $0x128] sm:$0xff] %vm307, 0.0
      %670 = vst.msk [vmem:[#allocation2 + $0x130] sm:$0x3] %vm633, 0.0
      %671 = vst.msk [vmem:[#allocation2 + $0x138] sm:$0xff] %vm307, 0.0
      %672 = vst.msk [vmem:[#allocation2 + $0x140] sm:$0xff] %vm307, 0.0
      %673 = vst.msk [vmem:[#allocation2 + $0x148] sm:$0x3] %vm633, 0.0
      %674 = vst.msk [vmem:[#allocation2 + $0x150] sm:$0xff] %vm307, 0.0
      %675 = vst.msk [vmem:[#allocation2 + $0x158] sm:$0xff] %vm307, 0.0
      %676 = vst.msk [vmem:[#allocation2 + $0x160] sm:$0x3] %vm633, 0.0
      %677 = vst.msk [vmem:[#allocation2 + $0x168] sm:$0xff] %vm307, 0.0
      %678 = vst.msk [vmem:[#allocation2 + $0x170] sm:$0xff] %vm307, 0.0
      %679 = vst.msk [vmem:[#allocation2 + $0x178] sm:$0x3] %vm633, 0.0
      %680 = vst.msk [vmem:[#allocation2 + $0x180] sm:$0xff] %vm307, 0.0
      %681 = vst.msk [vmem:[#allocation2 + $0x188] sm:$0xff] %vm307, 0.0
      %682 = vst.msk [vmem:[#allocation2 + $0x190] sm:$0x3] %vm633, 0.0
      %683 = vst.msk [vmem:[#allocation2 + $0x198] sm:$0xff] %vm307, 0.0
      %684 = vst.msk [vmem:[#allocation2 + $0x1a0] sm:$0xff] %vm307, 0.0
      %685 = vst.msk [vmem:[#allocation2 + $0x1a8] sm:$0x3] %vm633, 0.0
      %s686 = scalar_lea.vmem [#allocation2], 24
      %687 = vst.msk [vmem:[%s686 + $0x1] sm:$0xff] %vm307, %v599
      %688 = vst.msk [vmem:[%s686 + $0x9] sm:$0xff] %vm307, %v600
      %689 = vst.msk [vmem:[%s686 + $0x19] sm:$0xff] %vm307, %v601
      %690 = vst.msk [vmem:[%s686 + $0x21] sm:$0xff] %vm307, %v602
      %691 = vst.msk [vmem:[%s686 + $0x31] sm:$0xff] %vm307, %v603
      %692 = vst.msk [vmem:[%s686 + $0x39] sm:$0xff] %vm307, %v604
      %693 = vst.msk [vmem:[%s686 + $0x49] sm:$0xff] %vm307, %v605
      %694 = vst.msk [vmem:[%s686 + $0x51] sm:$0xff] %vm307, %v606
      %695 = vst.msk [vmem:[%s686 + $0x61] sm:$0xff] %vm307, %v607
      %696 = vst.msk [vmem:[%s686 + $0x69] sm:$0xff] %vm307, %v608
      %697 = vst.msk [vmem:[%s686 + $0x79] sm:$0xff] %vm307, %v609
      %698 = vst.msk [vmem:[%s686 + $0x81] sm:$0xff] %vm307, %v610
      %699 = vst.msk [vmem:[%s686 + $0x91] sm:$0xff] %vm307, %v611
      %700 = vst.msk [vmem:[%s686 + $0x99] sm:$0xff] %vm307, %v612
      %701 = vst.msk [vmem:[%s686 + $0xa9] sm:$0xff] %vm307, %v613
      %702 = vst.msk [vmem:[%s686 + $0xb1] sm:$0xff] %vm307, %v614
      %703 = vst.msk [vmem:[%s686 + $0xc1] sm:$0xff] %vm307, %v615
      %704 = vst.msk [vmem:[%s686 + $0xc9] sm:$0xff] %vm307, %v616
      %705 = vst.msk [vmem:[%s686 + $0xd9] sm:$0xff] %vm307, %v617
      %706 = vst.msk [vmem:[%s686 + $0xe1] sm:$0xff] %vm307, %v618
      %707 = vst.msk [vmem:[%s686 + $0xf1] sm:$0xff] %vm307, %v619
      %708 = vst.msk [vmem:[%s686 + $0xf9] sm:$0xff] %vm307, %v620
      %709 = vst.msk [vmem:[%s686 + $0x109] sm:$0xff] %vm307, %v621
      %710 = vst.msk [vmem:[%s686 + $0x111] sm:$0xff] %vm307, %v622
      %711 = vst.msk [vmem:[%s686 + $0x121] sm:$0xff] %vm307, %v623
      %712 = vst.msk [vmem:[%s686 + $0x129] sm:$0xff] %vm307, %v624
      %713 = vst.msk [vmem:[%s686 + $0x139] sm:$0xff] %vm307, %v625
      %714 = vst.msk [vmem:[%s686 + $0x141] sm:$0xff] %vm307, %v626
      %715 = vst.msk [vmem:[%s686 + $0x151] sm:$0xff] %vm307, %v627
      %716 = vst.msk [vmem:[%s686 + $0x159] sm:$0xff] %vm307, %v628
      %717 = vst.msk [vmem:[%s686 + $0x169] sm:$0xff] %vm307, %v629
      %718 = vst.msk [vmem:[%s686 + $0x171] sm:$0xff] %vm307, %v630
      %v719 = vld [vmem:[#allocation2] sm:$0xff]
      %v720 = vld [vmem:[#allocation2 + $0x8] sm:$0xff]
      %v721 = vld [vmem:[#allocation2 + $0x18] sm:$0xff]
      %v722 = vld [vmem:[#allocation2 + $0x20] sm:$0xff]
      %v723 = vld [vmem:[#allocation2 + $0x30] sm:$0xff]
      %v724 = vld [vmem:[#allocation2 + $0x38] sm:$0xff]
      %v725 = vld [vmem:[#allocation2 + $0x48] sm:$0xff]
      %v726 = vld [vmem:[#allocation2 + $0x50] sm:$0xff]
      %v727 = vld [vmem:[#allocation2 + $0x60] sm:$0xff]
      %v728 = vld [vmem:[#allocation2 + $0x68] sm:$0xff]
      %v729 = vld [vmem:[#allocation2 + $0x78] sm:$0xff]
      %v730 = vld [vmem:[#allocation2 + $0x80] sm:$0xff]
      %v731 = vld [vmem:[#allocation2 + $0x90] sm:$0xff]
      %v732 = vld [vmem:[#allocation2 + $0x98] sm:$0xff]
      %v733 = vld [vmem:[#allocation2 + $0xa8] sm:$0xff]
      %v734 = vld [vmem:[#allocation2 + $0xb0] sm:$0xff]
      %v735 = vld [vmem:[#allocation2 + $0xc0] sm:$0xff]
      %v736 = vld [vmem:[#allocation2 + $0xc8] sm:$0xff]
      %v737 = vld [vmem:[#allocation2 + $0xd8] sm:$0xff]
      %v738 = vld [vmem:[#allocation2 + $0xe0] sm:$0xff]
      %v739 = vld [vmem:[#allocation2 + $0xf0] sm:$0xff]
      %v740 = vld [vmem:[#allocation2 + $0xf8] sm:$0xff]
      %v741 = vld [vmem:[#allocation2 + $0x108] sm:$0xff]
      %v742 = vld [vmem:[#allocation2 + $0x110] sm:$0xff]
      %v743 = vld [vmem:[#allocation2 + $0x120] sm:$0xff]
      %v744 = vld [vmem:[#allocation2 + $0x128] sm:$0xff]
      %v745 = vld [vmem:[#allocation2 + $0x138] sm:$0xff]
      %v746 = vld [vmem:[#allocation2 + $0x140] sm:$0xff]
      %v747 = vld [vmem:[#allocation2 + $0x150] sm:$0xff]
      %v748 = vld [vmem:[#allocation2 + $0x158] sm:$0xff]
      %v749 = vld [vmem:[#allocation2 + $0x168] sm:$0xff]
      %v750 = vld [vmem:[#allocation2 + $0x170] sm:$0xff]
      %v751 = vpack.c.bf16 %v720, %v719
      %v752 = vpack.c.bf16 %v722, %v721
      %v753 = vpack.c.bf16 %v724, %v723
      %v754 = vpack.c.bf16 %v726, %v725
      %v755 = vpack.c.bf16 %v728, %v727
      %v756 = vpack.c.bf16 %v730, %v729
      %v757 = vpack.c.bf16 %v732, %v731
      %v758 = vpack.c.bf16 %v734, %v733
      %v759 = vpack.c.bf16 %v736, %v735
      %v760 = vpack.c.bf16 %v738, %v737
      %v761 = vpack.c.bf16 %v740, %v739
      %v762 = vpack.c.bf16 %v742, %v741
      %v763 = vpack.c.bf16 %v744, %v743
      %v764 = vpack.c.bf16 %v746, %v745
      %v765 = vpack.c.bf16 %v748, %v747
      %v766 = vpack.c.bf16 %v750, %v749
      %767 = vst.msk [vmem:[#allocation3] sm:$0xff] %vm307, %v751
      %768 = vst.msk [vmem:[#allocation3 + $0x8] sm:$0xff] %vm307, %v752
      %769 = vst.msk [vmem:[#allocation3 + $0x10] sm:$0xff] %vm307, %v753
      %770 = vst.msk [vmem:[#allocation3 + $0x18] sm:$0xff] %vm307, %v754
      %771 = vst.msk [vmem:[#allocation3 + $0x20] sm:$0xff] %vm307, %v755
      %772 = vst.msk [vmem:[#allocation3 + $0x28] sm:$0xff] %vm307, %v756
      %773 = vst.msk [vmem:[#allocation3 + $0x30] sm:$0xff] %vm307, %v757
      %774 = vst.msk [vmem:[#allocation3 + $0x38] sm:$0xff] %vm307, %v758
      %775 = vst.msk [vmem:[#allocation3 + $0x40] sm:$0xff] %vm307, %v759
      %776 = vst.msk [vmem:[#allocation3 + $0x48] sm:$0xff] %vm307, %v760
      %777 = vst.msk [vmem:[#allocation3 + $0x50] sm:$0xff] %vm307, %v761
      %778 = vst.msk [vmem:[#allocation3 + $0x58] sm:$0xff] %vm307, %v762
      %779 = vst.msk [vmem:[#allocation3 + $0x60] sm:$0xff] %vm307, %v763
      %780 = vst.msk [vmem:[#allocation3 + $0x68] sm:$0xff] %vm307, %v764
      %781 = vst.msk [vmem:[#allocation3 + $0x70] sm:$0xff] %vm307, %v765
      %782 = vst.msk [vmem:[#allocation3 + $0x78] sm:$0xff] %vm307, %v766
      %v783 = vld [vmem:[#allocation2 + $0x1] sm:$0xff]
      %v784 = vld [vmem:[#allocation2 + $0x9] sm:$0xff]
      %v785 = vld [vmem:[#allocation2 + $0x19] sm:$0xff]
      %v786 = vld [vmem:[#allocation2 + $0x21] sm:$0xff]
      %v787 = vld [vmem:[#allocation2 + $0x31] sm:$0xff]
      %v788 = vld [vmem:[#allocation2 + $0x39] sm:$0xff]
      %v789 = vld [vmem:[#allocation2 + $0x49] sm:$0xff]
      %v790 = vld [vmem:[#allocation2 + $0x51] sm:$0xff]
      %v791 = vld [vmem:[#allocation2 + $0x61] sm:$0xff]
      %v792 = vld [vmem:[#allocation2 + $0x69] sm:$0xff]
      %v793 = vld [vmem:[#allocation2 + $0x79] sm:$0xff]
      %v794 = vld [vmem:[#allocation2 + $0x81] sm:$0xff]
      %v795 = vld [vmem:[#allocation2 + $0x91] sm:$0xff]
      %v796 = vld [vmem:[#allocation2 + $0x99] sm:$0xff]
      %v797 = vld [vmem:[#allocation2 + $0xa9] sm:$0xff]
      %v798 = vld [vmem:[#allocation2 + $0xb1] sm:$0xff]
      %v799 = vld [vmem:[#allocation2 + $0xc1] sm:$0xff]
      %v800 = vld [vmem:[#allocation2 + $0xc9] sm:$0xff]
      %v801 = vld [vmem:[#allocation2 + $0xd9] sm:$0xff]
      %v802 = vld [vmem:[#allocation2 + $0xe1] sm:$0xff]
      %v803 = vld [vmem:[#allocation2 + $0xf1] sm:$0xff]
      %v804 = vld [vmem:[#allocation2 + $0xf9] sm:$0xff]
      %v805 = vld [vmem:[#allocation2 + $0x109] sm:$0xff]
      %v806 = vld [vmem:[#allocation2 + $0x111] sm:$0xff]
      %v807 = vld [vmem:[#allocation2 + $0x121] sm:$0xff]
      %v808 = vld [vmem:[#allocation2 + $0x129] sm:$0xff]
      %v809 = vld [vmem:[#allocation2 + $0x139] sm:$0xff]
      %v810 = vld [vmem:[#allocation2 + $0x141] sm:$0xff]
      %v811 = vld [vmem:[#allocation2 + $0x151] sm:$0xff]
      %v812 = vld [vmem:[#allocation2 + $0x159] sm:$0xff]
      %v813 = vld [vmem:[#allocation2 + $0x169] sm:$0xff]
      %v814 = vld [vmem:[#allocation2 + $0x171] sm:$0xff]
      %v815 = vpack.c.bf16 %v784, %v783
      %v816 = vpack.c.bf16 %v786, %v785
      %v817 = vpack.c.bf16 %v788, %v787
      %v818 = vpack.c.bf16 %v790, %v789
      %v819 = vpack.c.bf16 %v792, %v791
      %v820 = vpack.c.bf16 %v794, %v793
      %v821 = vpack.c.bf16 %v796, %v795
      %v822 = vpack.c.bf16 %v798, %v797
      %v823 = vpack.c.bf16 %v800, %v799
      %v824 = vpack.c.bf16 %v802, %v801
      %v825 = vpack.c.bf16 %v804, %v803
      %v826 = vpack.c.bf16 %v806, %v805
      %v827 = vpack.c.bf16 %v808, %v807
      %v828 = vpack.c.bf16 %v810, %v809
      %v829 = vpack.c.bf16 %v812, %v811
      %v830 = vpack.c.bf16 %v814, %v813
      %847 = vrot.lane.b32.xlu0 %v815, 4
      %v848 = vpop.permute.xlu0 %847
      %849 = vrot.lane.b32.xlu0 %v816, 4
      %v850 = vpop.permute.xlu0 %849
      %851 = vrot.lane.b32.xlu0 %v817, 4
      %v852 = vpop.permute.xlu0 %851
      %853 = vrot.lane.b32.xlu0 %v818, 4
      %v854 = vpop.permute.xlu0 %853
      %855 = vrot.lane.b32.xlu0 %v819, 4
      %v856 = vpop.permute.xlu0 %855
      %857 = vrot.lane.b32.xlu0 %v820, 4
      %v858 = vpop.permute.xlu0 %857
      %859 = vrot.lane.b32.xlu0 %v821, 4
      %v860 = vpop.permute.xlu0 %859
      %861 = vrot.lane.b32.xlu0 %v822, 4
      %v862 = vpop.permute.xlu0 %861
      %863 = vrot.lane.b32.xlu0 %v823, 4
      %v864 = vpop.permute.xlu0 %863
      %865 = vrot.lane.b32.xlu0 %v824, 4
      %v866 = vpop.permute.xlu0 %865
      %867 = vrot.lane.b32.xlu0 %v825, 4
      %v868 = vpop.permute.xlu0 %867
      %869 = vrot.lane.b32.xlu0 %v826, 4
      %v870 = vpop.permute.xlu0 %869
      %871 = vrot.lane.b32.xlu0 %v827, 4
      %v872 = vpop.permute.xlu0 %871
      %873 = vrot.lane.b32.xlu0 %v828, 4
      %v874 = vpop.permute.xlu0 %873
      %875 = vrot.lane.b32.xlu0 %v829, 4
      %v876 = vpop.permute.xlu0 %875
      %877 = vrot.lane.b32.xlu0 %v830, 4
      %v878 = vpop.permute.xlu0 %877
      %vm895 = vcmask 64544
      %896 = vst.msk [vmem:[#allocation3] sm:$0xff] %vm895, %v848
      %897 = vst.msk [vmem:[#allocation3 + $0x8] sm:$0xff] %vm895, %v850
      %898 = vst.msk [vmem:[#allocation3 + $0x10] sm:$0xff] %vm895, %v852
      %899 = vst.msk [vmem:[#allocation3 + $0x18] sm:$0xff] %vm895, %v854
      %900 = vst.msk [vmem:[#allocation3 + $0x20] sm:$0xff] %vm895, %v856
      %901 = vst.msk [vmem:[#allocation3 + $0x28] sm:$0xff] %vm895, %v858
      %902 = vst.msk [vmem:[#allocation3 + $0x30] sm:$0xff] %vm895, %v860
      %903 = vst.msk [vmem:[#allocation3 + $0x38] sm:$0xff] %vm895, %v862
      %904 = vst.msk [vmem:[#allocation3 + $0x40] sm:$0xff] %vm895, %v864
      %905 = vst.msk [vmem:[#allocation3 + $0x48] sm:$0xff] %vm895, %v866
      %906 = vst.msk [vmem:[#allocation3 + $0x50] sm:$0xff] %vm895, %v868
      %907 = vst.msk [vmem:[#allocation3 + $0x58] sm:$0xff] %vm895, %v870
      %908 = vst.msk [vmem:[#allocation3 + $0x60] sm:$0xff] %vm895, %v872
      %909 = vst.msk [vmem:[#allocation3 + $0x68] sm:$0xff] %vm895, %v874
      %910 = vst.msk [vmem:[#allocation3 + $0x70] sm:$0xff] %vm895, %v876
      %911 = vst.msk [vmem:[#allocation3 + $0x78] sm:$0xff] %vm895, %v878
      %v912 = vld [vmem:[#allocation2 + $0x2] sm:$0xff]
      %v913 = vld [vmem:[#allocation2 + $0xa] sm:$0xff]
      %v914 = vld [vmem:[#allocation2 + $0x1a] sm:$0xff]
      %v915 = vld [vmem:[#allocation2 + $0x22] sm:$0xff]
      %v916 = vld [vmem:[#allocation2 + $0x32] sm:$0xff]
      %v917 = vld [vmem:[#allocation2 + $0x3a] sm:$0xff]
      %v918 = vld [vmem:[#allocation2 + $0x4a] sm:$0xff]
      %v919 = vld [vmem:[#allocation2 + $0x52] sm:$0xff]
      %v920 = vld [vmem:[#allocation2 + $0x62] sm:$0xff]
      %v921 = vld [vmem:[#allocation2 + $0x6a] sm:$0xff]
      %v922 = vld [vmem:[#allocation2 + $0x7a] sm:$0xff]
      %v923 = vld [vmem:[#allocation2 + $0x82] sm:$0xff]
      %v924 = vld [vmem:[#allocation2 + $0x92] sm:$0xff]
      %v925 = vld [vmem:[#allocation2 + $0x9a] sm:$0xff]
      %v926 = vld [vmem:[#allocation2 + $0xaa] sm:$0xff]
      %v927 = vld [vmem:[#allocation2 + $0xb2] sm:$0xff]
      %v928 = vld [vmem:[#allocation2 + $0xc2] sm:$0xff]
      %v929 = vld [vmem:[#allocation2 + $0xca] sm:$0xff]
      %v930 = vld [vmem:[#allocation2 + $0xda] sm:$0xff]
      %v931 = vld [vmem:[#allocation2 + $0xe2] sm:$0xff]
      %v932 = vld [vmem:[#allocation2 + $0xf2] sm:$0xff]
      %v933 = vld [vmem:[#allocation2 + $0xfa] sm:$0xff]
      %v934 = vld [vmem:[#allocation2 + $0x10a] sm:$0xff]
      %v935 = vld [vmem:[#allocation2 + $0x112] sm:$0xff]
      %v936 = vld [vmem:[#allocation2 + $0x122] sm:$0xff]
      %v937 = vld [vmem:[#allocation2 + $0x12a] sm:$0xff]
      %v938 = vld [vmem:[#allocation2 + $0x13a] sm:$0xff]
      %v939 = vld [vmem:[#allocation2 + $0x142] sm:$0xff]
      %v940 = vld [vmem:[#allocation2 + $0x152] sm:$0xff]
      %v941 = vld [vmem:[#allocation2 + $0x15a] sm:$0xff]
      %v942 = vld [vmem:[#allocation2 + $0x16a] sm:$0xff]
      %v943 = vld [vmem:[#allocation2 + $0x172] sm:$0xff]
      %v944 = vpack.c.bf16 %v913, %v912
      %v945 = vpack.c.bf16 %v915, %v914
      %v946 = vpack.c.bf16 %v917, %v916
      %v947 = vpack.c.bf16 %v919, %v918
      %v948 = vpack.c.bf16 %v921, %v920
      %v949 = vpack.c.bf16 %v923, %v922
      %v950 = vpack.c.bf16 %v925, %v924
      %v951 = vpack.c.bf16 %v927, %v926
      %v952 = vpack.c.bf16 %v929, %v928
      %v953 = vpack.c.bf16 %v931, %v930
      %v954 = vpack.c.bf16 %v933, %v932
      %v955 = vpack.c.bf16 %v935, %v934
      %v956 = vpack.c.bf16 %v937, %v936
      %v957 = vpack.c.bf16 %v939, %v938
      %v958 = vpack.c.bf16 %v941, %v940
      %v959 = vpack.c.bf16 %v943, %v942
      %976 = vrot.lane.b32.xlu0 %v944, 8
      %v977 = vpop.permute.xlu0 %976
      %978 = vrot.lane.b32.xlu0 %v945, 8
      %v979 = vpop.permute.xlu0 %978
      %980 = vrot.lane.b32.xlu0 %v946, 8
      %v981 = vpop.permute.xlu0 %980
      %982 = vrot.lane.b32.xlu0 %v947, 8
      %v983 = vpop.permute.xlu0 %982
      %984 = vrot.lane.b32.xlu0 %v948, 8
      %v985 = vpop.permute.xlu0 %984
      %986 = vrot.lane.b32.xlu0 %v949, 8
      %v987 = vpop.permute.xlu0 %986
      %988 = vrot.lane.b32.xlu0 %v950, 8
      %v989 = vpop.permute.xlu0 %988
      %990 = vrot.lane.b32.xlu0 %v951, 8
      %v991 = vpop.permute.xlu0 %990
      %992 = vrot.lane.b32.xlu0 %v952, 8
      %v993 = vpop.permute.xlu0 %992
      %994 = vrot.lane.b32.xlu0 %v953, 8
      %v995 = vpop.permute.xlu0 %994
      %996 = vrot.lane.b32.xlu0 %v954, 8
      %v997 = vpop.permute.xlu0 %996
      %998 = vrot.lane.b32.xlu0 %v955, 8
      %v999 = vpop.permute.xlu0 %998
      %1000 = vrot.lane.b32.xlu0 %v956, 8
      %v1001 = vpop.permute.xlu0 %1000
      %1002 = vrot.lane.b32.xlu0 %v957, 8
      %v1003 = vpop.permute.xlu0 %1002
      %1004 = vrot.lane.b32.xlu0 %v958, 8
      %v1005 = vpop.permute.xlu0 %1004
      %1006 = vrot.lane.b32.xlu0 %v959, 8
      %v1007 = vpop.permute.xlu0 %1006
      %vm1024 = vcmask 97344
      %1025 = vst.msk [vmem:[#allocation3] sm:$0xff] %vm1024, %v977
      %1026 = vst.msk [vmem:[#allocation3 + $0x8] sm:$0xff] %vm1024, %v979
      %1027 = vst.msk [vmem:[#allocation3 + $0x10] sm:$0xff] %vm1024, %v981
      %1028 = vst.msk [vmem:[#allocation3 + $0x18] sm:$0xff] %vm1024, %v983
      %1029 = vst.msk [vmem:[#allocation3 + $0x20] sm:$0xff] %vm1024, %v985
      %1030 = vst.msk [vmem:[#allocation3 + $0x28] sm:$0xff] %vm1024, %v987
      %1031 = vst.msk [vmem:[#allocation3 + $0x30] sm:$0xff] %vm1024, %v989
      %1032 = vst.msk [vmem:[#allocation3 + $0x38] sm:$0xff] %vm1024, %v991
      %1033 = vst.msk [vmem:[#allocation3 + $0x40] sm:$0xff] %vm1024, %v993
      %1034 = vst.msk [vmem:[#allocation3 + $0x48] sm:$0xff] %vm1024, %v995
      %1035 = vst.msk [vmem:[#allocation3 + $0x50] sm:$0xff] %vm1024, %v997
      %1036 = vst.msk [vmem:[#allocation3 + $0x58] sm:$0xff] %vm1024, %v999
      %1037 = vst.msk [vmem:[#allocation3 + $0x60] sm:$0xff] %vm1024, %v1001
      %1038 = vst.msk [vmem:[#allocation3 + $0x68] sm:$0xff] %vm1024, %v1003
      %1039 = vst.msk [vmem:[#allocation3 + $0x70] sm:$0xff] %vm1024, %v1005
      %1040 = vst.msk [vmem:[#allocation3 + $0x78] sm:$0xff] %vm1024, %v1007
      %v1041 = vld [vmem:[%s686] sm:$0xff]
      %v1042 = vld [vmem:[%s686 + $0x8] sm:$0xff]
      %v1043 = vld [vmem:[%s686 + $0x18] sm:$0xff]
      %v1044 = vld [vmem:[%s686 + $0x20] sm:$0xff]
      %v1045 = vld [vmem:[%s686 + $0x30] sm:$0xff]
      %v1046 = vld [vmem:[%s686 + $0x38] sm:$0xff]
      %v1047 = vld [vmem:[%s686 + $0x48] sm:$0xff]
      %v1048 = vld [vmem:[%s686 + $0x50] sm:$0xff]
      %v1049 = vld [vmem:[%s686 + $0x60] sm:$0xff]
      %v1050 = vld [vmem:[%s686 + $0x68] sm:$0xff]
      %v1051 = vld [vmem:[%s686 + $0x78] sm:$0xff]
      %v1052 = vld [vmem:[%s686 + $0x80] sm:$0xff]
      %v1053 = vld [vmem:[%s686 + $0x90] sm:$0xff]
      %v1054 = vld [vmem:[%s686 + $0x98] sm:$0xff]
      %v1055 = vld [vmem:[%s686 + $0xa8] sm:$0xff]
      %v1056 = vld [vmem:[%s686 + $0xb0] sm:$0xff]
      %v1057 = vld [vmem:[%s686 + $0xc0] sm:$0xff]
      %v1058 = vld [vmem:[%s686 + $0xc8] sm:$0xff]
      %v1059 = vld [vmem:[%s686 + $0xd8] sm:$0xff]
      %v1060 = vld [vmem:[%s686 + $0xe0] sm:$0xff]
      %v1061 = vld [vmem:[%s686 + $0xf0] sm:$0xff]
      %v1062 = vld [vmem:[%s686 + $0xf8] sm:$0xff]
      %v1063 = vld [vmem:[%s686 + $0x108] sm:$0xff]
      %v1064 = vld [vmem:[%s686 + $0x110] sm:$0xff]
      %v1065 = vld [vmem:[%s686 + $0x120] sm:$0xff]
      %v1066 = vld [vmem:[%s686 + $0x128] sm:$0xff]
      %v1067 = vld [vmem:[%s686 + $0x138] sm:$0xff]
      %v1068 = vld [vmem:[%s686 + $0x140] sm:$0xff]
      %v1069 = vld [vmem:[%s686 + $0x150] sm:$0xff]
      %v1070 = vld [vmem:[%s686 + $0x158] sm:$0xff]
      %v1071 = vld [vmem:[%s686 + $0x168] sm:$0xff]
      %v1072 = vld [vmem:[%s686 + $0x170] sm:$0xff]
      %v1073 = vpack.c.bf16 %v1042, %v1041
      %v1074 = vpack.c.bf16 %v1044, %v1043
      %v1075 = vpack.c.bf16 %v1046, %v1045
      %v1076 = vpack.c.bf16 %v1048, %v1047
      %v1077 = vpack.c.bf16 %v1050, %v1049
      %v1078 = vpack.c.bf16 %v1052, %v1051
      %v1079 = vpack.c.bf16 %v1054, %v1053
      %v1080 = vpack.c.bf16 %v1056, %v1055
      %v1081 = vpack.c.bf16 %v1058, %v1057
      %v1082 = vpack.c.bf16 %v1060, %v1059
      %v1083 = vpack.c.bf16 %v1062, %v1061
      %v1084 = vpack.c.bf16 %v1064, %v1063
      %v1085 = vpack.c.bf16 %v1066, %v1065
      %v1086 = vpack.c.bf16 %v1068, %v1067
      %v1087 = vpack.c.bf16 %v1070, %v1069
      %v1088 = vpack.c.bf16 %v1072, %v1071
      %1105 = vrot.lane.b32.xlu0 %v1073, 12
      %v1106 = vpop.permute.xlu0 %1105
      %1107 = vrot.lane.b32.xlu0 %v1074, 12
      %v1108 = vpop.permute.xlu0 %1107
      %1109 = vrot.lane.b32.xlu0 %v1075, 12
      %v1110 = vpop.permute.xlu0 %1109
      %1111 = vrot.lane.b32.xlu0 %v1076, 12
      %v1112 = vpop.permute.xlu0 %1111
      %1113 = vrot.lane.b32.xlu0 %v1077, 12
      %v1114 = vpop.permute.xlu0 %1113
      %1115 = vrot.lane.b32.xlu0 %v1078, 12
      %v1116 = vpop.permute.xlu0 %1115
      %1117 = vrot.lane.b32.xlu0 %v1079, 12
      %v1118 = vpop.permute.xlu0 %1117
      %1119 = vrot.lane.b32.xlu0 %v1080, 12
      %v1120 = vpop.permute.xlu0 %1119
      %1121 = vrot.lane.b32.xlu0 %v1081, 12
      %v1122 = vpop.permute.xlu0 %1121
      %1123 = vrot.lane.b32.xlu0 %v1082, 12
      %v1124 = vpop.permute.xlu0 %1123
      %1125 = vrot.lane.b32.xlu0 %v1083, 12
      %v1126 = vpop.permute.xlu0 %1125
      %1127 = vrot.lane.b32.xlu0 %v1084, 12
      %v1128 = vpop.permute.xlu0 %1127
      %1129 = vrot.lane.b32.xlu0 %v1085, 12
      %v1130 = vpop.permute.xlu0 %1129
      %1131 = vrot.lane.b32.xlu0 %v1086, 12
      %v1132 = vpop.permute.xlu0 %1131
      %1133 = vrot.lane.b32.xlu0 %v1087, 12
      %v1134 = vpop.permute.xlu0 %1133
      %1135 = vrot.lane.b32.xlu0 %v1088, 12
      %v1136 = vpop.permute.xlu0 %1135
      %vm1153 = vcmask 130144
      %1154 = vst.msk [vmem:[#allocation3] sm:$0xff] %vm1153, %v1106
      %1155 = vst.msk [vmem:[#allocation3 + $0x8] sm:$0xff] %vm1153, %v1108
      %1156 = vst.msk [vmem:[#allocation3 + $0x10] sm:$0xff] %vm1153, %v1110
      %1157 = vst.msk [vmem:[#allocation3 + $0x18] sm:$0xff] %vm1153, %v1112
      %1158 = vst.msk [vmem:[#allocation3 + $0x20] sm:$0xff] %vm1153, %v1114
      %1159 = vst.msk [vmem:[#allocation3 + $0x28] sm:$0xff] %vm1153, %v1116
      %1160 = vst.msk [vmem:[#allocation3 + $0x30] sm:$0xff] %vm1153, %v1118
      %1161 = vst.msk [vmem:[#allocation3 + $0x38] sm:$0xff] %vm1153, %v1120
      %1162 = vst.msk [vmem:[#allocation3 + $0x40] sm:$0xff] %vm1153, %v1122
      %1163 = vst.msk [vmem:[#allocation3 + $0x48] sm:$0xff] %vm1153, %v1124
      %1164 = vst.msk [vmem:[#allocation3 + $0x50] sm:$0xff] %vm1153, %v1126
      %1165 = vst.msk [vmem:[#allocation3 + $0x58] sm:$0xff] %vm1153, %v1128
      %1166 = vst.msk [vmem:[#allocation3 + $0x60] sm:$0xff] %vm1153, %v1130
      %1167 = vst.msk [vmem:[#allocation3 + $0x68] sm:$0xff] %vm1153, %v1132
      %1168 = vst.msk [vmem:[#allocation3 + $0x70] sm:$0xff] %vm1153, %v1134
      %1169 = vst.msk [vmem:[#allocation3 + $0x78] sm:$0xff] %vm1153, %v1136
      %v1170 = vld [vmem:[%s686 + $0x1] sm:$0xff]
      %v1171 = vld [vmem:[%s686 + $0x9] sm:$0xff]
      %v1172 = vld [vmem:[%s686 + $0x19] sm:$0xff]
      %v1173 = vld [vmem:[%s686 + $0x21] sm:$0xff]
      %v1174 = vld [vmem:[%s686 + $0x31] sm:$0xff]
      %v1175 = vld [vmem:[%s686 + $0x39] sm:$0xff]
      %v1176 = vld [vmem:[%s686 + $0x49] sm:$0xff]
      %v1177 = vld [vmem:[%s686 + $0x51] sm:$0xff]
      %v1178 = vld [vmem:[%s686 + $0x61] sm:$0xff]
      %v1179 = vld [vmem:[%s686 + $0x69] sm:$0xff]
      %v1180 = vld [vmem:[%s686 + $0x79] sm:$0xff]
      %v1181 = vld [vmem:[%s686 + $0x81] sm:$0xff]
      %v1182 = vld [vmem:[%s686 + $0x91] sm:$0xff]
      %v1183 = vld [vmem:[%s686 + $0x99] sm:$0xff]
      %v1184 = vld [vmem:[%s686 + $0xa9] sm:$0xff]
      %v1185 = vld [vmem:[%s686 + $0xb1] sm:$0xff]
      %v1186 = vld [vmem:[%s686 + $0xc1] sm:$0xff]
      %v1187 = vld [vmem:[%s686 + $0xc9] sm:$0xff]
      %v1188 = vld [vmem:[%s686 + $0xd9] sm:$0xff]
      %v1189 = vld [vmem:[%s686 + $0xe1] sm:$0xff]
      %v1190 = vld [vmem:[%s686 + $0xf1] sm:$0xff]
      %v1191 = vld [vmem:[%s686 + $0xf9] sm:$0xff]
      %v1192 = vld [vmem:[%s686 + $0x109] sm:$0xff]
      %v1193 = vld [vmem:[%s686 + $0x111] sm:$0xff]
      %v1194 = vld [vmem:[%s686 + $0x121] sm:$0xff]
      %v1195 = vld [vmem:[%s686 + $0x129] sm:$0xff]
      %v1196 = vld [vmem:[%s686 + $0x139] sm:$0xff]
      %v1197 = vld [vmem:[%s686 + $0x141] sm:$0xff]
      %v1198 = vld [vmem:[%s686 + $0x151] sm:$0xff]
      %v1199 = vld [vmem:[%s686 + $0x159] sm:$0xff]
      %v1200 = vld [vmem:[%s686 + $0x169] sm:$0xff]
      %v1201 = vld [vmem:[%s686 + $0x171] sm:$0xff]
      %v1202 = vpack.c.bf16 %v1171, %v1170
      %v1203 = vpack.c.bf16 %v1173, %v1172
      %v1204 = vpack.c.bf16 %v1175, %v1174
      %v1205 = vpack.c.bf16 %v1177, %v1176
      %v1206 = vpack.c.bf16 %v1179, %v1178
      %v1207 = vpack.c.bf16 %v1181, %v1180
      %v1208 = vpack.c.bf16 %v1183, %v1182
      %v1209 = vpack.c.bf16 %v1185, %v1184
      %v1210 = vpack.c.bf16 %v1187, %v1186
      %v1211 = vpack.c.bf16 %v1189, %v1188
      %v1212 = vpack.c.bf16 %v1191, %v1190
      %v1213 = vpack.c.bf16 %v1193, %v1192
      %v1214 = vpack.c.bf16 %v1195, %v1194
      %v1215 = vpack.c.bf16 %v1197, %v1196
      %v1216 = vpack.c.bf16 %v1199, %v1198
      %v1217 = vpack.c.bf16 %v1201, %v1200
      %1234 = vrot.lane.b32.xlu0 %v1202, 16
      %v1235 = vpop.permute.xlu0 %1234
      %1236 = vrot.lane.b32.xlu0 %v1203, 16
      %v1237 = vpop.permute.xlu0 %1236
      %1238 = vrot.lane.b32.xlu0 %v1204, 16
      %v1239 = vpop.permute.xlu0 %1238
      %1240 = vrot.lane.b32.xlu0 %v1205, 16
      %v1241 = vpop.permute.xlu0 %1240
      %1242 = vrot.lane.b32.xlu0 %v1206, 16
      %v1243 = vpop.permute.xlu0 %1242
      %1244 = vrot.lane.b32.xlu0 %v1207, 16
      %v1245 = vpop.permute.xlu0 %1244
      %1246 = vrot.lane.b32.xlu0 %v1208, 16
      %v1247 = vpop.permute.xlu0 %1246
      %1248 = vrot.lane.b32.xlu0 %v1209, 16
      %v1249 = vpop.permute.xlu0 %1248
      %1250 = vrot.lane.b32.xlu0 %v1210, 16
      %v1251 = vpop.permute.xlu0 %1250
      %1252 = vrot.lane.b32.xlu0 %v1211, 16
      %v1253 = vpop.permute.xlu0 %1252
      %1254 = vrot.lane.b32.xlu0 %v1212, 16
      %v1255 = vpop.permute.xlu0 %1254
      %1256 = vrot.lane.b32.xlu0 %v1213, 16
      %v1257 = vpop.permute.xlu0 %1256
      %1258 = vrot.lane.b32.xlu0 %v1214, 16
      %v1259 = vpop.permute.xlu0 %1258
      %1260 = vrot.lane.b32.xlu0 %v1215, 16
      %v1261 = vpop.permute.xlu0 %1260
      %1262 = vrot.lane.b32.xlu0 %v1216, 16
      %v1263 = vpop.permute.xlu0 %1262
      %1264 = vrot.lane.b32.xlu0 %v1217, 16
      %v1265 = vpop.permute.xlu0 %1264
      %vm1282 = vcmask 162944
      %1283 = vst.msk [vmem:[#allocation3] sm:$0xff] %vm1282, %v1235
      %1284 = vst.msk [vmem:[#allocation3 + $0x8] sm:$0xff] %vm1282, %v1237
      %1285 = vst.msk [vmem:[#allocation3 + $0x10] sm:$0xff] %vm1282, %v1239
      %1286 = vst.msk [vmem:[#allocation3 + $0x18] sm:$0xff] %vm1282, %v1241
      %1287 = vst.msk [vmem:[#allocation3 + $0x20] sm:$0xff] %vm1282, %v1243
      %1288 = vst.msk [vmem:[#allocation3 + $0x28] sm:$0xff] %vm1282, %v1245
      %1289 = vst.msk [vmem:[#allocation3 + $0x30] sm:$0xff] %vm1282, %v1247
      %1290 = vst.msk [vmem:[#allocation3 + $0x38] sm:$0xff] %vm1282, %v1249
      %1291 = vst.msk [vmem:[#allocation3 + $0x40] sm:$0xff] %vm1282, %v1251
      %1292 = vst.msk [vmem:[#allocation3 + $0x48] sm:$0xff] %vm1282, %v1253
      %1293 = vst.msk [vmem:[#allocation3 + $0x50] sm:$0xff] %vm1282, %v1255
      %1294 = vst.msk [vmem:[#allocation3 + $0x58] sm:$0xff] %vm1282, %v1257
      %1295 = vst.msk [vmem:[#allocation3 + $0x60] sm:$0xff] %vm1282, %v1259
      %1296 = vst.msk [vmem:[#allocation3 + $0x68] sm:$0xff] %vm1282, %v1261
      %1297 = vst.msk [vmem:[#allocation3 + $0x70] sm:$0xff] %vm1282, %v1263
      %1298 = vst.msk [vmem:[#allocation3 + $0x78] sm:$0xff] %vm1282, %v1265
      %v1299 = vld [vmem:[%s686 + $0x2] sm:$0xff]
      %v1300 = vld [vmem:[%s686 + $0xa] sm:$0xff]
      %v1301 = vld [vmem:[%s686 + $0x1a] sm:$0xff]
      %v1302 = vld [vmem:[%s686 + $0x22] sm:$0xff]
      %v1303 = vld [vmem:[%s686 + $0x32] sm:$0xff]
      %v1304 = vld [vmem:[%s686 + $0x3a] sm:$0xff]
      %v1305 = vld [vmem:[%s686 + $0x4a] sm:$0xff]
      %v1306 = vld [vmem:[%s686 + $0x52] sm:$0xff]
      %v1307 = vld [vmem:[%s686 + $0x62] sm:$0xff]
      %v1308 = vld [vmem:[%s686 + $0x6a] sm:$0xff]
      %v1309 = vld [vmem:[%s686 + $0x7a] sm:$0xff]
      %v1310 = vld [vmem:[%s686 + $0x82] sm:$0xff]
      %v1311 = vld [vmem:[%s686 + $0x92] sm:$0xff]
      %v1312 = vld [vmem:[%s686 + $0x9a] sm:$0xff]
      %v1313 = vld [vmem:[%s686 + $0xaa] sm:$0xff]
      %v1314 = vld [vmem:[%s686 + $0xb2] sm:$0xff]
      %v1315 = vld [vmem:[%s686 + $0xc2] sm:$0xff]
      %v1316 = vld [vmem:[%s686 + $0xca] sm:$0xff]
      %v1317 = vld [vmem:[%s686 + $0xda] sm:$0xff]
      %v1318 = vld [vmem:[%s686 + $0xe2] sm:$0xff]
      %v1319 = vld [vmem:[%s686 + $0xf2] sm:$0xff]
      %v1320 = vld [vmem:[%s686 + $0xfa] sm:$0xff]
      %v1321 = vld [vmem:[%s686 + $0x10a] sm:$0xff]
      %v1322 = vld [vmem:[%s686 + $0x112] sm:$0xff]
      %v1323 = vld [vmem:[%s686 + $0x122] sm:$0xff]
      %v1324 = vld [vmem:[%s686 + $0x12a] sm:$0xff]
      %v1325 = vld [vmem:[%s686 + $0x13a] sm:$0xff]
      %v1326 = vld [vmem:[%s686 + $0x142] sm:$0xff]
      %v1327 = vld [vmem:[%s686 + $0x152] sm:$0xff]
      %v1328 = vld [vmem:[%s686 + $0x15a] sm:$0xff]
      %v1329 = vld [vmem:[%s686 + $0x16a] sm:$0xff]
      %v1330 = vld [vmem:[%s686 + $0x172] sm:$0xff]
      %v1331 = vpack.c.bf16 %v1300, %v1299
      %v1332 = vpack.c.bf16 %v1302, %v1301
      %v1333 = vpack.c.bf16 %v1304, %v1303
      %v1334 = vpack.c.bf16 %v1306, %v1305
      %v1335 = vpack.c.bf16 %v1308, %v1307
      %v1336 = vpack.c.bf16 %v1310, %v1309
      %v1337 = vpack.c.bf16 %v1312, %v1311
      %v1338 = vpack.c.bf16 %v1314, %v1313
      %v1339 = vpack.c.bf16 %v1316, %v1315
      %v1340 = vpack.c.bf16 %v1318, %v1317
      %v1341 = vpack.c.bf16 %v1320, %v1319
      %v1342 = vpack.c.bf16 %v1322, %v1321
      %v1343 = vpack.c.bf16 %v1324, %v1323
      %v1344 = vpack.c.bf16 %v1326, %v1325
      %v1345 = vpack.c.bf16 %v1328, %v1327
      %v1346 = vpack.c.bf16 %v1330, %v1329
      %1363 = vrot.lane.b32.xlu0 %v1331, 20
      %v1364 = vpop.permute.xlu0 %1363
      %1365 = vrot.lane.b32.xlu0 %v1332, 20
      %v1366 = vpop.permute.xlu0 %1365
      %1367 = vrot.lane.b32.xlu0 %v1333, 20
      %v1368 = vpop.permute.xlu0 %1367
      %1369 = vrot.lane.b32.xlu0 %v1334, 20
      %v1370 = vpop.permute.xlu0 %1369
      %1371 = vrot.lane.b32.xlu0 %v1335, 20
      %v1372 = vpop.permute.xlu0 %1371
      %1373 = vrot.lane.b32.xlu0 %v1336, 20
      %v1374 = vpop.permute.xlu0 %1373
      %1375 = vrot.lane.b32.xlu0 %v1337, 20
      %v1376 = vpop.permute.xlu0 %1375
      %1377 = vrot.lane.b32.xlu0 %v1338, 20
      %v1378 = vpop.permute.xlu0 %1377
      %1379 = vrot.lane.b32.xlu0 %v1339, 20
      %v1380 = vpop.permute.xlu0 %1379
      %1381 = vrot.lane.b32.xlu0 %v1340, 20
      %v1382 = vpop.permute.xlu0 %1381
      %1383 = vrot.lane.b32.xlu0 %v1341, 20
      %v1384 = vpop.permute.xlu0 %1383
      %1385 = vrot.lane.b32.xlu0 %v1342, 20
      %v1386 = vpop.permute.xlu0 %1385
      %1387 = vrot.lane.b32.xlu0 %v1343, 20
      %v1388 = vpop.permute.xlu0 %1387
      %1389 = vrot.lane.b32.xlu0 %v1344, 20
      %v1390 = vpop.permute.xlu0 %1389
      %1391 = vrot.lane.b32.xlu0 %v1345, 20
      %v1392 = vpop.permute.xlu0 %1391
      %1393 = vrot.lane.b32.xlu0 %v1346, 20
      %v1394 = vpop.permute.xlu0 %1393
      %vm1411 = vcmask 195744
      %1412 = vst.msk [vmem:[#allocation3] sm:$0xff] %vm1411, %v1364
      %1413 = vst.msk [vmem:[#allocation3 + $0x8] sm:$0xff] %vm1411, %v1366
      %1414 = vst.msk [vmem:[#allocation3 + $0x10] sm:$0xff] %vm1411, %v1368
      %1415 = vst.msk [vmem:[#allocation3 + $0x18] sm:$0xff] %vm1411, %v1370
      %1416 = vst.msk [vmem:[#allocation3 + $0x20] sm:$0xff] %vm1411, %v1372
      %1417 = vst.msk [vmem:[#allocation3 + $0x28] sm:$0xff] %vm1411, %v1374
      %1418 = vst.msk [vmem:[#allocation3 + $0x30] sm:$0xff] %vm1411, %v1376
      %1419 = vst.msk [vmem:[#allocation3 + $0x38] sm:$0xff] %vm1411, %v1378
      %1420 = vst.msk [vmem:[#allocation3 + $0x40] sm:$0xff] %vm1411, %v1380
      %1421 = vst.msk [vmem:[#allocation3 + $0x48] sm:$0xff] %vm1411, %v1382
      %1422 = vst.msk [vmem:[#allocation3 + $0x50] sm:$0xff] %vm1411, %v1384
      %1423 = vst.msk [vmem:[#allocation3 + $0x58] sm:$0xff] %vm1411, %v1386
      %1424 = vst.msk [vmem:[#allocation3 + $0x60] sm:$0xff] %vm1411, %v1388
      %1425 = vst.msk [vmem:[#allocation3 + $0x68] sm:$0xff] %vm1411, %v1390
      %1426 = vst.msk [vmem:[#allocation3 + $0x70] sm:$0xff] %vm1411, %v1392
      %1427 = vst.msk [vmem:[#allocation3 + $0x78] sm:$0xff] %vm1411, %v1394
      %s1428 = scalar_lea.vmem [#allocation2], 48
      %v1429 = vld [vmem:[%s1428] sm:$0xff]
      %v1430 = vld [vmem:[%s1428 + $0x8] sm:$0xff]
      %v1431 = vld [vmem:[%s1428 + $0x18] sm:$0xff]
      %v1432 = vld [vmem:[%s1428 + $0x20] sm:$0xff]
      %v1433 = vld [vmem:[%s1428 + $0x30] sm:$0xff]
      %v1434 = vld [vmem:[%s1428 + $0x38] sm:$0xff]
      %v1435 = vld [vmem:[%s1428 + $0x48] sm:$0xff]
      %v1436 = vld [vmem:[%s1428 + $0x50] sm:$0xff]
      %v1437 = vld [vmem:[%s1428 + $0x60] sm:$0xff]
      %v1438 = vld [vmem:[%s1428 + $0x68] sm:$0xff]
      %v1439 = vld [vmem:[%s1428 + $0x78] sm:$0xff]
      %v1440 = vld [vmem:[%s1428 + $0x80] sm:$0xff]
      %v1441 = vld [vmem:[%s1428 + $0x90] sm:$0xff]
      %v1442 = vld [vmem:[%s1428 + $0x98] sm:$0xff]
      %v1443 = vld [vmem:[%s1428 + $0xa8] sm:$0xff]
      %v1444 = vld [vmem:[%s1428 + $0xb0] sm:$0xff]
      %v1445 = vld [vmem:[%s1428 + $0xc0] sm:$0xff]
      %v1446 = vld [vmem:[%s1428 + $0xc8] sm:$0xff]
      %v1447 = vld [vmem:[%s1428 + $0xd8] sm:$0xff]
      %v1448 = vld [vmem:[%s1428 + $0xe0] sm:$0xff]
      %v1449 = vld [vmem:[%s1428 + $0xf0] sm:$0xff]
      %v1450 = vld [vmem:[%s1428 + $0xf8] sm:$0xff]
      %v1451 = vld [vmem:[%s1428 + $0x108] sm:$0xff]
      %v1452 = vld [vmem:[%s1428 + $0x110] sm:$0xff]
      %v1453 = vld [vmem:[%s1428 + $0x120] sm:$0xff]
      %v1454 = vld [vmem:[%s1428 + $0x128] sm:$0xff]
      %v1455 = vld [vmem:[%s1428 + $0x138] sm:$0xff]
      %v1456 = vld [vmem:[%s1428 + $0x140] sm:$0xff]
      %v1457 = vld [vmem:[%s1428 + $0x150] sm:$0xff]
      %v1458 = vld [vmem:[%s1428 + $0x158] sm:$0xff]
      %v1459 = vld [vmem:[%s1428 + $0x168] sm:$0xff]
      %v1460 = vld [vmem:[%s1428 + $0x170] sm:$0xff]
      %v1461 = vpack.c.bf16 %v1430, %v1429
      %v1462 = vpack.c.bf16 %v1432, %v1431
      %v1463 = vpack.c.bf16 %v1434, %v1433
      %v1464 = vpack.c.bf16 %v1436, %v1435
      %v1465 = vpack.c.bf16 %v1438, %v1437
      %v1466 = vpack.c.bf16 %v1440, %v1439
      %v1467 = vpack.c.bf16 %v1442, %v1441
      %v1468 = vpack.c.bf16 %v1444, %v1443
      %v1469 = vpack.c.bf16 %v1446, %v1445
      %v1470 = vpack.c.bf16 %v1448, %v1447
      %v1471 = vpack.c.bf16 %v1450, %v1449
      %v1472 = vpack.c.bf16 %v1452, %v1451
      %v1473 = vpack.c.bf16 %v1454, %v1453
      %v1474 = vpack.c.bf16 %v1456, %v1455
      %v1475 = vpack.c.bf16 %v1458, %v1457
      %v1476 = vpack.c.bf16 %v1460, %v1459
      %1493 = vrot.lane.b32.xlu0 %v1461, 24
      %v1494 = vpop.permute.xlu0 %1493
      %1495 = vrot.lane.b32.xlu0 %v1462, 24
      %v1496 = vpop.permute.xlu0 %1495
      %1497 = vrot.lane.b32.xlu0 %v1463, 24
      %v1498 = vpop.permute.xlu0 %1497
      %1499 = vrot.lane.b32.xlu0 %v1464, 24
      %v1500 = vpop.permute.xlu0 %1499
      %1501 = vrot.lane.b32.xlu0 %v1465, 24
      %v1502 = vpop.permute.xlu0 %1501
      %1503 = vrot.lane.b32.xlu0 %v1466, 24
      %v1504 = vpop.permute.xlu0 %1503
      %1505 = vrot.lane.b32.xlu0 %v1467, 24
      %v1506 = vpop.permute.xlu0 %1505
      %1507 = vrot.lane.b32.xlu0 %v1468, 24
      %v1508 = vpop.permute.xlu0 %1507
      %1509 = vrot.lane.b32.xlu0 %v1469, 24
      %v1510 = vpop.permute.xlu0 %1509
      %1511 = vrot.lane.b32.xlu0 %v1470, 24
      %v1512 = vpop.permute.xlu0 %1511
      %1513 = vrot.lane.b32.xlu0 %v1471, 24
      %v1514 = vpop.permute.xlu0 %1513
      %1515 = vrot.lane.b32.xlu0 %v1472, 24
      %v1516 = vpop.permute.xlu0 %1515
      %1517 = vrot.lane.b32.xlu0 %v1473, 24
      %v1518 = vpop.permute.xlu0 %1517
      %1519 = vrot.lane.b32.xlu0 %v1474, 24
      %v1520 = vpop.permute.xlu0 %1519
      %1521 = vrot.lane.b32.xlu0 %v1475, 24
      %v1522 = vpop.permute.xlu0 %1521
      %1523 = vrot.lane.b32.xlu0 %v1476, 24
      %v1524 = vpop.permute.xlu0 %1523
      %vm1541 = vcmask 228544
      %1542 = vst.msk [vmem:[#allocation3] sm:$0xff] %vm1541, %v1494
      %1543 = vst.msk [vmem:[#allocation3 + $0x8] sm:$0xff] %vm1541, %v1496
      %1544 = vst.msk [vmem:[#allocation3 + $0x10] sm:$0xff] %vm1541, %v1498
      %1545 = vst.msk [vmem:[#allocation3 + $0x18] sm:$0xff] %vm1541, %v1500
      %1546 = vst.msk [vmem:[#allocation3 + $0x20] sm:$0xff] %vm1541, %v1502
      %1547 = vst.msk [vmem:[#allocation3 + $0x28] sm:$0xff] %vm1541, %v1504
      %1548 = vst.msk [vmem:[#allocation3 + $0x30] sm:$0xff] %vm1541, %v1506
      %1549 = vst.msk [vmem:[#allocation3 + $0x38] sm:$0xff] %vm1541, %v1508
      %1550 = vst.msk [vmem:[#allocation3 + $0x40] sm:$0xff] %vm1541, %v1510
      %1551 = vst.msk [vmem:[#allocation3 + $0x48] sm:$0xff] %vm1541, %v1512
      %1552 = vst.msk [vmem:[#allocation3 + $0x50] sm:$0xff] %vm1541, %v1514
      %1553 = vst.msk [vmem:[#allocation3 + $0x58] sm:$0xff] %vm1541, %v1516
      %1554 = vst.msk [vmem:[#allocation3 + $0x60] sm:$0xff] %vm1541, %v1518
      %1555 = vst.msk [vmem:[#allocation3 + $0x68] sm:$0xff] %vm1541, %v1520
      %1556 = vst.msk [vmem:[#allocation3 + $0x70] sm:$0xff] %vm1541, %v1522
      %1557 = vst.msk [vmem:[#allocation3 + $0x78] sm:$0xff] %vm1541, %v1524
      %v1558 = vld [vmem:[%s1428 + $0x1] sm:$0xff]
      %v1559 = vld [vmem:[%s1428 + $0x9] sm:$0xff]
      %v1560 = vld [vmem:[%s1428 + $0x19] sm:$0xff]
      %v1561 = vld [vmem:[%s1428 + $0x21] sm:$0xff]
      %v1562 = vld [vmem:[%s1428 + $0x31] sm:$0xff]
      %v1563 = vld [vmem:[%s1428 + $0x39] sm:$0xff]
      %v1564 = vld [vmem:[%s1428 + $0x49] sm:$0xff]
      %v1565 = vld [vmem:[%s1428 + $0x51] sm:$0xff]
      %v1566 = vld [vmem:[%s1428 + $0x61] sm:$0xff]
      %v1567 = vld [vmem:[%s1428 + $0x69] sm:$0xff]
      %v1568 = vld [vmem:[%s1428 + $0x79] sm:$0xff]
      %v1569 = vld [vmem:[%s1428 + $0x81] sm:$0xff]
      %v1570 = vld [vmem:[%s1428 + $0x91] sm:$0xff]
      %v1571 = vld [vmem:[%s1428 + $0x99] sm:$0xff]
      %v1572 = vld [vmem:[%s1428 + $0xa9] sm:$0xff]
      %v1573 = vld [vmem:[%s1428 + $0xb1] sm:$0xff]
      %v1574 = vld [vmem:[%s1428 + $0xc1] sm:$0xff]
      %v1575 = vld [vmem:[%s1428 + $0xc9] sm:$0xff]
      %v1576 = vld [vmem:[%s1428 + $0xd9] sm:$0xff]
      %v1577 = vld [vmem:[%s1428 + $0xe1] sm:$0xff]
      %v1578 = vld [vmem:[%s1428 + $0xf1] sm:$0xff]
      %v1579 = vld [vmem:[%s1428 + $0xf9] sm:$0xff]
      %v1580 = vld [vmem:[%s1428 + $0x109] sm:$0xff]
      %v1581 = vld [vmem:[%s1428 + $0x111] sm:$0xff]
      %v1582 = vld [vmem:[%s1428 + $0x121] sm:$0xff]
      %v1583 = vld [vmem:[%s1428 + $0x129] sm:$0xff]
      %v1584 = vld [vmem:[%s1428 + $0x139] sm:$0xff]
      %v1585 = vld [vmem:[%s1428 + $0x141] sm:$0xff]
      %v1586 = vld [vmem:[%s1428 + $0x151] sm:$0xff]
      %v1587 = vld [vmem:[%s1428 + $0x159] sm:$0xff]
      %v1588 = vld [vmem:[%s1428 + $0x169] sm:$0xff]
      %v1589 = vld [vmem:[%s1428 + $0x171] sm:$0xff]
      %v1590 = vpack.c.bf16 %v1559, %v1558
      %v1591 = vpack.c.bf16 %v1561, %v1560
      %v1592 = vpack.c.bf16 %v1563, %v1562
      %v1593 = vpack.c.bf16 %v1565, %v1564
      %v1594 = vpack.c.bf16 %v1567, %v1566
      %v1595 = vpack.c.bf16 %v1569, %v1568
      %v1596 = vpack.c.bf16 %v1571, %v1570
      %v1597 = vpack.c.bf16 %v1573, %v1572
      %v1598 = vpack.c.bf16 %v1575, %v1574
      %v1599 = vpack.c.bf16 %v1577, %v1576
      %v1600 = vpack.c.bf16 %v1579, %v1578
      %v1601 = vpack.c.bf16 %v1581, %v1580
      %v1602 = vpack.c.bf16 %v1583, %v1582
      %v1603 = vpack.c.bf16 %v1585, %v1584
      %v1604 = vpack.c.bf16 %v1587, %v1586
      %v1605 = vpack.c.bf16 %v1589, %v1588
      %1622 = vrot.lane.b32.xlu0 %v1590, 28
      %v1623 = vpop.permute.xlu0 %1622
      %1624 = vrot.lane.b32.xlu0 %v1591, 28
      %v1625 = vpop.permute.xlu0 %1624
      %1626 = vrot.lane.b32.xlu0 %v1592, 28
      %v1627 = vpop.permute.xlu0 %1626
      %1628 = vrot.lane.b32.xlu0 %v1593, 28
      %v1629 = vpop.permute.xlu0 %1628
      %1630 = vrot.lane.b32.xlu0 %v1594, 28
      %v1631 = vpop.permute.xlu0 %1630
      %1632 = vrot.lane.b32.xlu0 %v1595, 28
      %v1633 = vpop.permute.xlu0 %1632
      %1634 = vrot.lane.b32.xlu0 %v1596, 28
      %v1635 = vpop.permute.xlu0 %1634
      %1636 = vrot.lane.b32.xlu0 %v1597, 28
      %v1637 = vpop.permute.xlu0 %1636
      %1638 = vrot.lane.b32.xlu0 %v1598, 28
      %v1639 = vpop.permute.xlu0 %1638
      %1640 = vrot.lane.b32.xlu0 %v1599, 28
      %v1641 = vpop.permute.xlu0 %1640
      %1642 = vrot.lane.b32.xlu0 %v1600, 28
      %v1643 = vpop.permute.xlu0 %1642
      %1644 = vrot.lane.b32.xlu0 %v1601, 28
      %v1645 = vpop.permute.xlu0 %1644
      %1646 = vrot.lane.b32.xlu0 %v1602, 28
      %v1647 = vpop.permute.xlu0 %1646
      %1648 = vrot.lane.b32.xlu0 %v1603, 28
      %v1649 = vpop.permute.xlu0 %1648
      %1650 = vrot.lane.b32.xlu0 %v1604, 28
      %v1651 = vpop.permute.xlu0 %1650
      %1652 = vrot.lane.b32.xlu0 %v1605, 28
      %v1653 = vpop.permute.xlu0 %1652
      %vm1670 = vcmask 261344
      %1671 = vst.msk [vmem:[#allocation3] sm:$0xff] %vm1670, %v1623
      %1672 = vst.msk [vmem:[#allocation3 + $0x8] sm:$0xff] %vm1670, %v1625
      %1673 = vst.msk [vmem:[#allocation3 + $0x10] sm:$0xff] %vm1670, %v1627
      %1674 = vst.msk [vmem:[#allocation3 + $0x18] sm:$0xff] %vm1670, %v1629
      %1675 = vst.msk [vmem:[#allocation3 + $0x20] sm:$0xff] %vm1670, %v1631
      %1676 = vst.msk [vmem:[#allocation3 + $0x28] sm:$0xff] %vm1670, %v1633
      %1677 = vst.msk [vmem:[#allocation3 + $0x30] sm:$0xff] %vm1670, %v1635
      %1678 = vst.msk [vmem:[#allocation3 + $0x38] sm:$0xff] %vm1670, %v1637
      %1679 = vst.msk [vmem:[#allocation3 + $0x40] sm:$0xff] %vm1670, %v1639
      %1680 = vst.msk [vmem:[#allocation3 + $0x48] sm:$0xff] %vm1670, %v1641
      %1681 = vst.msk [vmem:[#allocation3 + $0x50] sm:$0xff] %vm1670, %v1643
      %1682 = vst.msk [vmem:[#allocation3 + $0x58] sm:$0xff] %vm1670, %v1645
      %1683 = vst.msk [vmem:[#allocation3 + $0x60] sm:$0xff] %vm1670, %v1647
      %1684 = vst.msk [vmem:[#allocation3 + $0x68] sm:$0xff] %vm1670, %v1649
      %1685 = vst.msk [vmem:[#allocation3 + $0x70] sm:$0xff] %vm1670, %v1651
      %1686 = vst.msk [vmem:[#allocation3 + $0x78] sm:$0xff] %vm1670, %v1653
      %v1687 = vld [vmem:[%s1428 + $0x2] sm:$0xff]
      %v1688 = vld [vmem:[%s1428 + $0xa] sm:$0xff]
      %v1689 = vld [vmem:[%s1428 + $0x1a] sm:$0xff]
      %v1690 = vld [vmem:[%s1428 + $0x22] sm:$0xff]
      %v1691 = vld [vmem:[%s1428 + $0x32] sm:$0xff]
      %v1692 = vld [vmem:[%s1428 + $0x3a] sm:$0xff]
      %v1693 = vld [vmem:[%s1428 + $0x4a] sm:$0xff]
      %v1694 = vld [vmem:[%s1428 + $0x52] sm:$0xff]
      %v1695 = vld [vmem:[%s1428 + $0x62] sm:$0xff]
      %v1696 = vld [vmem:[%s1428 + $0x6a] sm:$0xff]
      %v1697 = vld [vmem:[%s1428 + $0x7a] sm:$0xff]
      %v1698 = vld [vmem:[%s1428 + $0x82] sm:$0xff]
      %v1699 = vld [vmem:[%s1428 + $0x92] sm:$0xff]
      %v1700 = vld [vmem:[%s1428 + $0x9a] sm:$0xff]
      %v1701 = vld [vmem:[%s1428 + $0xaa] sm:$0xff]
      %v1702 = vld [vmem:[%s1428 + $0xb2] sm:$0xff]
      %v1703 = vld [vmem:[%s1428 + $0xc2] sm:$0xff]
      %v1704 = vld [vmem:[%s1428 + $0xca] sm:$0xff]
      %v1705 = vld [vmem:[%s1428 + $0xda] sm:$0xff]
      %v1706 = vld [vmem:[%s1428 + $0xe2] sm:$0xff]
      %v1707 = vld [vmem:[%s1428 + $0xf2] sm:$0xff]
      %v1708 = vld [vmem:[%s1428 + $0xfa] sm:$0xff]
      %v1709 = vld [vmem:[%s1428 + $0x10a] sm:$0xff]
      %v1710 = vld [vmem:[%s1428 + $0x112] sm:$0xff]
      %v1711 = vld [vmem:[%s1428 + $0x122] sm:$0xff]
      %v1712 = vld [vmem:[%s1428 + $0x12a] sm:$0xff]
      %v1713 = vld [vmem:[%s1428 + $0x13a] sm:$0xff]
      %v1714 = vld [vmem:[%s1428 + $0x142] sm:$0xff]
      %v1715 = vld [vmem:[%s1428 + $0x152] sm:$0xff]
      %v1716 = vld [vmem:[%s1428 + $0x15a] sm:$0xff]
      %v1717 = vld [vmem:[%s1428 + $0x16a] sm:$0xff]
      %v1718 = vld [vmem:[%s1428 + $0x172] sm:$0xff]
      %v1719 = vpack.c.bf16 %v1688, %v1687
      %v1720 = vpack.c.bf16 %v1690, %v1689
      %v1721 = vpack.c.bf16 %v1692, %v1691
      %v1722 = vpack.c.bf16 %v1694, %v1693
      %v1723 = vpack.c.bf16 %v1696, %v1695
      %v1724 = vpack.c.bf16 %v1698, %v1697
      %v1725 = vpack.c.bf16 %v1700, %v1699
      %v1726 = vpack.c.bf16 %v1702, %v1701
      %v1727 = vpack.c.bf16 %v1704, %v1703
      %v1728 = vpack.c.bf16 %v1706, %v1705
      %v1729 = vpack.c.bf16 %v1708, %v1707
      %v1730 = vpack.c.bf16 %v1710, %v1709
      %v1731 = vpack.c.bf16 %v1712, %v1711
      %v1732 = vpack.c.bf16 %v1714, %v1713
      %v1733 = vpack.c.bf16 %v1716, %v1715
      %v1734 = vpack.c.bf16 %v1718, %v1717
      %1751 = vrot.lane.b32.xlu0 %v1719, 32
      %v1752 = vpop.permute.xlu0 %1751
      %1753 = vrot.lane.b32.xlu0 %v1720, 32
      %v1754 = vpop.permute.xlu0 %1753
      %1755 = vrot.lane.b32.xlu0 %v1721, 32
      %v1756 = vpop.permute.xlu0 %1755
      %1757 = vrot.lane.b32.xlu0 %v1722, 32
      %v1758 = vpop.permute.xlu0 %1757
      %1759 = vrot.lane.b32.xlu0 %v1723, 32
      %v1760 = vpop.permute.xlu0 %1759
      %1761 = vrot.lane.b32.xlu0 %v1724, 32
      %v1762 = vpop.permute.xlu0 %1761
      %1763 = vrot.lane.b32.xlu0 %v1725, 32
      %v1764 = vpop.permute.xlu0 %1763
      %1765 = vrot.lane.b32.xlu0 %v1726, 32
      %v1766 = vpop.permute.xlu0 %1765
      %1767 = vrot.lane.b32.xlu0 %v1727, 32
      %v1768 = vpop.permute.xlu0 %1767
      %1769 = vrot.lane.b32.xlu0 %v1728, 32
      %v1770 = vpop.permute.xlu0 %1769
      %1771 = vrot.lane.b32.xlu0 %v1729, 32
      %v1772 = vpop.permute.xlu0 %1771
      %1773 = vrot.lane.b32.xlu0 %v1730, 32
      %v1774 = vpop.permute.xlu0 %1773
      %1775 = vrot.lane.b32.xlu0 %v1731, 32
      %v1776 = vpop.permute.xlu0 %1775
      %1777 = vrot.lane.b32.xlu0 %v1732, 32
      %v1778 = vpop.permute.xlu0 %1777
      %1779 = vrot.lane.b32.xlu0 %v1733, 32
      %v1780 = vpop.permute.xlu0 %1779
      %1781 = vrot.lane.b32.xlu0 %v1734, 32
      %v1782 = vpop.permute.xlu0 %1781
      %vm1799 = vcmask 294144
      %1800 = vst.msk [vmem:[#allocation3] sm:$0xff] %vm1799, %v1752
      %1801 = vst.msk [vmem:[#allocation3 + $0x8] sm:$0xff] %vm1799, %v1754
      %1802 = vst.msk [vmem:[#allocation3 + $0x10] sm:$0xff] %vm1799, %v1756
      %1803 = vst.msk [vmem:[#allocation3 + $0x18] sm:$0xff] %vm1799, %v1758
      %1804 = vst.msk [vmem:[#allocation3 + $0x20] sm:$0xff] %vm1799, %v1760
      %1805 = vst.msk [vmem:[#allocation3 + $0x28] sm:$0xff] %vm1799, %v1762
      %1806 = vst.msk [vmem:[#allocation3 + $0x30] sm:$0xff] %vm1799, %v1764
      %1807 = vst.msk [vmem:[#allocation3 + $0x38] sm:$0xff] %vm1799, %v1766
      %1808 = vst.msk [vmem:[#allocation3 + $0x40] sm:$0xff] %vm1799, %v1768
      %1809 = vst.msk [vmem:[#allocation3 + $0x48] sm:$0xff] %vm1799, %v1770
      %1810 = vst.msk [vmem:[#allocation3 + $0x50] sm:$0xff] %vm1799, %v1772
      %1811 = vst.msk [vmem:[#allocation3 + $0x58] sm:$0xff] %vm1799, %v1774
      %1812 = vst.msk [vmem:[#allocation3 + $0x60] sm:$0xff] %vm1799, %v1776
      %1813 = vst.msk [vmem:[#allocation3 + $0x68] sm:$0xff] %vm1799, %v1778
      %1814 = vst.msk [vmem:[#allocation3 + $0x70] sm:$0xff] %vm1799, %v1780
      %1815 = vst.msk [vmem:[#allocation3 + $0x78] sm:$0xff] %vm1799, %v1782
      %v1816 = vld [vmem:[#allocation3] sm:$0xff]
      %v1817 = vld [vmem:[#allocation3 + $0x8] sm:$0xff]
      %v1818 = vld [vmem:[#allocation3 + $0x10] sm:$0xff]
      %v1819 = vld [vmem:[#allocation3 + $0x18] sm:$0xff]
      %v1820 = vld [vmem:[#allocation3 + $0x20] sm:$0xff]
      %v1821 = vld [vmem:[#allocation3 + $0x28] sm:$0xff]
      %v1822 = vld [vmem:[#allocation3 + $0x30] sm:$0xff]
      %v1823 = vld [vmem:[#allocation3 + $0x38] sm:$0xff]
      %v1824 = vld [vmem:[#allocation3 + $0x40] sm:$0xff]
      %v1825 = vld [vmem:[#allocation3 + $0x48] sm:$0xff]
      %v1826 = vld [vmem:[#allocation3 + $0x50] sm:$0xff]
      %v1827 = vld [vmem:[#allocation3 + $0x58] sm:$0xff]
      %v1828 = vld [vmem:[#allocation3 + $0x60] sm:$0xff]
      %v1829 = vld [vmem:[#allocation3 + $0x68] sm:$0xff]
      %v1830 = vld [vmem:[#allocation3 + $0x70] sm:$0xff]
      %v1831 = vld [vmem:[#allocation3 + $0x78] sm:$0xff]
      %v1832 = vld [vmem:[%s4] sm:$0xf]
      %v1833 = vld [vmem:[%s4 + $0x4] sm:$0xf]
      %v1834 = vld [vmem:[%s4 + $0x8] sm:$0xf]
      %v1835 = vld [vmem:[%s4 + $0xc] sm:$0xf]
      %v1836 = vld [vmem:[%s4 + $0x10] sm:$0x3]
      %v1842 = vunpack.c.l.b16 %v1832
      %v1843 = vunpack.c.l.b16 %v1833
      %v1844 = vunpack.c.l.b16 %v1834
      %v1845 = vunpack.c.l.b16 %v1835
      %v1846 = vunpack.c.l.b16 %v1836
      %v1847 = vpack.c.b16 %v1843, %v1842
      %v1848 = vpack.c.b16 %v1845, %v1844
      %v1849 = vpack.c.b16 %v1846, %v1846
      %vm1852 = vcmask 293888
      %v1854 = vsel %vm1852, %v1816, 0
      %v1857 = vsel %vm1852, %v1817, 0
      %v1860 = vsel %vm1852, %v1818, 0
      %v1863 = vsel %vm1852, %v1819, 0
      %v1866 = vsel %vm1852, %v1820, 0
      %v1869 = vsel %vm1852, %v1821, 0
      %v1872 = vsel %vm1852, %v1822, 0
      %v1875 = vsel %vm1852, %v1823, 0
      %v1878 = vsel %vm1852, %v1824, 0
      %v1881 = vsel %vm1852, %v1825, 0
      %v1884 = vsel %vm1852, %v1826, 0
      %v1887 = vsel %vm1852, %v1827, 0
      %v1890 = vsel %vm1852, %v1828, 0
      %v1893 = vsel %vm1852, %v1829, 0
      %v1896 = vsel %vm1852, %v1830, 0
      %v1899 = vsel %vm1852, %v1831, 0
      %v1902 = vsel %vm356, %v1849, 0
      %1904 = vmatprep.subr.bf16.mxu0 0
      %1905 = vmatpush1.bf16.msra.mxu0 %v1847
      %1906 = vmatprep.subr.bf16.mxu0 0
      %1907 = vmatpush1.bf16.msra.mxu0 %v1848
      %1908 = vmatprep.subr.bf16.mxu0 0
      %1909 = vmatpush1.bf16.msra.mxu0 %v1902
      %1910 = vmatprep.subr.bf16.mxu0 0
      %1911 = vmatpush1.bf16.msra.mxu0 0
      %1912 = vmatprep.subr.bf16.mxu0 0
      %1913 = vmatpush1.bf16.msra.mxu0 0
      %1914 = vmatprep.subr.bf16.mxu0 0
      %1915 = vmatpush1.bf16.msra.mxu0 0
      %1916 = vmatprep.subr.bf16.mxu0 0
      %1917 = vmatpush1.bf16.msra.mxu0 0
      %1918 = vmatprep.subr.bf16.mxu0 0
      %1919 = vmatpush1.bf16.msra.mxu0 0
      %1920 = vmatprep.subr.bf16.mxu0 0
      %1921 = vmatpush1.bf16.msra.mxu0 0
      %1922 = vmatprep.subr.bf16.mxu0 0
      %1923 = vmatpush1.bf16.msra.mxu0 0
      %1924 = vmatprep.subr.bf16.mxu0 0
      %1925 = vmatpush1.bf16.msra.mxu0 0
      %1926 = vmatprep.subr.bf16.mxu0 0
      %1927 = vmatpush1.bf16.msra.mxu0 0
      %1928 = vmatprep.subr.bf16.mxu0 0
      %1929 = vmatpush1.bf16.msra.mxu0 0
      %1930 = vmatprep.subr.bf16.mxu0 0
      %1931 = vmatpush1.bf16.msra.mxu0 0
      %1932 = vmatprep.subr.bf16.mxu0 0
      %1933 = vmatpush1.bf16.msra.mxu0 0
      %1934 = vmatprep.subr.bf16.mxu0 0
      %1935 = vmatpush1.bf16.msra.mxu0 0
      %1936 = vmatprep.mubr.bf16.mxu0 0
      %1937 = vmatmul.mubr.bf16.gmra.mrb[0].mxu0 %v1854
      %v1938 = vpop.f32.mrb[0].mxu0
      %v1939 = vadd.f32 0.0, %v1938
      %v1940 = vpop.f32.mrb[0].mxu0
      %v1941 = vpop.f32.mrb[0].mxu0
      %v1942 = vadd.f32 0.0, %v1941
      %v1943 = vpop.f32.mrb[0].mxu0
      %1944 = vmatprep.mubr.bf16.mxu0 0
      %1945 = vmatmul.mubr.bf16.gmra.mrb[0].mxu0 %v1857
      %v1946 = vpop.f32.mrb[0].mxu0
      %v1947 = vadd.f32 0.0, %v1946
      %v1948 = vpop.f32.mrb[0].mxu0
      %v1949 = vpop.f32.mrb[0].mxu0
      %v1950 = vadd.f32 0.0, %v1949
      %v1951 = vpop.f32.mrb[0].mxu0
      %1952 = vmatprep.mubr.bf16.mxu0 0
      %1953 = vmatmul.mubr.bf16.gmra.mrb[0].mxu0 %v1860
      %v1954 = vpop.f32.mrb[0].mxu0
      %v1955 = vadd.f32 0.0, %v1954
      %v1956 = vpop.f32.mrb[0].mxu0
      %v1957 = vpop.f32.mrb[0].mxu0
      %v1958 = vadd.f32 0.0, %v1957
      %v1959 = vpop.f32.mrb[0].mxu0
      %1960 = vmatprep.mubr.bf16.mxu0 0
      %1961 = vmatmul.mubr.bf16.gmra.mrb[0].mxu0 %v1863
      %v1962 = vpop.f32.mrb[0].mxu0
      %v1963 = vadd.f32 0.0, %v1962
      %v1964 = vpop.f32.mrb[0].mxu0
      %v1965 = vpop.f32.mrb[0].mxu0
      %v1966 = vadd.f32 0.0, %v1965
      %v1967 = vpop.f32.mrb[0].mxu0
      %1968 = vmatprep.mubr.bf16.mxu0 0
      %1969 = vmatmul.mubr.bf16.gmra.mrb[0].mxu0 %v1866
      %v1970 = vpop.f32.mrb[0].mxu0
      %v1971 = vadd.f32 0.0, %v1970
      %v1972 = vpop.f32.mrb[0].mxu0
      %v1973 = vpop.f32.mrb[0].mxu0
      %v1974 = vadd.f32 0.0, %v1973
      %v1975 = vpop.f32.mrb[0].mxu0
      %1976 = vmatprep.mubr.bf16.mxu0 0
      %1977 = vmatmul.mubr.bf16.gmra.mrb[0].mxu0 %v1869
      %v1978 = vpop.f32.mrb[0].mxu0
      %v1979 = vadd.f32 0.0, %v1978
      %v1980 = vpop.f32.mrb[0].mxu0
      %v1981 = vpop.f32.mrb[0].mxu0
      %v1982 = vadd.f32 0.0, %v1981
      %v1983 = vpop.f32.mrb[0].mxu0
      %1984 = vmatprep.mubr.bf16.mxu0 0
      %1985 = vmatmul.mubr.bf16.gmra.mrb[0].mxu0 %v1872
      %v1986 = vpop.f32.mrb[0].mxu0
      %v1987 = vadd.f32 0.0, %v1986
      %v1988 = vpop.f32.mrb[0].mxu0
      %v1989 = vpop.f32.mrb[0].mxu0
      %v1990 = vadd.f32 0.0, %v1989
      %v1991 = vpop.f32.mrb[0].mxu0
      %1992 = vmatprep.mubr.bf16.mxu0 0
      %1993 = vmatmul.mubr.bf16.gmra.mrb[0].mxu0 %v1875
      %v1994 = vpop.f32.mrb[0].mxu0
      %v1995 = vadd.f32 0.0, %v1994
      %v1996 = vpop.f32.mrb[0].mxu0
      %v1997 = vpop.f32.mrb[0].mxu0
      %v1998 = vadd.f32 0.0, %v1997
      %v1999 = vpop.f32.mrb[0].mxu0
      %2000 = vmatprep.mubr.bf16.mxu0 0
      %2001 = vmatmul.mubr.bf16.gmra.mrb[0].mxu0 %v1878
      %v2002 = vpop.f32.mrb[0].mxu0
      %v2003 = vadd.f32 0.0, %v2002
      %v2004 = vpop.f32.mrb[0].mxu0
      %v2005 = vpop.f32.mrb[0].mxu0
      %v2006 = vadd.f32 0.0, %v2005
      %v2007 = vpop.f32.mrb[0].mxu0
      %2008 = vmatprep.mubr.bf16.mxu0 0
      %2009 = vmatmul.mubr.bf16.gmra.mrb[0].mxu0 %v1881
      %v2010 = vpop.f32.mrb[0].mxu0
      %v2011 = vadd.f32 0.0, %v2010
      %v2012 = vpop.f32.mrb[0].mxu0
      %v2013 = vpop.f32.mrb[0].mxu0
      %v2014 = vadd.f32 0.0, %v2013
      %v2015 = vpop.f32.mrb[0].mxu0
      %2016 = vmatprep.mubr.bf16.mxu0 0
      %2017 = vmatmul.mubr.bf16.gmra.mrb[0].mxu0 %v1884
      %v2018 = vpop.f32.mrb[0].mxu0
      %v2019 = vadd.f32 0.0, %v2018
      %v2020 = vpop.f32.mrb[0].mxu0
      %v2021 = vpop.f32.mrb[0].mxu0
      %v2022 = vadd.f32 0.0, %v2021
      %v2023 = vpop.f32.mrb[0].mxu0
      %2024 = vmatprep.mubr.bf16.mxu0 0
      %2025 = vmatmul.mubr.bf16.gmra.mrb[0].mxu0 %v1887
      %v2026 = vpop.f32.mrb[0].mxu0
      %v2027 = vadd.f32 0.0, %v2026
      %v2028 = vpop.f32.mrb[0].mxu0
      %v2029 = vpop.f32.mrb[0].mxu0
      %v2030 = vadd.f32 0.0, %v2029
      %v2031 = vpop.f32.mrb[0].mxu0
      %2032 = vmatprep.mubr.bf16.mxu0 0
      %2033 = vmatmul.mubr.bf16.gmra.mrb[0].mxu0 %v1890
      %v2034 = vpop.f32.mrb[0].mxu0
      %v2035 = vadd.f32 0.0, %v2034
      %v2036 = vpop.f32.mrb[0].mxu0
      %v2037 = vpop.f32.mrb[0].mxu0
      %v2038 = vadd.f32 0.0, %v2037
      %v2039 = vpop.f32.mrb[0].mxu0
      %2040 = vmatprep.mubr.bf16.mxu0 0
      %2041 = vmatmul.mubr.bf16.gmra.mrb[0].mxu0 %v1893
      %v2042 = vpop.f32.mrb[0].mxu0
      %v2043 = vadd.f32 0.0, %v2042
      %v2044 = vpop.f32.mrb[0].mxu0
      %v2045 = vpop.f32.mrb[0].mxu0
      %v2046 = vadd.f32 0.0, %v2045
      %v2047 = vpop.f32.mrb[0].mxu0
      %2048 = vmatprep.mubr.bf16.mxu0 0
      %2049 = vmatmul.mubr.bf16.gmra.mrb[0].mxu0 %v1896
      %v2050 = vpop.f32.mrb[0].mxu0
      %v2051 = vadd.f32 0.0, %v2050
      %v2052 = vpop.f32.mrb[0].mxu0
      %v2053 = vpop.f32.mrb[0].mxu0
      %v2054 = vadd.f32 0.0, %v2053
      %v2055 = vpop.f32.mrb[0].mxu0
      %2056 = vmatprep.mubr.bf16.mxu0 0
      %2057 = vmatmul.mubr.bf16.gmra.mrb[0].mxu0 %v1899
      %v2058 = vpop.f32.mrb[0].mxu0
      %v2059 = vadd.f32 0.0, %v2058
      %v2060 = vpop.f32.mrb[0].mxu0
      %v2061 = vpop.f32.mrb[0].mxu0
      %v2062 = vadd.f32 0.0, %v2061
      %v2063 = vpop.f32.mrb[0].mxu0
      %2064 = vdwg.mxu0
      %v2065 = vsel %vm307, %v1939, 0.0
      %v2066 = vsel %vm307, %v1942, 0.0
      %v2067 = vadd.f32 %v2065, %v2066
      %v2068 = vsel %vm307, %v1947, 0.0
      %v2069 = vadd.f32 %v2067, %v2068
      %v2070 = vsel %vm307, %v1950, 0.0
      %v2071 = vadd.f32 %v2069, %v2070
      %v2072 = vsel %vm307, %v1955, 0.0
      %v2073 = vadd.f32 %v2071, %v2072
      %v2074 = vsel %vm307, %v1958, 0.0
      %v2075 = vadd.f32 %v2073, %v2074
      %v2076 = vsel %vm307, %v1963, 0.0
      %v2077 = vadd.f32 %v2075, %v2076
      %v2078 = vsel %vm307, %v1966, 0.0
      %v2079 = vadd.f32 %v2077, %v2078
      %v2080 = vsel %vm307, %v1971, 0.0
      %v2081 = vadd.f32 %v2079, %v2080
      %v2082 = vsel %vm307, %v1974, 0.0
      %v2083 = vadd.f32 %v2081, %v2082
      %v2084 = vsel %vm307, %v1979, 0.0
      %v2085 = vadd.f32 %v2083, %v2084
      %v2086 = vsel %vm307, %v1982, 0.0
      %v2087 = vadd.f32 %v2085, %v2086
      %v2088 = vsel %vm307, %v1987, 0.0
      %v2089 = vadd.f32 %v2087, %v2088
      %v2090 = vsel %vm307, %v1990, 0.0
      %v2091 = vadd.f32 %v2089, %v2090
      %v2092 = vsel %vm307, %v1995, 0.0
      %v2093 = vadd.f32 %v2091, %v2092
      %v2094 = vsel %vm307, %v1998, 0.0
      %v2095 = vadd.f32 %v2093, %v2094
      %v2096 = vsel %vm307, %v2003, 0.0
      %v2097 = vadd.f32 %v2095, %v2096
      %v2098 = vsel %vm307, %v2006, 0.0
      %v2099 = vadd.f32 %v2097, %v2098
      %v2100 = vsel %vm307, %v2011, 0.0
      %v2101 = vadd.f32 %v2099, %v2100
      %v2102 = vsel %vm307, %v2014, 0.0
      %v2103 = vadd.f32 %v2101, %v2102
      %v2104 = vsel %vm307, %v2019, 0.0
      %v2105 = vadd.f32 %v2103, %v2104
      %v2106 = vsel %vm307, %v2022, 0.0
      %v2107 = vadd.f32 %v2105, %v2106
      %v2108 = vsel %vm307, %v2027, 0.0
      %v2109 = vadd.f32 %v2107, %v2108
      %v2110 = vsel %vm307, %v2030, 0.0
      %v2111 = vadd.f32 %v2109, %v2110
      %v2112 = vsel %vm307, %v2035, 0.0
      %v2113 = vadd.f32 %v2111, %v2112
      %v2114 = vsel %vm307, %v2038, 0.0
      %v2115 = vadd.f32 %v2113, %v2114
      %v2116 = vsel %vm307, %v2043, 0.0
      %v2117 = vadd.f32 %v2115, %v2116
      %v2118 = vsel %vm307, %v2046, 0.0
      %v2119 = vadd.f32 %v2117, %v2118
      %v2120 = vsel %vm307, %v2051, 0.0
      %v2121 = vadd.f32 %v2119, %v2120
      %v2122 = vsel %vm307, %v2054, 0.0
      %v2123 = vadd.f32 %v2121, %v2122
      %v2124 = vsel %vm307, %v2059, 0.0
      %v2125 = vadd.f32 %v2123, %v2124
      %v2126 = vsel %vm307, %v2062, 0.0
      %v2127 = vadd.f32 %v2125, %v2126
      %v2128 = vrot.slane %v2127, 4
      %v2129 = vadd.f32 %v2127, %v2128
      %v2130 = vrot.slane %v2129, 2
      %v2131 = vadd.f32 %v2129, %v2130
      %v2132 = vrot.slane %v2131, 1
      %v2133 = vadd.f32 %v2131, %v2132
      %vm2134 = vcmask 24576
      %2135 = vst.msk [vmem:[%s253] sm:$0x1] %vm2134, %v2133
      %v2136 = vmul.f32 %v1939, %v1939
      %v2137 = vmul.f32 %v1942, %v1942
      %v2138 = vmul.f32 %v1947, %v1947
      %v2139 = vmul.f32 %v1950, %v1950
      %v2140 = vmul.f32 %v1955, %v1955
      %v2141 = vmul.f32 %v1958, %v1958
      %v2142 = vmul.f32 %v1963, %v1963
      %v2143 = vmul.f32 %v1966, %v1966
      %v2144 = vmul.f32 %v1971, %v1971
      %v2145 = vmul.f32 %v1974, %v1974
      %v2146 = vmul.f32 %v1979, %v1979
      %v2147 = vmul.f32 %v1982, %v1982
      %v2148 = vmul.f32 %v1987, %v1987
      %v2149 = vmul.f32 %v1990, %v1990
      %v2150 = vmul.f32 %v1995, %v1995
      %v2151 = vmul.f32 %v1998, %v1998
      %v2152 = vmul.f32 %v2003, %v2003
      %v2153 = vmul.f32 %v2006, %v2006
      %v2154 = vmul.f32 %v2011, %v2011
      %v2155 = vmul.f32 %v2014, %v2014
      %v2156 = vmul.f32 %v2019, %v2019
      %v2157 = vmul.f32 %v2022, %v2022
      %v2158 = vmul.f32 %v2027, %v2027
      %v2159 = vmul.f32 %v2030, %v2030
      %v2160 = vmul.f32 %v2035, %v2035
      %v2161 = vmul.f32 %v2038, %v2038
      %v2162 = vmul.f32 %v2043, %v2043
      %v2163 = vmul.f32 %v2046, %v2046
      %v2164 = vmul.f32 %v2051, %v2051
      %v2165 = vmul.f32 %v2054, %v2054
      %v2166 = vmul.f32 %v2059, %v2059
      %v2167 = vmul.f32 %v2062, %v2062
      %v2168 = vsel %vm307, %v2136, 0.0
      %v2169 = vsel %vm307, %v2137, 0.0
      %v2170 = vadd.f32 %v2168, %v2169
      %v2171 = vsel %vm307, %v2138, 0.0
      %v2172 = vadd.f32 %v2170, %v2171
      %v2173 = vsel %vm307, %v2139, 0.0
      %v2174 = vadd.f32 %v2172, %v2173
      %v2175 = vsel %vm307, %v2140, 0.0
      %v2176 = vadd.f32 %v2174, %v2175
      %v2177 = vsel %vm307, %v2141, 0.0
      %v2178 = vadd.f32 %v2176, %v2177
      %v2179 = vsel %vm307, %v2142, 0.0
      %v2180 = vadd.f32 %v2178, %v2179
      %v2181 = vsel %vm307, %v2143, 0.0
      %v2182 = vadd.f32 %v2180, %v2181
      %v2183 = vsel %vm307, %v2144, 0.0
      %v2184 = vadd.f32 %v2182, %v2183
      %v2185 = vsel %vm307, %v2145, 0.0
      %v2186 = vadd.f32 %v2184, %v2185
      %v2187 = vsel %vm307, %v2146, 0.0
      %v2188 = vadd.f32 %v2186, %v2187
      %v2189 = vsel %vm307, %v2147, 0.0
      %v2190 = vadd.f32 %v2188, %v2189
      %v2191 = vsel %vm307, %v2148, 0.0
      %v2192 = vadd.f32 %v2190, %v2191
      %v2193 = vsel %vm307, %v2149, 0.0
      %v2194 = vadd.f32 %v2192, %v2193
      %v2195 = vsel %vm307, %v2150, 0.0
      %v2196 = vadd.f32 %v2194, %v2195
      %v2197 = vsel %vm307, %v2151, 0.0
      %v2198 = vadd.f32 %v2196, %v2197
      %v2199 = vsel %vm307, %v2152, 0.0
      %v2200 = vadd.f32 %v2198, %v2199
      %v2201 = vsel %vm307, %v2153, 0.0
      %v2202 = vadd.f32 %v2200, %v2201
      %v2203 = vsel %vm307, %v2154, 0.0
      %v2204 = vadd.f32 %v2202, %v2203
      %v2205 = vsel %vm307, %v2155, 0.0
      %v2206 = vadd.f32 %v2204, %v2205
      %v2207 = vsel %vm307, %v2156, 0.0
      %v2208 = vadd.f32 %v2206, %v2207
      %v2209 = vsel %vm307, %v2157, 0.0
      %v2210 = vadd.f32 %v2208, %v2209
      %v2211 = vsel %vm307, %v2158, 0.0
      %v2212 = vadd.f32 %v2210, %v2211
      %v2213 = vsel %vm307, %v2159, 0.0
      %v2214 = vadd.f32 %v2212, %v2213
      %v2215 = vsel %vm307, %v2160, 0.0
      %v2216 = vadd.f32 %v2214, %v2215
      %v2217 = vsel %vm307, %v2161, 0.0
      %v2218 = vadd.f32 %v2216, %v2217
      %v2219 = vsel %vm307, %v2162, 0.0
      %v2220 = vadd.f32 %v2218, %v2219
      %v2221 = vsel %vm307, %v2163, 0.0
      %v2222 = vadd.f32 %v2220, %v2221
      %v2223 = vsel %vm307, %v2164, 0.0
      %v2224 = vadd.f32 %v2222, %v2223
      %v2225 = vsel %vm307, %v2165, 0.0
      %v2226 = vadd.f32 %v2224, %v2225
      %v2227 = vsel %vm307, %v2166, 0.0
      %v2228 = vadd.f32 %v2226, %v2227
      %v2229 = vsel %vm307, %v2167, 0.0
      %v2230 = vadd.f32 %v2228, %v2229
      %v2231 = vrot.slane %v2230, 4
      %v2232 = vadd.f32 %v2230, %v2231
      %v2233 = vrot.slane %v2232, 2
      %v2234 = vadd.f32 %v2232, %v2233
      %v2235 = vrot.slane %v2234, 1
      %v2236 = vadd.f32 %v2234, %v2235
      %2237 = vst.msk [vmem:[%s256] sm:$0x1] %vm2134, %v2236
      %p2238 = scmp.lt.s32.totalorder %s18, 1
      %s2239 = scalar_select %p2238, %s18, 1
      %s2240 = scalar_lea.vmem %s5, %s2239
      %p2241 = scmp.lt.s32.totalorder %s18, 1
      %s2242 = scalar_select %p2241, %s18, 1
      %s2243 = scalar_lea.vmem %s6, %s2242
      // Predicated region
      $region41: #{bottleneck_forward.4} parent=39 // pred_check
        %p2244 = pneg %p146
      $region42: #{bottleneck_forward.4} parent=39 // pred_check_branch
        %2246 = sbr.rel (%p2244) target = $region44
      $region43: #{bottleneck_forward.4} parent=39 // pred_region
        _
      $region44: #{bottleneck_forward.4} parent=39 // pred_fallthru
        _
      // Predicated region
      $region45: #{bottleneck_forward.4} parent=39 // pred_check
        %p2247 = pneg %p172
      $region46: #{bottleneck_forward.4} parent=39 // pred_check_branch
        %2249 = sbr.rel (%p2247) target = $region48
      $region47: #{bottleneck_forward.4} parent=39 // pred_region
        _
      $region48: #{bottleneck_forward.4} parent=39 // pred_fallthru
        _
    $region40: #{bottleneck_forward.4} parent=5 // pred_fallthru
      _
    %p2250 = scmp.le.s32.totalorder 2, %s13
    // Predicated region
    $region49: #{bottleneck_forward.4} parent=5 // pred_check
      %p2251 = pneg %p2250
    $region50: #{bottleneck_forward.4} parent=5 // pred_check_branch
      %2253 = sbr.rel (%p2251) target = $region52
    $region51: #{bottleneck_forward.4} parent=5 // pred_region
      %s2254 = ssub.s32 %s13, 2
      // Predicated region
      $region53: #{bottleneck_forward.4} parent=51 // pred_check
        %p2255 = pneg %p152
      $region54: #{bottleneck_forward.4} parent=51 // pred_check_branch
        %2257 = sbr.rel (%p2255) target = $region56
      $region55: #{bottleneck_forward.4} parent=51 // pred_region
        %p2258 = scmp.lt.s32.totalorder %s19, 1
        %s2259 = scalar_select %p2258, %s19, 1
        %s2260 = scalar_lea.vmem %s5, %s2259
      $region56: #{bottleneck_forward.4} parent=51 // pred_fallthru
        _
      // Predicated region
      $region57: #{bottleneck_forward.4} parent=51 // pred_check
        %p2261 = pneg %p178
      $region58: #{bottleneck_forward.4} parent=51 // pred_check_branch
        %2263 = sbr.rel (%p2261) target = $region60
      $region59: #{bottleneck_forward.4} parent=51 // pred_region
        %p2264 = scmp.lt.s32.totalorder %s19, 1
        %s2265 = scalar_select %p2264, %s19, 1
        %s2266 = scalar_lea.vmem %s6, %s2265
      $region60: #{bottleneck_forward.4} parent=51 // pred_fallthru
        _
    $region52: #{bottleneck_forward.4} parent=5 // pred_fallthru
      _
  $region6: #{bottleneck_forward.4} parent=0 // loop_footer
    %s17 = sadd.s32 1, %s13
  $region7: #{bottleneck_forward.4} parent=0 // loop_footer_branch
    %12 = sbr.rel target = $region3
  $region8: #{bottleneck_forward.4} parent=0 // loop_exit
    _

// kernel: bottleneck_forward.5
$region0: #{bottleneck_forward.5}
  #allocation0 [shape = 'u32[]', space=smem, size = 0x4, offset = 0x4, fixed_abs, tag = 'smem constant byte address 0x4 - core index']
  #allocation1 [shape = 'u32[144,128]{1,0:T(1,128)}', space=vmem, size = 0x12000, scoped, tag = 'internal scratch']
  #allocation2 [shape = 'f32[18,18,4]{2,1,0:T(8,128)}', space=vmem, size = 0x36000, scoped, tag = 'scratch operand']
  #allocation3 [shape = 'bf16[16,16,36]{2,1,0:T(16,128)(2,1)}', space=vmem, size = 0x10000, scoped, tag = 'scratch operand']
  %s0 = inlined_call_operand.vmem [shape: f32[2,256,4], index: 0, kind: input, shape index: {}]
  %s1 = inlined_call_operand.vmem [shape: bf16[4,4], index: 1, kind: input, shape index: {}]
  %s2 = inlined_call_operand.vmem [shape: f32[1,4], index: 2, kind: input, shape index: {}]
  %s3 = inlined_call_operand.vmem [shape: f32[1,4], index: 3, kind: input, shape index: {}]
  %s4 = inlined_call_operand.vmem [shape: bf16[36,4], index: 4, kind: input, shape index: {}]
  %s5 = inlined_call_operand.vmem [shape: f32[1,4], index: 5, kind: input, shape index: {}]
  %s6 = inlined_call_operand.vmem [shape: f32[1,4], index: 6, kind: input, shape index: {}]
  %s7 = inlined_call_operand.vmem [shape: f32[2,256,4], index: 7, kind: output, shape index: {}]
  %s8 = sld [smem:[#allocation0]]
  $region61: #{bottleneck_forward.5} parent=0
    _
  %s10 = ssub.s32 1, %s8
  %s11 = scalar_select 0, %s10, %s8
  loop: start=0, step=1, limit=4
  $region2: #{bottleneck_forward.5} parent=0 // loop_pre_header
    _
  $region3: #{bottleneck_forward.5} parent=0 // loop_header
    %s13 = sphi 0, %s17
    %p14 = scmp.ge.s32.totalorder %s13, 4
    %s23 = sphi 0, %s25
    %s26 = sphi 0, %s23
    %s27 = sphi 0, %s26
    %s43 = sphi 0, %s27
    %s47 = sphi 0, %s47
    %s49 = sphi 0, %s47
    %s50 = sphi 0, %s49
    %s64 = sphi 0, %s50
    %s68 = sphi 0, %s68
    %s70 = sphi 0, %s68
    %s71 = sphi 0, %s70
    %s85 = sphi 0, %s71
    %s89 = sphi 0, %s89
    %s91 = sphi 0, %s89
    %s92 = sphi 0, %s91
    %s106 = sphi 0, %s92
    %s110 = sphi 0, %s110
    %s112 = sphi 0, %s110
    %s113 = sphi 0, %s112
    %s127 = sphi 0, %s113
    %s131 = sphi 0, %s131
    %s133 = sphi 0, %s131
    %s134 = sphi 0, %s133
    %s148 = sphi 0, %s134
    %s152 = sphi 0, %s152
    %s154 = sphi 0, %s152
    %s155 = sphi 0, %s154
    %s169 = sphi 0, %s155
    %s175 = sphi 0, %s177
    %s178 = sphi 0, %s175
    %s179 = sphi 0, %s178
    %s195 = sphi 0, %s179
  $region4: #{bottleneck_forward.5} parent=0 // loop_header_branch
    %16 = sbr.rel (%p14) target = $region8
  $region5: #{bottleneck_forward.5} parent=0 // loop_body
    %s18 = ssub.s32 %s13, 1
    %s19 = ssub.s32 %s13, 2
    %s20 = sadd.s32 %s13, 1
    %s21 = ssub.s32 %s13, %s20
    %p22 = scmp.eq.s32.totalorder %s21, 0
    %s24 = sadd.s32 %s23, 1
    %s25 = scalar_select %p22, %s23, %s24
    %p28 = pneg %p22
    %p29 = scmp.eq.s32.totalorder %s13, 1
    %p30 = por %p28, %p29
    %p31 = scmp.ne.s32.totalorder %s23, %s26
    %p32 = scmp.eq.s32.totalorder %s13, 0
    %p33 = por %p31, %p32
    %p34 = scmp.ne.s32.totalorder %s23, %s26
    %p35 = scmp.eq.s32.totalorder %s18, 1
    %p36 = por %p34, %p35
    %p37 = scmp.ne.s32.totalorder %s26, %s27
    %p38 = scmp.eq.s32.totalorder %s18, 0
    %p39 = por %p37, %p38
    %p40 = scmp.ne.s32.totalorder %s26, %s27
    %p41 = scmp.eq.s32.totalorder %s19, 1
    %p42 = por %p40, %p41
    %p44 = scmp.ne.s32.totalorder %s27, %s43
    %p45 = scmp.eq.s32.totalorder %s19, 0
    %p46 = por %p44, %p45
    %s48 = sadd.s32 %s47, 1
    %p51 = scmp.eq.s32.totalorder %s13, 1
    %p52 = scmp.ne.s32.totalorder %s47, %s49
    %p53 = scmp.eq.s32.totalorder %s13, 0
    %p54 = por %p52, %p53
    %p55 = scmp.ne.s32.totalorder %s47, %s49
    %p56 = scmp.eq.s32.totalorder %s18, 1
    %p57 = por %p55, %p56
    %p58 = scmp.ne.s32.totalorder %s49, %s50
    %p59 = scmp.eq.s32.totalorder %s18, 0
    %p60 = por %p58, %p59
    %p61 = scmp.ne.s32.totalorder %s49, %s50
    %p62 = scmp.eq.s32.totalorder %s19, 1
    %p63 = por %p61, %p62
    %p65 = scmp.ne.s32.totalorder %s50, %s64
    %p66 = scmp.eq.s32.totalorder %s19, 0
    %p67 = por %p65, %p66
    %s69 = sadd.s32 %s68, 1
    %p72 = scmp.eq.s32.totalorder %s13, 1
    %p73 = scmp.ne.s32.totalorder %s68, %s70
    %p74 = scmp.eq.s32.totalorder %s13, 0
    %p75 = por %p73, %p74
    %p76 = scmp.ne.s32.totalorder %s68, %s70
    %p77 = scmp.eq.s32.totalorder %s18, 1
    %p78 = por %p76, %p77
    %p79 = scmp.ne.s32.totalorder %s70, %s71
    %p80 = scmp.eq.s32.totalorder %s18, 0
    %p81 = por %p79, %p80
    %p82 = scmp.ne.s32.totalorder %s70, %s71
    %p83 = scmp.eq.s32.totalorder %s19, 1
    %p84 = por %p82, %p83
    %p86 = scmp.ne.s32.totalorder %s71, %s85
    %p87 = scmp.eq.s32.totalorder %s19, 0
    %p88 = por %p86, %p87
    %s90 = sadd.s32 %s89, 1
    %p93 = scmp.eq.s32.totalorder %s13, 1
    %p94 = scmp.ne.s32.totalorder %s89, %s91
    %p95 = scmp.eq.s32.totalorder %s13, 0
    %p96 = por %p94, %p95
    %p97 = scmp.ne.s32.totalorder %s89, %s91
    %p98 = scmp.eq.s32.totalorder %s18, 1
    %p99 = por %p97, %p98
    %p100 = scmp.ne.s32.totalorder %s91, %s92
    %p101 = scmp.eq.s32.totalorder %s18, 0
    %p102 = por %p100, %p101
    %p103 = scmp.ne.s32.totalorder %s91, %s92
    %p104 = scmp.eq.s32.totalorder %s19, 1
    %p105 = por %p103, %p104
    %p107 = scmp.ne.s32.totalorder %s92, %s106
    %p108 = scmp.eq.s32.totalorder %s19, 0
    %p109 = por %p107, %p108
    %s111 = sadd.s32 %s110, 1
    %p114 = scmp.eq.s32.totalorder %s13, 1
    %p115 = scmp.ne.s32.totalorder %s110, %s112
    %p116 = scmp.eq.s32.totalorder %s13, 0
    %p117 = por %p115, %p116
    %p118 = scmp.ne.s32.totalorder %s110, %s112
    %p119 = scmp.eq.s32.totalorder %s18, 1
    %p120 = por %p118, %p119
    %p121 = scmp.ne.s32.totalorder %s112, %s113
    %p122 = scmp.eq.s32.totalorder %s18, 0
    %p123 = por %p121, %p122
    %p124 = scmp.ne.s32.totalorder %s112, %s113
    %p125 = scmp.eq.s32.totalorder %s19, 1
    %p126 = por %p124, %p125
    %p128 = scmp.ne.s32.totalorder %s113, %s127
    %p129 = scmp.eq.s32.totalorder %s19, 0
    %p130 = por %p128, %p129
    %s132 = sadd.s32 %s131, 1
    %p135 = scmp.eq.s32.totalorder %s13, 1
    %p136 = scmp.ne.s32.totalorder %s131, %s133
    %p137 = scmp.eq.s32.totalorder %s13, 0
    %p138 = por %p136, %p137
    %p139 = scmp.ne.s32.totalorder %s131, %s133
    %p140 = scmp.eq.s32.totalorder %s18, 1
    %p141 = por %p139, %p140
    %p142 = scmp.ne.s32.totalorder %s133, %s134
    %p143 = scmp.eq.s32.totalorder %s18, 0
    %p144 = por %p142, %p143
    %p145 = scmp.ne.s32.totalorder %s133, %s134
    %p146 = scmp.eq.s32.totalorder %s19, 1
    %p147 = por %p145, %p146
    %p149 = scmp.ne.s32.totalorder %s134, %s148
    %p150 = scmp.eq.s32.totalorder %s19, 0
    %p151 = por %p149, %p150
    %s153 = sadd.s32 %s152, 1
    %p156 = scmp.eq.s32.totalorder %s13, 1
    %p157 = scmp.ne.s32.totalorder %s152, %s154
    %p158 = scmp.eq.s32.totalorder %s13, 0
    %p159 = por %p157, %p158
    %p160 = scmp.ne.s32.totalorder %s152, %s154
    %p161 = scmp.eq.s32.totalorder %s18, 1
    %p162 = por %p160, %p161
    %p163 = scmp.ne.s32.totalorder %s154, %s155
    %p164 = scmp.eq.s32.totalorder %s18, 0
    %p165 = por %p163, %p164
    %p166 = scmp.ne.s32.totalorder %s154, %s155
    %p167 = scmp.eq.s32.totalorder %s19, 1
    %p168 = por %p166, %p167
    %p170 = scmp.ne.s32.totalorder %s155, %s169
    %p171 = scmp.eq.s32.totalorder %s19, 0
    %p172 = por %p170, %p171
    %s173 = ssub.s32 %s13, %s20
    %p174 = scmp.eq.s32.totalorder %s173, 0
    %s176 = sadd.s32 %s175, 1
    %s177 = scalar_select %p174, %s175, %s176
    %p180 = pneg %p174
    %p181 = scmp.eq.s32.totalorder %s13, 1
    %p182 = por %p180, %p181
    %p183 = scmp.ne.s32.totalorder %s175, %s178
    %p184 = scmp.eq.s32.totalorder %s13, 0
    %p185 = por %p183, %p184
    %p186 = scmp.ne.s32.totalorder %s175, %s178
    %p187 = scmp.eq.s32.totalorder %s18, 1
    %p188 = por %p186, %p187
    %p189 = scmp.ne.s32.totalorder %s178, %s179
    %p190 = scmp.eq.s32.totalorder %s18, 0
    %p191 = por %p189, %p190
    %p192 = scmp.ne.s32.totalorder %s178, %s179
    %p193 = scmp.eq.s32.totalorder %s19, 1
    %p194 = por %p192, %p193
    %p196 = scmp.ne.s32.totalorder %s179, %s195
    %p197 = scmp.eq.s32.totalorder %s19, 0
    %p198 = por %p196, %p197
    %p199 = scmp.le.s32.totalorder 1, %s13
    %p200 = scmp.lt.s32.totalorder %s13, 3
    %p201 = pnand %p199, %p200
    %p202 = pneg %p201
    // Predicated region
    $region9: #{bottleneck_forward.5} parent=5 // pred_check
      _
    $region10: #{bottleneck_forward.5} parent=5 // pred_check_branch
      %204 = sbr.rel (%p201) target = $region12
    $region11: #{bottleneck_forward.5} parent=5 // pred_region
      %s205 = ssub.s32 %s13, 1
      // Predicated region
      $region13: #{bottleneck_forward.5} parent=11 // pred_check
        %p206 = pneg %p60
      $region14: #{bottleneck_forward.5} parent=11 // pred_check_branch
        %208 = sbr.rel (%p206) target = $region16
      $region15: #{bottleneck_forward.5} parent=11 // pred_region
        _
      $region16: #{bottleneck_forward.5} parent=11 // pred_fallthru
        _
      // Predicated region
      $region17: #{bottleneck_forward.5} parent=11 // pred_check
        %p209 = pneg %p81
      $region18: #{bottleneck_forward.5} parent=11 // pred_check_branch
        %211 = sbr.rel (%p209) target = $region20
      $region19: #{bottleneck_forward.5} parent=11 // pred_region
        _
      $region20: #{bottleneck_forward.5} parent=11 // pred_fallthru
        _
      // Predicated region
      $region21: #{bottleneck_forward.5} parent=11 // pred_check
        %p212 = pneg %p102
      $region22: #{bottleneck_forward.5} parent=11 // pred_check_branch
        %214 = sbr.rel (%p212) target = $region24
      $region23: #{bottleneck_forward.5} parent=11 // pred_region
        _
      $region24: #{bottleneck_forward.5} parent=11 // pred_fallthru
        _
      // Predicated region
      $region25: #{bottleneck_forward.5} parent=11 // pred_check
        %p215 = pneg %p123
      $region26: #{bottleneck_forward.5} parent=11 // pred_check_branch
        %217 = sbr.rel (%p215) target = $region28
      $region27: #{bottleneck_forward.5} parent=11 // pred_region
        _
      $region28: #{bottleneck_forward.5} parent=11 // pred_fallthru
        _
      // Predicated region
      $region29: #{bottleneck_forward.5} parent=11 // pred_check
        %p218 = pneg %p144
      $region30: #{bottleneck_forward.5} parent=11 // pred_check_branch
        %220 = sbr.rel (%p218) target = $region32
      $region31: #{bottleneck_forward.5} parent=11 // pred_region
        _
      $region32: #{bottleneck_forward.5} parent=11 // pred_fallthru
        _
      // Predicated region
      $region33: #{bottleneck_forward.5} parent=11 // pred_check
        %p221 = pneg %p165
      $region34: #{bottleneck_forward.5} parent=11 // pred_check_branch
        %223 = sbr.rel (%p221) target = $region36
      $region35: #{bottleneck_forward.5} parent=11 // pred_region
        _
      $region36: #{bottleneck_forward.5} parent=11 // pred_fallthru
        _
    $region12: #{bottleneck_forward.5} parent=5 // pred_fallthru
      _
    %p224 = scmp.lt.s32.totalorder %s13, 2
    // Predicated region
    $region37: #{bottleneck_forward.5} parent=5 // pred_check
      %p225 = pneg %p224
    $region38: #{bottleneck_forward.5} parent=5 // pred_check_branch
      %227 = sbr.rel (%p225) target = $region40
    $region39: #{bottleneck_forward.5} parent=5 // pred_region
      // Predicated region
      $region41: #{bottleneck_forward.5} parent=39 // pred_check
        %p228 = pneg %p33
      $region42: #{bottleneck_forward.5} parent=39 // pred_check_branch
        %230 = sbr.rel (%p228) target = $region44
      $region43: #{bottleneck_forward.5} parent=39 // pred_region
        %p231 = scmp.lt.s32.totalorder %s13, 1
        %s232 = scalar_select %p231, %s13, 1
        %s233 = smul.addr %s232, 32
        %s234 = smul.addr %s233, 8
        %s235 = scalar_lea.vmem %s0, %s234
      $region44: #{bottleneck_forward.5} parent=39 // pred_fallthru
        _
    $region40: #{bottleneck_forward.5} parent=5 // pred_fallthru
      _
    %p236 = scmp.le.s32.totalorder 1, %s13
    %p237 = scmp.lt.s32.totalorder %s13, 3
    %p238 = pnand %p236, %p237
    %p239 = pneg %p238
    // Predicated region
    $region45: #{bottleneck_forward.5} parent=5 // pred_check
      _
    $region46: #{bottleneck_forward.5} parent=5 // pred_check_branch
      %241 = sbr.rel (%p238) target = $region48
    $region47: #{bottleneck_forward.5} parent=5 // pred_region
      %s242 = ssub.s32 %s13, 1
      %p243 = scmp.lt.s32.totalorder %s18, 1
      %s244 = scalar_select %p243, %s18, 1
      %s245 = smul.addr %s244, 32
      %s246 = smul.addr %s245, 8
      %s247 = scalar_lea.vmem %s0, %s246
      %p248 = pneg %p39
      %p249 = pneg %p36
      %p250 = pneg %p60
      %p251 = pneg %p57
      %p252 = pneg %p81
      %p253 = pneg %p78
      %p254 = pneg %p102
      %p255 = pneg %p99
      %p256 = pneg %p123
      %p257 = pneg %p120
      %p258 = pneg %p144
      %p259 = pneg %p141
      %p260 = pneg %p165
      %p261 = pneg %p162
      %p262 = pneg %p191
      %p263 = pneg %p188
      %p264 = scmp.lt.s32.totalorder %s18, 1
      %s265 = scalar_select %p264, %s18, 1
      %s266 = smul.addr %s265, 32
      %s267 = smul.addr %s266, 8
      %s268 = scalar_lea.vmem %s7, %s267
      %p269 = scmp.lt.s32.totalorder %s18, 1
      %s270 = scalar_select %p269, %s18, 1
      %s271 = smul.addr %s270, 32
      %s272 = smul.addr %s271, 8
      %s273 = scalar_lea.vmem %s0, %s272
      %p274 = scmp.lt.s32.totalorder %s18, 1
      %s275 = scalar_select %p274, %s18, 1
      %s276 = smul.addr %s275, 32
      %s277 = smul.addr %s276, 8
      %s278 = scalar_lea.vmem %s7, %s277
      %v280 = vld [vmem:[%s273] sm:$0xff]
      %v281 = vld [vmem:[%s273 + $0x8] sm:$0xff]
      %v282 = vld [vmem:[%s273 + $0x10] sm:$0xff]
      %v283 = vld [vmem:[%s273 + $0x18] sm:$0xff]
      %v284 = vld [vmem:[%s273 + $0x20] sm:$0xff]
      %v285 = vld [vmem:[%s273 + $0x28] sm:$0xff]
      %v286 = vld [vmem:[%s273 + $0x30] sm:$0xff]
      %v287 = vld [vmem:[%s273 + $0x38] sm:$0xff]
      %v288 = vld [vmem:[%s273 + $0x40] sm:$0xff]
      %v289 = vld [vmem:[%s273 + $0x48] sm:$0xff]
      %v290 = vld [vmem:[%s273 + $0x50] sm:$0xff]
      %v291 = vld [vmem:[%s273 + $0x58] sm:$0xff]
      %v292 = vld [vmem:[%s273 + $0x60] sm:$0xff]
      %v293 = vld [vmem:[%s273 + $0x68] sm:$0xff]
      %v294 = vld [vmem:[%s273 + $0x70] sm:$0xff]
      %v295 = vld [vmem:[%s273 + $0x78] sm:$0xff]
      %v296 = vld [vmem:[%s273 + $0x80] sm:$0xff]
      %v297 = vld [vmem:[%s273 + $0x88] sm:$0xff]
      %v298 = vld [vmem:[%s273 + $0x90] sm:$0xff]
      %v299 = vld [vmem:[%s273 + $0x98] sm:$0xff]
      %v300 = vld [vmem:[%s273 + $0xa0] sm:$0xff]
      %v301 = vld [vmem:[%s273 + $0xa8] sm:$0xff]
      %v302 = vld [vmem:[%s273 + $0xb0] sm:$0xff]
      %v303 = vld [vmem:[%s273 + $0xb8] sm:$0xff]
      %v304 = vld [vmem:[%s273 + $0xc0] sm:$0xff]
      %v305 = vld [vmem:[%s273 + $0xc8] sm:$0xff]
      %v306 = vld [vmem:[%s273 + $0xd0] sm:$0xff]
      %v307 = vld [vmem:[%s273 + $0xd8] sm:$0xff]
      %v308 = vld [vmem:[%s273 + $0xe0] sm:$0xff]
      %v309 = vld [vmem:[%s273 + $0xe8] sm:$0xff]
      %v310 = vld [vmem:[%s273 + $0xf0] sm:$0xff]
      %v311 = vld [vmem:[%s273 + $0xf8] sm:$0xff]
      %v312 = vpack.c.bf16 %v281, %v280
      %v313 = vpack.c.bf16 %v283, %v282
      %v314 = vpack.c.bf16 %v285, %v284
      %v315 = vpack.c.bf16 %v287, %v286
      %v316 = vpack.c.bf16 %v289, %v288
      %v317 = vpack.c.bf16 %v291, %v290
      %v318 = vpack.c.bf16 %v293, %v292
      %v319 = vpack.c.bf16 %v295, %v294
      %v320 = vpack.c.bf16 %v297, %v296
      %v321 = vpack.c.bf16 %v299, %v298
      %v322 = vpack.c.bf16 %v301, %v300
      %v323 = vpack.c.bf16 %v303, %v302
      %v324 = vpack.c.bf16 %v305, %v304
      %v325 = vpack.c.bf16 %v307, %v306
      %v326 = vpack.c.bf16 %v309, %v308
      %v327 = vpack.c.bf16 %v311, %v310
      %v328 = vld [vmem:[%s1] sm:$0x3]
      %vm329 = vcmask 31744
      %v331 = vsel %vm329, %v312, 0
      %v334 = vsel %vm329, %v313, 0
      %v337 = vsel %vm329, %v314, 0
      %v340 = vsel %vm329, %v315, 0
      %v343 = vsel %vm329, %v316, 0
      %v346 = vsel %vm329, %v317, 0
      %v349 = vsel %vm329, %v318, 0
      %v352 = vsel %vm329, %v319, 0
      %v355 = vsel %vm329, %v320, 0
      %v358 = vsel %vm329, %v321, 0
      %v361 = vsel %vm329, %v322, 0
      %v364 = vsel %vm329, %v323, 0
      %v367 = vsel %vm329, %v324, 0
      %v370 = vsel %vm329, %v325, 0
      %v373 = vsel %vm329, %v326, 0
      %v376 = vsel %vm329, %v327, 0
      %vm378 = vcmask 1041408
      %v380 = vsel %vm378, %v328, 0
      %382 = vmatprep.subr.bf16.mxu0 0
      %383 = vmatpush1.bf16.msra.mxu0 %v380
      %384 = vmatprep.subr.bf16.mxu0 0
      %385 = vmatpush1.bf16.msra.mxu0 0
      %386 = vmatprep.subr.bf16.mxu0 0
      %387 = vmatpush1.bf16.msra.mxu0 0
      %388 = vmatprep.subr.bf16.mxu0 0
      %389 = vmatpush1.bf16.msra.mxu0 0
      %390 = vmatprep.subr.bf16.mxu0 0
      %391 = vmatpush1.bf16.msra.mxu0 0
      %392 = vmatprep.subr.bf16.mxu0 0
      %393 = vmatpush1.bf16.msra.mxu0 0
      %394 = vmatprep.subr.bf16.mxu0 0
      %395 = vmatpush1.bf16.msra.mxu0 0
      %396 = vmatprep.subr.bf16.mxu0 0
      %397 = vmatpush1.bf16.msra.mxu0 0
      %398 = vmatprep.subr.bf16.mxu0 0
      %399 = vmatpush1.bf16.msra.mxu0 0
      %400 = vmatprep.subr.bf16.mxu0 0
      %401 = vmatpush1.bf16.msra.mxu0 0
      %402 = vmatprep.subr.bf16.mxu0 0
      %403 = vmatpush1.bf16.msra.mxu0 0
      %404 = vmatprep.subr.bf16.mxu0 0
      %405 = vmatpush1.bf16.msra.mxu0 0
      %406 = vmatprep.subr.bf16.mxu0 0
      %407 = vmatpush1.bf16.msra.mxu0 0
      %408 = vmatprep.subr.bf16.mxu0 0
      %409 = vmatpush1.bf16.msra.mxu0 0
      %410 = vmatprep.subr.bf16.mxu0 0
      %411 = vmatpush1.bf16.msra.mxu0 0
      %412 = vmatprep.subr.bf16.mxu0 0
      %413 = vmatpush1.bf16.msra.mxu0 0
      %414 = vmatprep.mubr.bf16.mxu0 0
      %415 = vmatmul.mubr.bf16.gmra.mrb[0].mxu0 %v331
      %v416 = vpop.f32.mrb[0].mxu0
      %v417 = vadd.f32 0.0, %v416
      %v418 = vpop.f32.mrb[0].mxu0
      %v419 = vpop.f32.mrb[0].mxu0
      %v420 = vadd.f32 0.0, %v419
      %v421 = vpop.f32.mrb[0].mxu0
      %422 = vmatprep.mubr.bf16.mxu0 0
      %423 = vmatmul.mubr.bf16.gmra.mrb[0].mxu0 %v334
      %v424 = vpop.f32.mrb[0].mxu0
      %v425 = vadd.f32 0.0, %v424
      %v426 = vpop.f32.mrb[0].mxu0
      %v427 = vpop.f32.mrb[0].mxu0
      %v428 = vadd.f32 0.0, %v427
      %v429 = vpop.f32.mrb[0].mxu0
      %430 = vmatprep.mubr.bf16.mxu0 0
      %431 = vmatmul.mubr.bf16.gmra.mrb[0].mxu0 %v337
      %v432 = vpop.f32.mrb[0].mxu0
      %v433 = vadd.f32 0.0, %v432
      %v434 = vpop.f32.mrb[0].mxu0
      %v435 = vpop.f32.mrb[0].mxu0
      %v436 = vadd.f32 0.0, %v435
      %v437 = vpop.f32.mrb[0].mxu0
      %438 = vmatprep.mubr.bf16.mxu0 0
      %439 = vmatmul.mubr.bf16.gmra.mrb[0].mxu0 %v340
      %v440 = vpop.f32.mrb[0].mxu0
      %v441 = vadd.f32 0.0, %v440
      %v442 = vpop.f32.mrb[0].mxu0
      %v443 = vpop.f32.mrb[0].mxu0
      %v444 = vadd.f32 0.0, %v443
      %v445 = vpop.f32.mrb[0].mxu0
      %446 = vmatprep.mubr.bf16.mxu0 0
      %447 = vmatmul.mubr.bf16.gmra.mrb[0].mxu0 %v343
      %v448 = vpop.f32.mrb[0].mxu0
      %v449 = vadd.f32 0.0, %v448
      %v450 = vpop.f32.mrb[0].mxu0
      %v451 = vpop.f32.mrb[0].mxu0
      %v452 = vadd.f32 0.0, %v451
      %v453 = vpop.f32.mrb[0].mxu0
      %454 = vmatprep.mubr.bf16.mxu0 0
      %455 = vmatmul.mubr.bf16.gmra.mrb[0].mxu0 %v346
      %v456 = vpop.f32.mrb[0].mxu0
      %v457 = vadd.f32 0.0, %v456
      %v458 = vpop.f32.mrb[0].mxu0
      %v459 = vpop.f32.mrb[0].mxu0
      %v460 = vadd.f32 0.0, %v459
      %v461 = vpop.f32.mrb[0].mxu0
      %462 = vmatprep.mubr.bf16.mxu0 0
      %463 = vmatmul.mubr.bf16.gmra.mrb[0].mxu0 %v349
      %v464 = vpop.f32.mrb[0].mxu0
      %v465 = vadd.f32 0.0, %v464
      %v466 = vpop.f32.mrb[0].mxu0
      %v467 = vpop.f32.mrb[0].mxu0
      %v468 = vadd.f32 0.0, %v467
      %v469 = vpop.f32.mrb[0].mxu0
      %470 = vmatprep.mubr.bf16.mxu0 0
      %471 = vmatmul.mubr.bf16.gmra.mrb[0].mxu0 %v352
      %v472 = vpop.f32.mrb[0].mxu0
      %v473 = vadd.f32 0.0, %v472
      %v474 = vpop.f32.mrb[0].mxu0
      %v475 = vpop.f32.mrb[0].mxu0
      %v476 = vadd.f32 0.0, %v475
      %v477 = vpop.f32.mrb[0].mxu0
      %478 = vmatprep.mubr.bf16.mxu0 0
      %479 = vmatmul.mubr.bf16.gmra.mrb[0].mxu0 %v355
      %v480 = vpop.f32.mrb[0].mxu0
      %v481 = vadd.f32 0.0, %v480
      %v482 = vpop.f32.mrb[0].mxu0
      %v483 = vpop.f32.mrb[0].mxu0
      %v484 = vadd.f32 0.0, %v483
      %v485 = vpop.f32.mrb[0].mxu0
      %486 = vmatprep.mubr.bf16.mxu0 0
      %487 = vmatmul.mubr.bf16.gmra.mrb[0].mxu0 %v358
      %v488 = vpop.f32.mrb[0].mxu0
      %v489 = vadd.f32 0.0, %v488
      %v490 = vpop.f32.mrb[0].mxu0
      %v491 = vpop.f32.mrb[0].mxu0
      %v492 = vadd.f32 0.0, %v491
      %v493 = vpop.f32.mrb[0].mxu0
      %494 = vmatprep.mubr.bf16.mxu0 0
      %495 = vmatmul.mubr.bf16.gmra.mrb[0].mxu0 %v361
      %v496 = vpop.f32.mrb[0].mxu0
      %v497 = vadd.f32 0.0, %v496
      %v498 = vpop.f32.mrb[0].mxu0
      %v499 = vpop.f32.mrb[0].mxu0
      %v500 = vadd.f32 0.0, %v499
      %v501 = vpop.f32.mrb[0].mxu0
      %502 = vmatprep.mubr.bf16.mxu0 0
      %503 = vmatmul.mubr.bf16.gmra.mrb[0].mxu0 %v364
      %v504 = vpop.f32.mrb[0].mxu0
      %v505 = vadd.f32 0.0, %v504
      %v506 = vpop.f32.mrb[0].mxu0
      %v507 = vpop.f32.mrb[0].mxu0
      %v508 = vadd.f32 0.0, %v507
      %v509 = vpop.f32.mrb[0].mxu0
      %510 = vmatprep.mubr.bf16.mxu0 0
      %511 = vmatmul.mubr.bf16.gmra.mrb[0].mxu0 %v367
      %v512 = vpop.f32.mrb[0].mxu0
      %v513 = vadd.f32 0.0, %v512
      %v514 = vpop.f32.mrb[0].mxu0
      %v515 = vpop.f32.mrb[0].mxu0
      %v516 = vadd.f32 0.0, %v515
      %v517 = vpop.f32.mrb[0].mxu0
      %518 = vmatprep.mubr.bf16.mxu0 0
      %519 = vmatmul.mubr.bf16.gmra.mrb[0].mxu0 %v370
      %v520 = vpop.f32.mrb[0].mxu0
      %v521 = vadd.f32 0.0, %v520
      %v522 = vpop.f32.mrb[0].mxu0
      %v523 = vpop.f32.mrb[0].mxu0
      %v524 = vadd.f32 0.0, %v523
      %v525 = vpop.f32.mrb[0].mxu0
      %526 = vmatprep.mubr.bf16.mxu0 0
      %527 = vmatmul.mubr.bf16.gmra.mrb[0].mxu0 %v373
      %v528 = vpop.f32.mrb[0].mxu0
      %v529 = vadd.f32 0.0, %v528
      %v530 = vpop.f32.mrb[0].mxu0
      %v531 = vpop.f32.mrb[0].mxu0
      %v532 = vadd.f32 0.0, %v531
      %v533 = vpop.f32.mrb[0].mxu0
      %534 = vmatprep.mubr.bf16.mxu0 0
      %535 = vmatmul.mubr.bf16.gmra.mrb[0].mxu0 %v376
      %v536 = vpop.f32.mrb[0].mxu0
      %v537 = vadd.f32 0.0, %v536
      %v538 = vpop.f32.mrb[0].mxu0
      %v539 = vpop.f32.mrb[0].mxu0
      %v540 = vadd.f32 0.0, %v539
      %v541 = vpop.f32.mrb[0].mxu0
      %542 = vdwg.mxu0
      %v543 = vld [vmem:[%s2] sm:$0x1]
      %v545 = vlaneseq
      %v546 = vshrl.u32 %v545, 7
      %v547 = vsub.s32 0, %v546
      %v548 = vrot.slane %v543, %v547
      %v550 = vmul.f32 %v417, %v548
      %v551 = vmul.f32 %v420, %v548
      %v552 = vmul.f32 %v425, %v548
      %v553 = vmul.f32 %v428, %v548
      %v554 = vmul.f32 %v433, %v548
      %v555 = vmul.f32 %v436, %v548
      %v556 = vmul.f32 %v441, %v548
      %v557 = vmul.f32 %v444, %v548
      %v558 = vmul.f32 %v449, %v548
      %v559 = vmul.f32 %v452, %v548
      %v560 = vmul.f32 %v457, %v548
      %v561 = vmul.f32 %v460, %v548
      %v562 = vmul.f32 %v465, %v548
      %v563 = vmul.f32 %v468, %v548
      %v564 = vmul.f32 %v473, %v548
      %v565 = vmul.f32 %v476, %v548
      %v566 = vmul.f32 %v481, %v548
      %v567 = vmul.f32 %v484, %v548
      %v568 = vmul.f32 %v489, %v548
      %v569 = vmul.f32 %v492, %v548
      %v570 = vmul.f32 %v497, %v548
      %v571 = vmul.f32 %v500, %v548
      %v572 = vmul.f32 %v505, %v548
      %v573 = vmul.f32 %v508, %v548
      %v574 = vmul.f32 %v513, %v548
      %v575 = vmul.f32 %v516, %v548
      %v576 = vmul.f32 %v521, %v548
      %v577 = vmul.f32 %v524, %v548
      %v578 = vmul.f32 %v529, %v548
      %v579 = vmul.f32 %v532, %v548
      %v580 = vmul.f32 %v537, %v548
      %v581 = vmul.f32 %v540, %v548
      %v582 = vld [vmem:[%s3] sm:$0x1]
      %v584 = vlaneseq
      %v585 = vshrl.u32 %v584, 7
      %v586 = vsub.s32 0, %v585
      %v587 = vrot.slane %v582, %v586
      %v589 = vadd.f32 %v550, %v587
      %v590 = vadd.f32 %v551, %v587
      %v591 = vadd.f32 %v552, %v587
      %v592 = vadd.f32 %v553, %v587
      %v593 = vadd.f32 %v554, %v587
      %v594 = vadd.f32 %v555, %v587
      %v595 = vadd.f32 %v556, %v587
      %v596 = vadd.f32 %v557, %v587
      %v597 = vadd.f32 %v558, %v587
      %v598 = vadd.f32 %v559, %v587
      %v599 = vadd.f32 %v560, %v587
      %v600 = vadd.f32 %v561, %v587
      %v601 = vadd.f32 %v562, %v587
      %v602 = vadd.f32 %v563, %v587
      %v603 = vadd.f32 %v564, %v587
      %v604 = vadd.f32 %v565, %v587
      %v605 = vadd.f32 %v566, %v587
      %v606 = vadd.f32 %v567, %v587
      %v607 = vadd.f32 %v568, %v587
      %v608 = vadd.f32 %v569, %v587
      %v609 = vadd.f32 %v570, %v587
      %v610 = vadd.f32 %v571, %v587
      %v611 = vadd.f32 %v572, %v587
      %v612 = vadd.f32 %v573, %v587
      %v613 = vadd.f32 %v574, %v587
      %v614 = vadd.f32 %v575, %v587
      %v615 = vadd.f32 %v576, %v587
      %v616 = vadd.f32 %v577, %v587
      %v617 = vadd.f32 %v578, %v587
      %v618 = vadd.f32 %v579, %v587
      %v619 = vadd.f32 %v580, %v587
      %v620 = vadd.f32 %v581, %v587
      %v621 = vmax.f32 %v589, 0.0
      %v622 = vmax.f32 %v590, 0.0
      %v623 = vmax.f32 %v591, 0.0
      %v624 = vmax.f32 %v592, 0.0
      %v625 = vmax.f32 %v593, 0.0
      %v626 = vmax.f32 %v594, 0.0
      %v627 = vmax.f32 %v595, 0.0
      %v628 = vmax.f32 %v596, 0.0
      %v629 = vmax.f32 %v597, 0.0
      %v630 = vmax.f32 %v598, 0.0
      %v631 = vmax.f32 %v599, 0.0
      %v632 = vmax.f32 %v600, 0.0
      %v633 = vmax.f32 %v601, 0.0
      %v634 = vmax.f32 %v602, 0.0
      %v635 = vmax.f32 %v603, 0.0
      %v636 = vmax.f32 %v604, 0.0
      %v637 = vmax.f32 %v605, 0.0
      %v638 = vmax.f32 %v606, 0.0
      %v639 = vmax.f32 %v607, 0.0
      %v640 = vmax.f32 %v608, 0.0
      %v641 = vmax.f32 %v609, 0.0
      %v642 = vmax.f32 %v610, 0.0
      %v643 = vmax.f32 %v611, 0.0
      %v644 = vmax.f32 %v612, 0.0
      %v645 = vmax.f32 %v613, 0.0
      %v646 = vmax.f32 %v614, 0.0
      %v647 = vmax.f32 %v615, 0.0
      %v648 = vmax.f32 %v616, 0.0
      %v649 = vmax.f32 %v617, 0.0
      %v650 = vmax.f32 %v618, 0.0
      %v651 = vmax.f32 %v619, 0.0
      %v652 = vmax.f32 %v620, 0.0
      %653 = vst.msk [vmem:[#allocation2] sm:$0xff] %vm329, 0.0
      %654 = vst.msk [vmem:[#allocation2 + $0x8] sm:$0xff] %vm329, 0.0
      %vm655 = vcmask 25600
      %656 = vst.msk [vmem:[#allocation2 + $0x10] sm:$0x3] %vm655, 0.0
      %657 = vst.msk [vmem:[#allocation2 + $0x18] sm:$0xff] %vm329, 0.0
      %658 = vst.msk [vmem:[#allocation2 + $0x20] sm:$0xff] %vm329, 0.0
      %659 = vst.msk [vmem:[#allocation2 + $0x28] sm:$0x3] %vm655, 0.0
      %660 = vst.msk [vmem:[#allocation2 + $0x30] sm:$0xff] %vm329, 0.0
      %661 = vst.msk [vmem:[#allocation2 + $0x38] sm:$0xff] %vm329, 0.0
      %662 = vst.msk [vmem:[#allocation2 + $0x40] sm:$0x3] %vm655, 0.0
      %663 = vst.msk [vmem:[#allocation2 + $0x48] sm:$0xff] %vm329, 0.0
      %664 = vst.msk [vmem:[#allocation2 + $0x50] sm:$0xff] %vm329, 0.0
      %665 = vst.msk [vmem:[#allocation2 + $0x58] sm:$0x3] %vm655, 0.0
      %666 = vst.msk [vmem:[#allocation2 + $0x60] sm:$0xff] %vm329, 0.0
      %667 = vst.msk [vmem:[#allocation2 + $0x68] sm:$0xff] %vm329, 0.0
      %668 = vst.msk [vmem:[#allocation2 + $0x70] sm:$0x3] %vm655, 0.0
      %669 = vst.msk [vmem:[#allocation2 + $0x78] sm:$0xff] %vm329, 0.0
      %670 = vst.msk [vmem:[#allocation2 + $0x80] sm:$0xff] %vm329, 0.0
      %671 = vst.msk [vmem:[#allocation2 + $0x88] sm:$0x3] %vm655, 0.0
      %672 = vst.msk [vmem:[#allocation2 + $0x90] sm:$0xff] %vm329, 0.0
      %673 = vst.msk [vmem:[#allocation2 + $0x98] sm:$0xff] %vm329, 0.0
      %674 = vst.msk [vmem:[#allocation2 + $0xa0] sm:$0x3] %vm655, 0.0
      %675 = vst.msk [vmem:[#allocation2 + $0xa8] sm:$0xff] %vm329, 0.0
      %676 = vst.msk [vmem:[#allocation2 + $0xb0] sm:$0xff] %vm329, 0.0
      %677 = vst.msk [vmem:[#allocation2 + $0xb8] sm:$0x3] %vm655, 0.0
      %678 = vst.msk [vmem:[#allocation2 + $0xc0] sm:$0xff] %vm329, 0.0
      %679 = vst.msk [vmem:[#allocation2 + $0xc8] sm:$0xff] %vm329, 0.0
      %680 = vst.msk [vmem:[#allocation2 + $0xd0] sm:$0x3] %vm655, 0.0
      %681 = vst.msk [vmem:[#allocation2 + $0xd8] sm:$0xff] %vm329, 0.0
      %682 = vst.msk [vmem:[#allocation2 + $0xe0] sm:$0xff] %vm329, 0.0
      %683 = vst.msk [vmem:[#allocation2 + $0xe8] sm:$0x3] %vm655, 0.0
      %684 = vst.msk [vmem:[#allocation2 + $0xf0] sm:$0xff] %vm329, 0.0
      %685 = vst.msk [vmem:[#allocation2 + $0xf8] sm:$0xff] %vm329, 0.0
      %686 = vst.msk [vmem:[#allocation2 + $0x100] sm:$0x3] %vm655, 0.0
      %687 = vst.msk [vmem:[#allocation2 + $0x108] sm:$0xff] %vm329, 0.0
      %688 = vst.msk [vmem:[#allocation2 + $0x110] sm:$0xff] %vm329, 0.0
      %689 = vst.msk [vmem:[#allocation2 + $0x118] sm:$0x3] %vm655, 0.0
      %690 = vst.msk [vmem:[#allocation2 + $0x120] sm:$0xff] %vm329, 0.0
      %691 = vst.msk [vmem:[#allocation2 + $0x128] sm:$0xff] %vm329, 0.0
      %692 = vst.msk [vmem:[#allocation2 + $0x130] sm:$0x3] %vm655, 0.0
      %693 = vst.msk [vmem:[#allocation2 + $0x138] sm:$0xff] %vm329, 0.0
      %694 = vst.msk [vmem:[#allocation2 + $0x140] sm:$0xff] %vm329, 0.0
      %695 = vst.msk [vmem:[#allocation2 + $0x148] sm:$0x3] %vm655, 0.0
      %696 = vst.msk [vmem:[#allocation2 + $0x150] sm:$0xff] %vm329, 0.0
      %697 = vst.msk [vmem:[#allocation2 + $0x158] sm:$0xff] %vm329, 0.0
      %698 = vst.msk [vmem:[#allocation2 + $0x160] sm:$0x3] %vm655, 0.0
      %699 = vst.msk [vmem:[#allocation2 + $0x168] sm:$0xff] %vm329, 0.0
      %700 = vst.msk [vmem:[#allocation2 + $0x170] sm:$0xff] %vm329, 0.0
      %701 = vst.msk [vmem:[#allocation2 + $0x178] sm:$0x3] %vm655, 0.0
      %702 = vst.msk [vmem:[#allocation2 + $0x180] sm:$0xff] %vm329, 0.0
      %703 = vst.msk [vmem:[#allocation2 + $0x188] sm:$0xff] %vm329, 0.0
      %704 = vst.msk [vmem:[#allocation2 + $0x190] sm:$0x3] %vm655, 0.0
      %705 = vst.msk [vmem:[#allocation2 + $0x198] sm:$0xff] %vm329, 0.0
      %706 = vst.msk [vmem:[#allocation2 + $0x1a0] sm:$0xff] %vm329, 0.0
      %707 = vst.msk [vmem:[#allocation2 + $0x1a8] sm:$0x3] %vm655, 0.0
      %s708 = scalar_lea.vmem [#allocation2], 24
      %709 = vst.msk [vmem:[%s708 + $0x1] sm:$0xff] %vm329, %v621
      %710 = vst.msk [vmem:[%s708 + $0x9] sm:$0xff] %vm329, %v622
      %711 = vst.msk [vmem:[%s708 + $0x19] sm:$0xff] %vm329, %v623
      %712 = vst.msk [vmem:[%s708 + $0x21] sm:$0xff] %vm329, %v624
      %713 = vst.msk [vmem:[%s708 + $0x31] sm:$0xff] %vm329, %v625
      %714 = vst.msk [vmem:[%s708 + $0x39] sm:$0xff] %vm329, %v626
      %715 = vst.msk [vmem:[%s708 + $0x49] sm:$0xff] %vm329, %v627
      %716 = vst.msk [vmem:[%s708 + $0x51] sm:$0xff] %vm329, %v628
      %717 = vst.msk [vmem:[%s708 + $0x61] sm:$0xff] %vm329, %v629
      %718 = vst.msk [vmem:[%s708 + $0x69] sm:$0xff] %vm329, %v630
      %719 = vst.msk [vmem:[%s708 + $0x79] sm:$0xff] %vm329, %v631
      %720 = vst.msk [vmem:[%s708 + $0x81] sm:$0xff] %vm329, %v632
      %721 = vst.msk [vmem:[%s708 + $0x91] sm:$0xff] %vm329, %v633
      %722 = vst.msk [vmem:[%s708 + $0x99] sm:$0xff] %vm329, %v634
      %723 = vst.msk [vmem:[%s708 + $0xa9] sm:$0xff] %vm329, %v635
      %724 = vst.msk [vmem:[%s708 + $0xb1] sm:$0xff] %vm329, %v636
      %725 = vst.msk [vmem:[%s708 + $0xc1] sm:$0xff] %vm329, %v637
      %726 = vst.msk [vmem:[%s708 + $0xc9] sm:$0xff] %vm329, %v638
      %727 = vst.msk [vmem:[%s708 + $0xd9] sm:$0xff] %vm329, %v639
      %728 = vst.msk [vmem:[%s708 + $0xe1] sm:$0xff] %vm329, %v640
      %729 = vst.msk [vmem:[%s708 + $0xf1] sm:$0xff] %vm329, %v641
      %730 = vst.msk [vmem:[%s708 + $0xf9] sm:$0xff] %vm329, %v642
      %731 = vst.msk [vmem:[%s708 + $0x109] sm:$0xff] %vm329, %v643
      %732 = vst.msk [vmem:[%s708 + $0x111] sm:$0xff] %vm329, %v644
      %733 = vst.msk [vmem:[%s708 + $0x121] sm:$0xff] %vm329, %v645
      %734 = vst.msk [vmem:[%s708 + $0x129] sm:$0xff] %vm329, %v646
      %735 = vst.msk [vmem:[%s708 + $0x139] sm:$0xff] %vm329, %v647
      %736 = vst.msk [vmem:[%s708 + $0x141] sm:$0xff] %vm329, %v648
      %737 = vst.msk [vmem:[%s708 + $0x151] sm:$0xff] %vm329, %v649
      %738 = vst.msk [vmem:[%s708 + $0x159] sm:$0xff] %vm329, %v650
      %739 = vst.msk [vmem:[%s708 + $0x169] sm:$0xff] %vm329, %v651
      %740 = vst.msk [vmem:[%s708 + $0x171] sm:$0xff] %vm329, %v652
      %v741 = vld [vmem:[#allocation2] sm:$0xff]
      %v742 = vld [vmem:[#allocation2 + $0x8] sm:$0xff]
      %v743 = vld [vmem:[#allocation2 + $0x18] sm:$0xff]
      %v744 = vld [vmem:[#allocation2 + $0x20] sm:$0xff]
      %v745 = vld [vmem:[#allocation2 + $0x30] sm:$0xff]
      %v746 = vld [vmem:[#allocation2 + $0x38] sm:$0xff]
      %v747 = vld [vmem:[#allocation2 + $0x48] sm:$0xff]
      %v748 = vld [vmem:[#allocation2 + $0x50] sm:$0xff]
      %v749 = vld [vmem:[#allocation2 + $0x60] sm:$0xff]
      %v750 = vld [vmem:[#allocation2 + $0x68] sm:$0xff]
      %v751 = vld [vmem:[#allocation2 + $0x78] sm:$0xff]
      %v752 = vld [vmem:[#allocation2 + $0x80] sm:$0xff]
      %v753 = vld [vmem:[#allocation2 + $0x90] sm:$0xff]
      %v754 = vld [vmem:[#allocation2 + $0x98] sm:$0xff]
      %v755 = vld [vmem:[#allocation2 + $0xa8] sm:$0xff]
      %v756 = vld [vmem:[#allocation2 + $0xb0] sm:$0xff]
      %v757 = vld [vmem:[#allocation2 + $0xc0] sm:$0xff]
      %v758 = vld [vmem:[#allocation2 + $0xc8] sm:$0xff]
      %v759 = vld [vmem:[#allocation2 + $0xd8] sm:$0xff]
      %v760 = vld [vmem:[#allocation2 + $0xe0] sm:$0xff]
      %v761 = vld [vmem:[#allocation2 + $0xf0] sm:$0xff]
      %v762 = vld [vmem:[#allocation2 + $0xf8] sm:$0xff]
      %v763 = vld [vmem:[#allocation2 + $0x108] sm:$0xff]
      %v764 = vld [vmem:[#allocation2 + $0x110] sm:$0xff]
      %v765 = vld [vmem:[#allocation2 + $0x120] sm:$0xff]
      %v766 = vld [vmem:[#allocation2 + $0x128] sm:$0xff]
      %v767 = vld [vmem:[#allocation2 + $0x138] sm:$0xff]
      %v768 = vld [vmem:[#allocation2 + $0x140] sm:$0xff]
      %v769 = vld [vmem:[#allocation2 + $0x150] sm:$0xff]
      %v770 = vld [vmem:[#allocation2 + $0x158] sm:$0xff]
      %v771 = vld [vmem:[#allocation2 + $0x168] sm:$0xff]
      %v772 = vld [vmem:[#allocation2 + $0x170] sm:$0xff]
      %v773 = vpack.c.bf16 %v742, %v741
      %v774 = vpack.c.bf16 %v744, %v743
      %v775 = vpack.c.bf16 %v746, %v745
      %v776 = vpack.c.bf16 %v748, %v747
      %v777 = vpack.c.bf16 %v750, %v749
      %v778 = vpack.c.bf16 %v752, %v751
      %v779 = vpack.c.bf16 %v754, %v753
      %v780 = vpack.c.bf16 %v756, %v755
      %v781 = vpack.c.bf16 %v758, %v757
      %v782 = vpack.c.bf16 %v760, %v759
      %v783 = vpack.c.bf16 %v762, %v761
      %v784 = vpack.c.bf16 %v764, %v763
      %v785 = vpack.c.bf16 %v766, %v765
      %v786 = vpack.c.bf16 %v768, %v767
      %v787 = vpack.c.bf16 %v770, %v769
      %v788 = vpack.c.bf16 %v772, %v771
      %789 = vst.msk [vmem:[#allocation3] sm:$0xff] %vm329, %v773
      %790 = vst.msk [vmem:[#allocation3 + $0x8] sm:$0xff] %vm329, %v774
      %791 = vst.msk [vmem:[#allocation3 + $0x10] sm:$0xff] %vm329, %v775
      %792 = vst.msk [vmem:[#allocation3 + $0x18] sm:$0xff] %vm329, %v776
      %793 = vst.msk [vmem:[#allocation3 + $0x20] sm:$0xff] %vm329, %v777
      %794 = vst.msk [vmem:[#allocation3 + $0x28] sm:$0xff] %vm329, %v778
      %795 = vst.msk [vmem:[#allocation3 + $0x30] sm:$0xff] %vm329, %v779
      %796 = vst.msk [vmem:[#allocation3 + $0x38] sm:$0xff] %vm329, %v780
      %797 = vst.msk [vmem:[#allocation3 + $0x40] sm:$0xff] %vm329, %v781
      %798 = vst.msk [vmem:[#allocation3 + $0x48] sm:$0xff] %vm329, %v782
      %799 = vst.msk [vmem:[#allocation3 + $0x50] sm:$0xff] %vm329, %v783
      %800 = vst.msk [vmem:[#allocation3 + $0x58] sm:$0xff] %vm329, %v784
      %801 = vst.msk [vmem:[#allocation3 + $0x60] sm:$0xff] %vm329, %v785
      %802 = vst.msk [vmem:[#allocation3 + $0x68] sm:$0xff] %vm329, %v786
      %803 = vst.msk [vmem:[#allocation3 + $0x70] sm:$0xff] %vm329, %v787
      %804 = vst.msk [vmem:[#allocation3 + $0x78] sm:$0xff] %vm329, %v788
      %v805 = vld [vmem:[#allocation2 + $0x1] sm:$0xff]
      %v806 = vld [vmem:[#allocation2 + $0x9] sm:$0xff]
      %v807 = vld [vmem:[#allocation2 + $0x19] sm:$0xff]
      %v808 = vld [vmem:[#allocation2 + $0x21] sm:$0xff]
      %v809 = vld [vmem:[#allocation2 + $0x31] sm:$0xff]
      %v810 = vld [vmem:[#allocation2 + $0x39] sm:$0xff]
      %v811 = vld [vmem:[#allocation2 + $0x49] sm:$0xff]
      %v812 = vld [vmem:[#allocation2 + $0x51] sm:$0xff]
      %v813 = vld [vmem:[#allocation2 + $0x61] sm:$0xff]
      %v814 = vld [vmem:[#allocation2 + $0x69] sm:$0xff]
      %v815 = vld [vmem:[#allocation2 + $0x79] sm:$0xff]
      %v816 = vld [vmem:[#allocation2 + $0x81] sm:$0xff]
      %v817 = vld [vmem:[#allocation2 + $0x91] sm:$0xff]
      %v818 = vld [vmem:[#allocation2 + $0x99] sm:$0xff]
      %v819 = vld [vmem:[#allocation2 + $0xa9] sm:$0xff]
      %v820 = vld [vmem:[#allocation2 + $0xb1] sm:$0xff]
      %v821 = vld [vmem:[#allocation2 + $0xc1] sm:$0xff]
      %v822 = vld [vmem:[#allocation2 + $0xc9] sm:$0xff]
      %v823 = vld [vmem:[#allocation2 + $0xd9] sm:$0xff]
      %v824 = vld [vmem:[#allocation2 + $0xe1] sm:$0xff]
      %v825 = vld [vmem:[#allocation2 + $0xf1] sm:$0xff]
      %v826 = vld [vmem:[#allocation2 + $0xf9] sm:$0xff]
      %v827 = vld [vmem:[#allocation2 + $0x109] sm:$0xff]
      %v828 = vld [vmem:[#allocation2 + $0x111] sm:$0xff]
      %v829 = vld [vmem:[#allocation2 + $0x121] sm:$0xff]
      %v830 = vld [vmem:[#allocation2 + $0x129] sm:$0xff]
      %v831 = vld [vmem:[#allocation2 + $0x139] sm:$0xff]
      %v832 = vld [vmem:[#allocation2 + $0x141] sm:$0xff]
      %v833 = vld [vmem:[#allocation2 + $0x151] sm:$0xff]
      %v834 = vld [vmem:[#allocation2 + $0x159] sm:$0xff]
      %v835 = vld [vmem:[#allocation2 + $0x169] sm:$0xff]
      %v836 = vld [vmem:[#allocation2 + $0x171] sm:$0xff]
      %v837 = vpack.c.bf16 %v806, %v805
      %v838 = vpack.c.bf16 %v808, %v807
      %v839 = vpack.c.bf16 %v810, %v809
      %v840 = vpack.c.bf16 %v812, %v811
      %v841 = vpack.c.bf16 %v814, %v813
      %v842 = vpack.c.bf16 %v816, %v815
      %v843 = vpack.c.bf16 %v818, %v817
      %v844 = vpack.c.bf16 %v820, %v819
      %v845 = vpack.c.bf16 %v822, %v821
      %v846 = vpack.c.bf16 %v824, %v823
      %v847 = vpack.c.bf16 %v826, %v825
      %v848 = vpack.c.bf16 %v828, %v827
      %v849 = vpack.c.bf16 %v830, %v829
      %v850 = vpack.c.bf16 %v832, %v831
      %v851 = vpack.c.bf16 %v834, %v833
      %v852 = vpack.c.bf16 %v836, %v835
      %869 = vrot.lane.b32.xlu0 %v837, 4
      %v870 = vpop.permute.xlu0 %869
      %871 = vrot.lane.b32.xlu0 %v838, 4
      %v872 = vpop.permute.xlu0 %871
      %873 = vrot.lane.b32.xlu0 %v839, 4
      %v874 = vpop.permute.xlu0 %873
      %875 = vrot.lane.b32.xlu0 %v840, 4
      %v876 = vpop.permute.xlu0 %875
      %877 = vrot.lane.b32.xlu0 %v841, 4
      %v878 = vpop.permute.xlu0 %877
      %879 = vrot.lane.b32.xlu0 %v842, 4
      %v880 = vpop.permute.xlu0 %879
      %881 = vrot.lane.b32.xlu0 %v843, 4
      %v882 = vpop.permute.xlu0 %881
      %883 = vrot.lane.b32.xlu0 %v844, 4
      %v884 = vpop.permute.xlu0 %883
      %885 = vrot.lane.b32.xlu0 %v845, 4
      %v886 = vpop.permute.xlu0 %885
      %887 = vrot.lane.b32.xlu0 %v846, 4
      %v888 = vpop.permute.xlu0 %887
      %889 = vrot.lane.b32.xlu0 %v847, 4
      %v890 = vpop.permute.xlu0 %889
      %891 = vrot.lane.b32.xlu0 %v848, 4
      %v892 = vpop.permute.xlu0 %891
      %893 = vrot.lane.b32.xlu0 %v849, 4
      %v894 = vpop.permute.xlu0 %893
      %895 = vrot.lane.b32.xlu0 %v850, 4
      %v896 = vpop.permute.xlu0 %895
      %897 = vrot.lane.b32.xlu0 %v851, 4
      %v898 = vpop.permute.xlu0 %897
      %899 = vrot.lane.b32.xlu0 %v852, 4
      %v900 = vpop.permute.xlu0 %899
      %vm917 = vcmask 64544
      %918 = vst.msk [vmem:[#allocation3] sm:$0xff] %vm917, %v870
      %919 = vst.msk [vmem:[#allocation3 + $0x8] sm:$0xff] %vm917, %v872
      %920 = vst.msk [vmem:[#allocation3 + $0x10] sm:$0xff] %vm917, %v874
      %921 = vst.msk [vmem:[#allocation3 + $0x18] sm:$0xff] %vm917, %v876
      %922 = vst.msk [vmem:[#allocation3 + $0x20] sm:$0xff] %vm917, %v878
      %923 = vst.msk [vmem:[#allocation3 + $0x28] sm:$0xff] %vm917, %v880
      %924 = vst.msk [vmem:[#allocation3 + $0x30] sm:$0xff] %vm917, %v882
      %925 = vst.msk [vmem:[#allocation3 + $0x38] sm:$0xff] %vm917, %v884
      %926 = vst.msk [vmem:[#allocation3 + $0x40] sm:$0xff] %vm917, %v886
      %927 = vst.msk [vmem:[#allocation3 + $0x48] sm:$0xff] %vm917, %v888
      %928 = vst.msk [vmem:[#allocation3 + $0x50] sm:$0xff] %vm917, %v890
      %929 = vst.msk [vmem:[#allocation3 + $0x58] sm:$0xff] %vm917, %v892
      %930 = vst.msk [vmem:[#allocation3 + $0x60] sm:$0xff] %vm917, %v894
      %931 = vst.msk [vmem:[#allocation3 + $0x68] sm:$0xff] %vm917, %v896
      %932 = vst.msk [vmem:[#allocation3 + $0x70] sm:$0xff] %vm917, %v898
      %933 = vst.msk [vmem:[#allocation3 + $0x78] sm:$0xff] %vm917, %v900
      %v934 = vld [vmem:[#allocation2 + $0x2] sm:$0xff]
      %v935 = vld [vmem:[#allocation2 + $0xa] sm:$0xff]
      %v936 = vld [vmem:[#allocation2 + $0x1a] sm:$0xff]
      %v937 = vld [vmem:[#allocation2 + $0x22] sm:$0xff]
      %v938 = vld [vmem:[#allocation2 + $0x32] sm:$0xff]
      %v939 = vld [vmem:[#allocation2 + $0x3a] sm:$0xff]
      %v940 = vld [vmem:[#allocation2 + $0x4a] sm:$0xff]
      %v941 = vld [vmem:[#allocation2 + $0x52] sm:$0xff]
      %v942 = vld [vmem:[#allocation2 + $0x62] sm:$0xff]
      %v943 = vld [vmem:[#allocation2 + $0x6a] sm:$0xff]
      %v944 = vld [vmem:[#allocation2 + $0x7a] sm:$0xff]
      %v945 = vld [vmem:[#allocation2 + $0x82] sm:$0xff]
      %v946 = vld [vmem:[#allocation2 + $0x92] sm:$0xff]
      %v947 = vld [vmem:[#allocation2 + $0x9a] sm:$0xff]
      %v948 = vld [vmem:[#allocation2 + $0xaa] sm:$0xff]
      %v949 = vld [vmem:[#allocation2 + $0xb2] sm:$0xff]
      %v950 = vld [vmem:[#allocation2 + $0xc2] sm:$0xff]
      %v951 = vld [vmem:[#allocation2 + $0xca] sm:$0xff]
      %v952 = vld [vmem:[#allocation2 + $0xda] sm:$0xff]
      %v953 = vld [vmem:[#allocation2 + $0xe2] sm:$0xff]
      %v954 = vld [vmem:[#allocation2 + $0xf2] sm:$0xff]
      %v955 = vld [vmem:[#allocation2 + $0xfa] sm:$0xff]
      %v956 = vld [vmem:[#allocation2 + $0x10a] sm:$0xff]
      %v957 = vld [vmem:[#allocation2 + $0x112] sm:$0xff]
      %v958 = vld [vmem:[#allocation2 + $0x122] sm:$0xff]
      %v959 = vld [vmem:[#allocation2 + $0x12a] sm:$0xff]
      %v960 = vld [vmem:[#allocation2 + $0x13a] sm:$0xff]
      %v961 = vld [vmem:[#allocation2 + $0x142] sm:$0xff]
      %v962 = vld [vmem:[#allocation2 + $0x152] sm:$0xff]
      %v963 = vld [vmem:[#allocation2 + $0x15a] sm:$0xff]
      %v964 = vld [vmem:[#allocation2 + $0x16a] sm:$0xff]
      %v965 = vld [vmem:[#allocation2 + $0x172] sm:$0xff]
      %v966 = vpack.c.bf16 %v935, %v934
      %v967 = vpack.c.bf16 %v937, %v936
      %v968 = vpack.c.bf16 %v939, %v938
      %v969 = vpack.c.bf16 %v941, %v940
      %v970 = vpack.c.bf16 %v943, %v942
      %v971 = vpack.c.bf16 %v945, %v944
      %v972 = vpack.c.bf16 %v947, %v946
      %v973 = vpack.c.bf16 %v949, %v948
      %v974 = vpack.c.bf16 %v951, %v950
      %v975 = vpack.c.bf16 %v953, %v952
      %v976 = vpack.c.bf16 %v955, %v954
      %v977 = vpack.c.bf16 %v957, %v956
      %v978 = vpack.c.bf16 %v959, %v958
      %v979 = vpack.c.bf16 %v961, %v960
      %v980 = vpack.c.bf16 %v963, %v962
      %v981 = vpack.c.bf16 %v965, %v964
      %998 = vrot.lane.b32.xlu0 %v966, 8
      %v999 = vpop.permute.xlu0 %998
      %1000 = vrot.lane.b32.xlu0 %v967, 8
      %v1001 = vpop.permute.xlu0 %1000
      %1002 = vrot.lane.b32.xlu0 %v968, 8
      %v1003 = vpop.permute.xlu0 %1002
      %1004 = vrot.lane.b32.xlu0 %v969, 8
      %v1005 = vpop.permute.xlu0 %1004
      %1006 = vrot.lane.b32.xlu0 %v970, 8
      %v1007 = vpop.permute.xlu0 %1006
      %1008 = vrot.lane.b32.xlu0 %v971, 8
      %v1009 = vpop.permute.xlu0 %1008
      %1010 = vrot.lane.b32.xlu0 %v972, 8
      %v1011 = vpop.permute.xlu0 %1010
      %1012 = vrot.lane.b32.xlu0 %v973, 8
      %v1013 = vpop.permute.xlu0 %1012
      %1014 = vrot.lane.b32.xlu0 %v974, 8
      %v1015 = vpop.permute.xlu0 %1014
      %1016 = vrot.lane.b32.xlu0 %v975, 8
      %v1017 = vpop.permute.xlu0 %1016
      %1018 = vrot.lane.b32.xlu0 %v976, 8
      %v1019 = vpop.permute.xlu0 %1018
      %1020 = vrot.lane.b32.xlu0 %v977, 8
      %v1021 = vpop.permute.xlu0 %1020
      %1022 = vrot.lane.b32.xlu0 %v978, 8
      %v1023 = vpop.permute.xlu0 %1022
      %1024 = vrot.lane.b32.xlu0 %v979, 8
      %v1025 = vpop.permute.xlu0 %1024
      %1026 = vrot.lane.b32.xlu0 %v980, 8
      %v1027 = vpop.permute.xlu0 %1026
      %1028 = vrot.lane.b32.xlu0 %v981, 8
      %v1029 = vpop.permute.xlu0 %1028
      %vm1046 = vcmask 97344
      %1047 = vst.msk [vmem:[#allocation3] sm:$0xff] %vm1046, %v999
      %1048 = vst.msk [vmem:[#allocation3 + $0x8] sm:$0xff] %vm1046, %v1001
      %1049 = vst.msk [vmem:[#allocation3 + $0x10] sm:$0xff] %vm1046, %v1003
      %1050 = vst.msk [vmem:[#allocation3 + $0x18] sm:$0xff] %vm1046, %v1005
      %1051 = vst.msk [vmem:[#allocation3 + $0x20] sm:$0xff] %vm1046, %v1007
      %1052 = vst.msk [vmem:[#allocation3 + $0x28] sm:$0xff] %vm1046, %v1009
      %1053 = vst.msk [vmem:[#allocation3 + $0x30] sm:$0xff] %vm1046, %v1011
      %1054 = vst.msk [vmem:[#allocation3 + $0x38] sm:$0xff] %vm1046, %v1013
      %1055 = vst.msk [vmem:[#allocation3 + $0x40] sm:$0xff] %vm1046, %v1015
      %1056 = vst.msk [vmem:[#allocation3 + $0x48] sm:$0xff] %vm1046, %v1017
      %1057 = vst.msk [vmem:[#allocation3 + $0x50] sm:$0xff] %vm1046, %v1019
      %1058 = vst.msk [vmem:[#allocation3 + $0x58] sm:$0xff] %vm1046, %v1021
      %1059 = vst.msk [vmem:[#allocation3 + $0x60] sm:$0xff] %vm1046, %v1023
      %1060 = vst.msk [vmem:[#allocation3 + $0x68] sm:$0xff] %vm1046, %v1025
      %1061 = vst.msk [vmem:[#allocation3 + $0x70] sm:$0xff] %vm1046, %v1027
      %1062 = vst.msk [vmem:[#allocation3 + $0x78] sm:$0xff] %vm1046, %v1029
      %v1063 = vld [vmem:[%s708] sm:$0xff]
      %v1064 = vld [vmem:[%s708 + $0x8] sm:$0xff]
      %v1065 = vld [vmem:[%s708 + $0x18] sm:$0xff]
      %v1066 = vld [vmem:[%s708 + $0x20] sm:$0xff]
      %v1067 = vld [vmem:[%s708 + $0x30] sm:$0xff]
      %v1068 = vld [vmem:[%s708 + $0x38] sm:$0xff]
      %v1069 = vld [vmem:[%s708 + $0x48] sm:$0xff]
      %v1070 = vld [vmem:[%s708 + $0x50] sm:$0xff]
      %v1071 = vld [vmem:[%s708 + $0x60] sm:$0xff]
      %v1072 = vld [vmem:[%s708 + $0x68] sm:$0xff]
      %v1073 = vld [vmem:[%s708 + $0x78] sm:$0xff]
      %v1074 = vld [vmem:[%s708 + $0x80] sm:$0xff]
      %v1075 = vld [vmem:[%s708 + $0x90] sm:$0xff]
      %v1076 = vld [vmem:[%s708 + $0x98] sm:$0xff]
      %v1077 = vld [vmem:[%s708 + $0xa8] sm:$0xff]
      %v1078 = vld [vmem:[%s708 + $0xb0] sm:$0xff]
      %v1079 = vld [vmem:[%s708 + $0xc0] sm:$0xff]
      %v1080 = vld [vmem:[%s708 + $0xc8] sm:$0xff]
      %v1081 = vld [vmem:[%s708 + $0xd8] sm:$0xff]
      %v1082 = vld [vmem:[%s708 + $0xe0] sm:$0xff]
      %v1083 = vld [vmem:[%s708 + $0xf0] sm:$0xff]
      %v1084 = vld [vmem:[%s708 + $0xf8] sm:$0xff]
      %v1085 = vld [vmem:[%s708 + $0x108] sm:$0xff]
      %v1086 = vld [vmem:[%s708 + $0x110] sm:$0xff]
      %v1087 = vld [vmem:[%s708 + $0x120] sm:$0xff]
      %v1088 = vld [vmem:[%s708 + $0x128] sm:$0xff]
      %v1089 = vld [vmem:[%s708 + $0x138] sm:$0xff]
      %v1090 = vld [vmem:[%s708 + $0x140] sm:$0xff]
      %v1091 = vld [vmem:[%s708 + $0x150] sm:$0xff]
      %v1092 = vld [vmem:[%s708 + $0x158] sm:$0xff]
      %v1093 = vld [vmem:[%s708 + $0x168] sm:$0xff]
      %v1094 = vld [vmem:[%s708 + $0x170] sm:$0xff]
      %v1095 = vpack.c.bf16 %v1064, %v1063
      %v1096 = vpack.c.bf16 %v1066, %v1065
      %v1097 = vpack.c.bf16 %v1068, %v1067
      %v1098 = vpack.c.bf16 %v1070, %v1069
      %v1099 = vpack.c.bf16 %v1072, %v1071
      %v1100 = vpack.c.bf16 %v1074, %v1073
      %v1101 = vpack.c.bf16 %v1076, %v1075
      %v1102 = vpack.c.bf16 %v1078, %v1077
      %v1103 = vpack.c.bf16 %v1080, %v1079
      %v1104 = vpack.c.bf16 %v1082, %v1081
      %v1105 = vpack.c.bf16 %v1084, %v1083
      %v1106 = vpack.c.bf16 %v1086, %v1085
      %v1107 = vpack.c.bf16 %v1088, %v1087
      %v1108 = vpack.c.bf16 %v1090, %v1089
      %v1109 = vpack.c.bf16 %v1092, %v1091
      %v1110 = vpack.c.bf16 %v1094, %v1093
      %1127 = vrot.lane.b32.xlu0 %v1095, 12
      %v1128 = vpop.permute.xlu0 %1127
      %1129 = vrot.lane.b32.xlu0 %v1096, 12
      %v1130 = vpop.permute.xlu0 %1129
      %1131 = vrot.lane.b32.xlu0 %v1097, 12
      %v1132 = vpop.permute.xlu0 %1131
      %1133 = vrot.lane.b32.xlu0 %v1098, 12
      %v1134 = vpop.permute.xlu0 %1133
      %1135 = vrot.lane.b32.xlu0 %v1099, 12
      %v1136 = vpop.permute.xlu0 %1135
      %1137 = vrot.lane.b32.xlu0 %v1100, 12
      %v1138 = vpop.permute.xlu0 %1137
      %1139 = vrot.lane.b32.xlu0 %v1101, 12
      %v1140 = vpop.permute.xlu0 %1139
      %1141 = vrot.lane.b32.xlu0 %v1102, 12
      %v1142 = vpop.permute.xlu0 %1141
      %1143 = vrot.lane.b32.xlu0 %v1103, 12
      %v1144 = vpop.permute.xlu0 %1143
      %1145 = vrot.lane.b32.xlu0 %v1104, 12
      %v1146 = vpop.permute.xlu0 %1145
      %1147 = vrot.lane.b32.xlu0 %v1105, 12
      %v1148 = vpop.permute.xlu0 %1147
      %1149 = vrot.lane.b32.xlu0 %v1106, 12
      %v1150 = vpop.permute.xlu0 %1149
      %1151 = vrot.lane.b32.xlu0 %v1107, 12
      %v1152 = vpop.permute.xlu0 %1151
      %1153 = vrot.lane.b32.xlu0 %v1108, 12
      %v1154 = vpop.permute.xlu0 %1153
      %1155 = vrot.lane.b32.xlu0 %v1109, 12
      %v1156 = vpop.permute.xlu0 %1155
      %1157 = vrot.lane.b32.xlu0 %v1110, 12
      %v1158 = vpop.permute.xlu0 %1157
      %vm1175 = vcmask 130144
      %1176 = vst.msk [vmem:[#allocation3] sm:$0xff] %vm1175, %v1128
      %1177 = vst.msk [vmem:[#allocation3 + $0x8] sm:$0xff] %vm1175, %v1130
      %1178 = vst.msk [vmem:[#allocation3 + $0x10] sm:$0xff] %vm1175, %v1132
      %1179 = vst.msk [vmem:[#allocation3 + $0x18] sm:$0xff] %vm1175, %v1134
      %1180 = vst.msk [vmem:[#allocation3 + $0x20] sm:$0xff] %vm1175, %v1136
      %1181 = vst.msk [vmem:[#allocation3 + $0x28] sm:$0xff] %vm1175, %v1138
      %1182 = vst.msk [vmem:[#allocation3 + $0x30] sm:$0xff] %vm1175, %v1140
      %1183 = vst.msk [vmem:[#allocation3 + $0x38] sm:$0xff] %vm1175, %v1142
      %1184 = vst.msk [vmem:[#allocation3 + $0x40] sm:$0xff] %vm1175, %v1144
      %1185 = vst.msk [vmem:[#allocation3 + $0x48] sm:$0xff] %vm1175, %v1146
      %1186 = vst.msk [vmem:[#allocation3 + $0x50] sm:$0xff] %vm1175, %v1148
      %1187 = vst.msk [vmem:[#allocation3 + $0x58] sm:$0xff] %vm1175, %v1150
      %1188 = vst.msk [vmem:[#allocation3 + $0x60] sm:$0xff] %vm1175, %v1152
      %1189 = vst.msk [vmem:[#allocation3 + $0x68] sm:$0xff] %vm1175, %v1154
      %1190 = vst.msk [vmem:[#allocation3 + $0x70] sm:$0xff] %vm1175, %v1156
      %1191 = vst.msk [vmem:[#allocation3 + $0x78] sm:$0xff] %vm1175, %v1158
      %v1192 = vld [vmem:[%s708 + $0x1] sm:$0xff]
      %v1193 = vld [vmem:[%s708 + $0x9] sm:$0xff]
      %v1194 = vld [vmem:[%s708 + $0x19] sm:$0xff]
      %v1195 = vld [vmem:[%s708 + $0x21] sm:$0xff]
      %v1196 = vld [vmem:[%s708 + $0x31] sm:$0xff]
      %v1197 = vld [vmem:[%s708 + $0x39] sm:$0xff]
      %v1198 = vld [vmem:[%s708 + $0x49] sm:$0xff]
      %v1199 = vld [vmem:[%s708 + $0x51] sm:$0xff]
      %v1200 = vld [vmem:[%s708 + $0x61] sm:$0xff]
      %v1201 = vld [vmem:[%s708 + $0x69] sm:$0xff]
      %v1202 = vld [vmem:[%s708 + $0x79] sm:$0xff]
      %v1203 = vld [vmem:[%s708 + $0x81] sm:$0xff]
      %v1204 = vld [vmem:[%s708 + $0x91] sm:$0xff]
      %v1205 = vld [vmem:[%s708 + $0x99] sm:$0xff]
      %v1206 = vld [vmem:[%s708 + $0xa9] sm:$0xff]
      %v1207 = vld [vmem:[%s708 + $0xb1] sm:$0xff]
      %v1208 = vld [vmem:[%s708 + $0xc1] sm:$0xff]
      %v1209 = vld [vmem:[%s708 + $0xc9] sm:$0xff]
      %v1210 = vld [vmem:[%s708 + $0xd9] sm:$0xff]
      %v1211 = vld [vmem:[%s708 + $0xe1] sm:$0xff]
      %v1212 = vld [vmem:[%s708 + $0xf1] sm:$0xff]
      %v1213 = vld [vmem:[%s708 + $0xf9] sm:$0xff]
      %v1214 = vld [vmem:[%s708 + $0x109] sm:$0xff]
      %v1215 = vld [vmem:[%s708 + $0x111] sm:$0xff]
      %v1216 = vld [vmem:[%s708 + $0x121] sm:$0xff]
      %v1217 = vld [vmem:[%s708 + $0x129] sm:$0xff]
      %v1218 = vld [vmem:[%s708 + $0x139] sm:$0xff]
      %v1219 = vld [vmem:[%s708 + $0x141] sm:$0xff]
      %v1220 = vld [vmem:[%s708 + $0x151] sm:$0xff]
      %v1221 = vld [vmem:[%s708 + $0x159] sm:$0xff]
      %v1222 = vld [vmem:[%s708 + $0x169] sm:$0xff]
      %v1223 = vld [vmem:[%s708 + $0x171] sm:$0xff]
      %v1224 = vpack.c.bf16 %v1193, %v1192
      %v1225 = vpack.c.bf16 %v1195, %v1194
      %v1226 = vpack.c.bf16 %v1197, %v1196
      %v1227 = vpack.c.bf16 %v1199, %v1198
      %v1228 = vpack.c.bf16 %v1201, %v1200
      %v1229 = vpack.c.bf16 %v1203, %v1202
      %v1230 = vpack.c.bf16 %v1205, %v1204
      %v1231 = vpack.c.bf16 %v1207, %v1206
      %v1232 = vpack.c.bf16 %v1209, %v1208
      %v1233 = vpack.c.bf16 %v1211, %v1210
      %v1234 = vpack.c.bf16 %v1213, %v1212
      %v1235 = vpack.c.bf16 %v1215, %v1214
      %v1236 = vpack.c.bf16 %v1217, %v1216
      %v1237 = vpack.c.bf16 %v1219, %v1218
      %v1238 = vpack.c.bf16 %v1221, %v1220
      %v1239 = vpack.c.bf16 %v1223, %v1222
      %1256 = vrot.lane.b32.xlu0 %v1224, 16
      %v1257 = vpop.permute.xlu0 %1256
      %1258 = vrot.lane.b32.xlu0 %v1225, 16
      %v1259 = vpop.permute.xlu0 %1258
      %1260 = vrot.lane.b32.xlu0 %v1226, 16
      %v1261 = vpop.permute.xlu0 %1260
      %1262 = vrot.lane.b32.xlu0 %v1227, 16
      %v1263 = vpop.permute.xlu0 %1262
      %1264 = vrot.lane.b32.xlu0 %v1228, 16
      %v1265 = vpop.permute.xlu0 %1264
      %1266 = vrot.lane.b32.xlu0 %v1229, 16
      %v1267 = vpop.permute.xlu0 %1266
      %1268 = vrot.lane.b32.xlu0 %v1230, 16
      %v1269 = vpop.permute.xlu0 %1268
      %1270 = vrot.lane.b32.xlu0 %v1231, 16
      %v1271 = vpop.permute.xlu0 %1270
      %1272 = vrot.lane.b32.xlu0 %v1232, 16
      %v1273 = vpop.permute.xlu0 %1272
      %1274 = vrot.lane.b32.xlu0 %v1233, 16
      %v1275 = vpop.permute.xlu0 %1274
      %1276 = vrot.lane.b32.xlu0 %v1234, 16
      %v1277 = vpop.permute.xlu0 %1276
      %1278 = vrot.lane.b32.xlu0 %v1235, 16
      %v1279 = vpop.permute.xlu0 %1278
      %1280 = vrot.lane.b32.xlu0 %v1236, 16
      %v1281 = vpop.permute.xlu0 %1280
      %1282 = vrot.lane.b32.xlu0 %v1237, 16
      %v1283 = vpop.permute.xlu0 %1282
      %1284 = vrot.lane.b32.xlu0 %v1238, 16
      %v1285 = vpop.permute.xlu0 %1284
      %1286 = vrot.lane.b32.xlu0 %v1239, 16
      %v1287 = vpop.permute.xlu0 %1286
      %vm1304 = vcmask 162944
      %1305 = vst.msk [vmem:[#allocation3] sm:$0xff] %vm1304, %v1257
      %1306 = vst.msk [vmem:[#allocation3 + $0x8] sm:$0xff] %vm1304, %v1259
      %1307 = vst.msk [vmem:[#allocation3 + $0x10] sm:$0xff] %vm1304, %v1261
      %1308 = vst.msk [vmem:[#allocation3 + $0x18] sm:$0xff] %vm1304, %v1263
      %1309 = vst.msk [vmem:[#allocation3 + $0x20] sm:$0xff] %vm1304, %v1265
      %1310 = vst.msk [vmem:[#allocation3 + $0x28] sm:$0xff] %vm1304, %v1267
      %1311 = vst.msk [vmem:[#allocation3 + $0x30] sm:$0xff] %vm1304, %v1269
      %1312 = vst.msk [vmem:[#allocation3 + $0x38] sm:$0xff] %vm1304, %v1271
      %1313 = vst.msk [vmem:[#allocation3 + $0x40] sm:$0xff] %vm1304, %v1273
      %1314 = vst.msk [vmem:[#allocation3 + $0x48] sm:$0xff] %vm1304, %v1275
      %1315 = vst.msk [vmem:[#allocation3 + $0x50] sm:$0xff] %vm1304, %v1277
      %1316 = vst.msk [vmem:[#allocation3 + $0x58] sm:$0xff] %vm1304, %v1279
      %1317 = vst.msk [vmem:[#allocation3 + $0x60] sm:$0xff] %vm1304, %v1281
      %1318 = vst.msk [vmem:[#allocation3 + $0x68] sm:$0xff] %vm1304, %v1283
      %1319 = vst.msk [vmem:[#allocation3 + $0x70] sm:$0xff] %vm1304, %v1285
      %1320 = vst.msk [vmem:[#allocation3 + $0x78] sm:$0xff] %vm1304, %v1287
      %v1321 = vld [vmem:[%s708 + $0x2] sm:$0xff]
      %v1322 = vld [vmem:[%s708 + $0xa] sm:$0xff]
      %v1323 = vld [vmem:[%s708 + $0x1a] sm:$0xff]
      %v1324 = vld [vmem:[%s708 + $0x22] sm:$0xff]
      %v1325 = vld [vmem:[%s708 + $0x32] sm:$0xff]
      %v1326 = vld [vmem:[%s708 + $0x3a] sm:$0xff]
      %v1327 = vld [vmem:[%s708 + $0x4a] sm:$0xff]
      %v1328 = vld [vmem:[%s708 + $0x52] sm:$0xff]
      %v1329 = vld [vmem:[%s708 + $0x62] sm:$0xff]
      %v1330 = vld [vmem:[%s708 + $0x6a] sm:$0xff]
      %v1331 = vld [vmem:[%s708 + $0x7a] sm:$0xff]
      %v1332 = vld [vmem:[%s708 + $0x82] sm:$0xff]
      %v1333 = vld [vmem:[%s708 + $0x92] sm:$0xff]
      %v1334 = vld [vmem:[%s708 + $0x9a] sm:$0xff]
      %v1335 = vld [vmem:[%s708 + $0xaa] sm:$0xff]
      %v1336 = vld [vmem:[%s708 + $0xb2] sm:$0xff]
      %v1337 = vld [vmem:[%s708 + $0xc2] sm:$0xff]
      %v1338 = vld [vmem:[%s708 + $0xca] sm:$0xff]
      %v1339 = vld [vmem:[%s708 + $0xda] sm:$0xff]
      %v1340 = vld [vmem:[%s708 + $0xe2] sm:$0xff]
      %v1341 = vld [vmem:[%s708 + $0xf2] sm:$0xff]
      %v1342 = vld [vmem:[%s708 + $0xfa] sm:$0xff]
      %v1343 = vld [vmem:[%s708 + $0x10a] sm:$0xff]
      %v1344 = vld [vmem:[%s708 + $0x112] sm:$0xff]
      %v1345 = vld [vmem:[%s708 + $0x122] sm:$0xff]
      %v1346 = vld [vmem:[%s708 + $0x12a] sm:$0xff]
      %v1347 = vld [vmem:[%s708 + $0x13a] sm:$0xff]
      %v1348 = vld [vmem:[%s708 + $0x142] sm:$0xff]
      %v1349 = vld [vmem:[%s708 + $0x152] sm:$0xff]
      %v1350 = vld [vmem:[%s708 + $0x15a] sm:$0xff]
      %v1351 = vld [vmem:[%s708 + $0x16a] sm:$0xff]
      %v1352 = vld [vmem:[%s708 + $0x172] sm:$0xff]
      %v1353 = vpack.c.bf16 %v1322, %v1321
      %v1354 = vpack.c.bf16 %v1324, %v1323
      %v1355 = vpack.c.bf16 %v1326, %v1325
      %v1356 = vpack.c.bf16 %v1328, %v1327
      %v1357 = vpack.c.bf16 %v1330, %v1329
      %v1358 = vpack.c.bf16 %v1332, %v1331
      %v1359 = vpack.c.bf16 %v1334, %v1333
      %v1360 = vpack.c.bf16 %v1336, %v1335
      %v1361 = vpack.c.bf16 %v1338, %v1337
      %v1362 = vpack.c.bf16 %v1340, %v1339
      %v1363 = vpack.c.bf16 %v1342, %v1341
      %v1364 = vpack.c.bf16 %v1344, %v1343
      %v1365 = vpack.c.bf16 %v1346, %v1345
      %v1366 = vpack.c.bf16 %v1348, %v1347
      %v1367 = vpack.c.bf16 %v1350, %v1349
      %v1368 = vpack.c.bf16 %v1352, %v1351
      %1385 = vrot.lane.b32.xlu0 %v1353, 20
      %v1386 = vpop.permute.xlu0 %1385
      %1387 = vrot.lane.b32.xlu0 %v1354, 20
      %v1388 = vpop.permute.xlu0 %1387
      %1389 = vrot.lane.b32.xlu0 %v1355, 20
      %v1390 = vpop.permute.xlu0 %1389
      %1391 = vrot.lane.b32.xlu0 %v1356, 20
      %v1392 = vpop.permute.xlu0 %1391
      %1393 = vrot.lane.b32.xlu0 %v1357, 20
      %v1394 = vpop.permute.xlu0 %1393
      %1395 = vrot.lane.b32.xlu0 %v1358, 20
      %v1396 = vpop.permute.xlu0 %1395
      %1397 = vrot.lane.b32.xlu0 %v1359, 20
      %v1398 = vpop.permute.xlu0 %1397
      %1399 = vrot.lane.b32.xlu0 %v1360, 20
      %v1400 = vpop.permute.xlu0 %1399
      %1401 = vrot.lane.b32.xlu0 %v1361, 20
      %v1402 = vpop.permute.xlu0 %1401
      %1403 = vrot.lane.b32.xlu0 %v1362, 20
      %v1404 = vpop.permute.xlu0 %1403
      %1405 = vrot.lane.b32.xlu0 %v1363, 20
      %v1406 = vpop.permute.xlu0 %1405
      %1407 = vrot.lane.b32.xlu0 %v1364, 20
      %v1408 = vpop.permute.xlu0 %1407
      %1409 = vrot.lane.b32.xlu0 %v1365, 20
      %v1410 = vpop.permute.xlu0 %1409
      %1411 = vrot.lane.b32.xlu0 %v1366, 20
      %v1412 = vpop.permute.xlu0 %1411
      %1413 = vrot.lane.b32.xlu0 %v1367, 20
      %v1414 = vpop.permute.xlu0 %1413
      %1415 = vrot.lane.b32.xlu0 %v1368, 20
      %v1416 = vpop.permute.xlu0 %1415
      %vm1433 = vcmask 195744
      %1434 = vst.msk [vmem:[#allocation3] sm:$0xff] %vm1433, %v1386
      %1435 = vst.msk [vmem:[#allocation3 + $0x8] sm:$0xff] %vm1433, %v1388
      %1436 = vst.msk [vmem:[#allocation3 + $0x10] sm:$0xff] %vm1433, %v1390
      %1437 = vst.msk [vmem:[#allocation3 + $0x18] sm:$0xff] %vm1433, %v1392
      %1438 = vst.msk [vmem:[#allocation3 + $0x20] sm:$0xff] %vm1433, %v1394
      %1439 = vst.msk [vmem:[#allocation3 + $0x28] sm:$0xff] %vm1433, %v1396
      %1440 = vst.msk [vmem:[#allocation3 + $0x30] sm:$0xff] %vm1433, %v1398
      %1441 = vst.msk [vmem:[#allocation3 + $0x38] sm:$0xff] %vm1433, %v1400
      %1442 = vst.msk [vmem:[#allocation3 + $0x40] sm:$0xff] %vm1433, %v1402
      %1443 = vst.msk [vmem:[#allocation3 + $0x48] sm:$0xff] %vm1433, %v1404
      %1444 = vst.msk [vmem:[#allocation3 + $0x50] sm:$0xff] %vm1433, %v1406
      %1445 = vst.msk [vmem:[#allocation3 + $0x58] sm:$0xff] %vm1433, %v1408
      %1446 = vst.msk [vmem:[#allocation3 + $0x60] sm:$0xff] %vm1433, %v1410
      %1447 = vst.msk [vmem:[#allocation3 + $0x68] sm:$0xff] %vm1433, %v1412
      %1448 = vst.msk [vmem:[#allocation3 + $0x70] sm:$0xff] %vm1433, %v1414
      %1449 = vst.msk [vmem:[#allocation3 + $0x78] sm:$0xff] %vm1433, %v1416
      %s1450 = scalar_lea.vmem [#allocation2], 48
      %v1451 = vld [vmem:[%s1450] sm:$0xff]
      %v1452 = vld [vmem:[%s1450 + $0x8] sm:$0xff]
      %v1453 = vld [vmem:[%s1450 + $0x18] sm:$0xff]
      %v1454 = vld [vmem:[%s1450 + $0x20] sm:$0xff]
      %v1455 = vld [vmem:[%s1450 + $0x30] sm:$0xff]
      %v1456 = vld [vmem:[%s1450 + $0x38] sm:$0xff]
      %v1457 = vld [vmem:[%s1450 + $0x48] sm:$0xff]
      %v1458 = vld [vmem:[%s1450 + $0x50] sm:$0xff]
      %v1459 = vld [vmem:[%s1450 + $0x60] sm:$0xff]
      %v1460 = vld [vmem:[%s1450 + $0x68] sm:$0xff]
      %v1461 = vld [vmem:[%s1450 + $0x78] sm:$0xff]
      %v1462 = vld [vmem:[%s1450 + $0x80] sm:$0xff]
      %v1463 = vld [vmem:[%s1450 + $0x90] sm:$0xff]
      %v1464 = vld [vmem:[%s1450 + $0x98] sm:$0xff]
      %v1465 = vld [vmem:[%s1450 + $0xa8] sm:$0xff]
      %v1466 = vld [vmem:[%s1450 + $0xb0] sm:$0xff]
      %v1467 = vld [vmem:[%s1450 + $0xc0] sm:$0xff]
      %v1468 = vld [vmem:[%s1450 + $0xc8] sm:$0xff]
      %v1469 = vld [vmem:[%s1450 + $0xd8] sm:$0xff]
      %v1470 = vld [vmem:[%s1450 + $0xe0] sm:$0xff]
      %v1471 = vld [vmem:[%s1450 + $0xf0] sm:$0xff]
      %v1472 = vld [vmem:[%s1450 + $0xf8] sm:$0xff]
      %v1473 = vld [vmem:[%s1450 + $0x108] sm:$0xff]
      %v1474 = vld [vmem:[%s1450 + $0x110] sm:$0xff]
      %v1475 = vld [vmem:[%s1450 + $0x120] sm:$0xff]
      %v1476 = vld [vmem:[%s1450 + $0x128] sm:$0xff]
      %v1477 = vld [vmem:[%s1450 + $0x138] sm:$0xff]
      %v1478 = vld [vmem:[%s1450 + $0x140] sm:$0xff]
      %v1479 = vld [vmem:[%s1450 + $0x150] sm:$0xff]
      %v1480 = vld [vmem:[%s1450 + $0x158] sm:$0xff]
      %v1481 = vld [vmem:[%s1450 + $0x168] sm:$0xff]
      %v1482 = vld [vmem:[%s1450 + $0x170] sm:$0xff]
      %v1483 = vpack.c.bf16 %v1452, %v1451
      %v1484 = vpack.c.bf16 %v1454, %v1453
      %v1485 = vpack.c.bf16 %v1456, %v1455
      %v1486 = vpack.c.bf16 %v1458, %v1457
      %v1487 = vpack.c.bf16 %v1460, %v1459
      %v1488 = vpack.c.bf16 %v1462, %v1461
      %v1489 = vpack.c.bf16 %v1464, %v1463
      %v1490 = vpack.c.bf16 %v1466, %v1465
      %v1491 = vpack.c.bf16 %v1468, %v1467
      %v1492 = vpack.c.bf16 %v1470, %v1469
      %v1493 = vpack.c.bf16 %v1472, %v1471
      %v1494 = vpack.c.bf16 %v1474, %v1473
      %v1495 = vpack.c.bf16 %v1476, %v1475
      %v1496 = vpack.c.bf16 %v1478, %v1477
      %v1497 = vpack.c.bf16 %v1480, %v1479
      %v1498 = vpack.c.bf16 %v1482, %v1481
      %1515 = vrot.lane.b32.xlu0 %v1483, 24
      %v1516 = vpop.permute.xlu0 %1515
      %1517 = vrot.lane.b32.xlu0 %v1484, 24
      %v1518 = vpop.permute.xlu0 %1517
      %1519 = vrot.lane.b32.xlu0 %v1485, 24
      %v1520 = vpop.permute.xlu0 %1519
      %1521 = vrot.lane.b32.xlu0 %v1486, 24
      %v1522 = vpop.permute.xlu0 %1521
      %1523 = vrot.lane.b32.xlu0 %v1487, 24
      %v1524 = vpop.permute.xlu0 %1523
      %1525 = vrot.lane.b32.xlu0 %v1488, 24
      %v1526 = vpop.permute.xlu0 %1525
      %1527 = vrot.lane.b32.xlu0 %v1489, 24
      %v1528 = vpop.permute.xlu0 %1527
      %1529 = vrot.lane.b32.xlu0 %v1490, 24
      %v1530 = vpop.permute.xlu0 %1529
      %1531 = vrot.lane.b32.xlu0 %v1491, 24
      %v1532 = vpop.permute.xlu0 %1531
      %1533 = vrot.lane.b32.xlu0 %v1492, 24
      %v1534 = vpop.permute.xlu0 %1533
      %1535 = vrot.lane.b32.xlu0 %v1493, 24
      %v1536 = vpop.permute.xlu0 %1535
      %1537 = vrot.lane.b32.xlu0 %v1494, 24
      %v1538 = vpop.permute.xlu0 %1537
      %1539 = vrot.lane.b32.xlu0 %v1495, 24
      %v1540 = vpop.permute.xlu0 %1539
      %1541 = vrot.lane.b32.xlu0 %v1496, 24
      %v1542 = vpop.permute.xlu0 %1541
      %1543 = vrot.lane.b32.xlu0 %v1497, 24
      %v1544 = vpop.permute.xlu0 %1543
      %1545 = vrot.lane.b32.xlu0 %v1498, 24
      %v1546 = vpop.permute.xlu0 %1545
      %vm1563 = vcmask 228544
      %1564 = vst.msk [vmem:[#allocation3] sm:$0xff] %vm1563, %v1516
      %1565 = vst.msk [vmem:[#allocation3 + $0x8] sm:$0xff] %vm1563, %v1518
      %1566 = vst.msk [vmem:[#allocation3 + $0x10] sm:$0xff] %vm1563, %v1520
      %1567 = vst.msk [vmem:[#allocation3 + $0x18] sm:$0xff] %vm1563, %v1522
      %1568 = vst.msk [vmem:[#allocation3 + $0x20] sm:$0xff] %vm1563, %v1524
      %1569 = vst.msk [vmem:[#allocation3 + $0x28] sm:$0xff] %vm1563, %v1526
      %1570 = vst.msk [vmem:[#allocation3 + $0x30] sm:$0xff] %vm1563, %v1528
      %1571 = vst.msk [vmem:[#allocation3 + $0x38] sm:$0xff] %vm1563, %v1530
      %1572 = vst.msk [vmem:[#allocation3 + $0x40] sm:$0xff] %vm1563, %v1532
      %1573 = vst.msk [vmem:[#allocation3 + $0x48] sm:$0xff] %vm1563, %v1534
      %1574 = vst.msk [vmem:[#allocation3 + $0x50] sm:$0xff] %vm1563, %v1536
      %1575 = vst.msk [vmem:[#allocation3 + $0x58] sm:$0xff] %vm1563, %v1538
      %1576 = vst.msk [vmem:[#allocation3 + $0x60] sm:$0xff] %vm1563, %v1540
      %1577 = vst.msk [vmem:[#allocation3 + $0x68] sm:$0xff] %vm1563, %v1542
      %1578 = vst.msk [vmem:[#allocation3 + $0x70] sm:$0xff] %vm1563, %v1544
      %1579 = vst.msk [vmem:[#allocation3 + $0x78] sm:$0xff] %vm1563, %v1546
      %v1580 = vld [vmem:[%s1450 + $0x1] sm:$0xff]
      %v1581 = vld [vmem:[%s1450 + $0x9] sm:$0xff]
      %v1582 = vld [vmem:[%s1450 + $0x19] sm:$0xff]
      %v1583 = vld [vmem:[%s1450 + $0x21] sm:$0xff]
      %v1584 = vld [vmem:[%s1450 + $0x31] sm:$0xff]
      %v1585 = vld [vmem:[%s1450 + $0x39] sm:$0xff]
      %v1586 = vld [vmem:[%s1450 + $0x49] sm:$0xff]
      %v1587 = vld [vmem:[%s1450 + $0x51] sm:$0xff]
      %v1588 = vld [vmem:[%s1450 + $0x61] sm:$0xff]
      %v1589 = vld [vmem:[%s1450 + $0x69] sm:$0xff]
      %v1590 = vld [vmem:[%s1450 + $0x79] sm:$0xff]
      %v1591 = vld [vmem:[%s1450 + $0x81] sm:$0xff]
      %v1592 = vld [vmem:[%s1450 + $0x91] sm:$0xff]
      %v1593 = vld [vmem:[%s1450 + $0x99] sm:$0xff]
      %v1594 = vld [vmem:[%s1450 + $0xa9] sm:$0xff]
      %v1595 = vld [vmem:[%s1450 + $0xb1] sm:$0xff]
      %v1596 = vld [vmem:[%s1450 + $0xc1] sm:$0xff]
      %v1597 = vld [vmem:[%s1450 + $0xc9] sm:$0xff]
      %v1598 = vld [vmem:[%s1450 + $0xd9] sm:$0xff]
      %v1599 = vld [vmem:[%s1450 + $0xe1] sm:$0xff]
      %v1600 = vld [vmem:[%s1450 + $0xf1] sm:$0xff]
      %v1601 = vld [vmem:[%s1450 + $0xf9] sm:$0xff]
      %v1602 = vld [vmem:[%s1450 + $0x109] sm:$0xff]
      %v1603 = vld [vmem:[%s1450 + $0x111] sm:$0xff]
      %v1604 = vld [vmem:[%s1450 + $0x121] sm:$0xff]
      %v1605 = vld [vmem:[%s1450 + $0x129] sm:$0xff]
      %v1606 = vld [vmem:[%s1450 + $0x139] sm:$0xff]
      %v1607 = vld [vmem:[%s1450 + $0x141] sm:$0xff]
      %v1608 = vld [vmem:[%s1450 + $0x151] sm:$0xff]
      %v1609 = vld [vmem:[%s1450 + $0x159] sm:$0xff]
      %v1610 = vld [vmem:[%s1450 + $0x169] sm:$0xff]
      %v1611 = vld [vmem:[%s1450 + $0x171] sm:$0xff]
      %v1612 = vpack.c.bf16 %v1581, %v1580
      %v1613 = vpack.c.bf16 %v1583, %v1582
      %v1614 = vpack.c.bf16 %v1585, %v1584
      %v1615 = vpack.c.bf16 %v1587, %v1586
      %v1616 = vpack.c.bf16 %v1589, %v1588
      %v1617 = vpack.c.bf16 %v1591, %v1590
      %v1618 = vpack.c.bf16 %v1593, %v1592
      %v1619 = vpack.c.bf16 %v1595, %v1594
      %v1620 = vpack.c.bf16 %v1597, %v1596
      %v1621 = vpack.c.bf16 %v1599, %v1598
      %v1622 = vpack.c.bf16 %v1601, %v1600
      %v1623 = vpack.c.bf16 %v1603, %v1602
      %v1624 = vpack.c.bf16 %v1605, %v1604
      %v1625 = vpack.c.bf16 %v1607, %v1606
      %v1626 = vpack.c.bf16 %v1609, %v1608
      %v1627 = vpack.c.bf16 %v1611, %v1610
      %1644 = vrot.lane.b32.xlu0 %v1612, 28
      %v1645 = vpop.permute.xlu0 %1644
      %1646 = vrot.lane.b32.xlu0 %v1613, 28
      %v1647 = vpop.permute.xlu0 %1646
      %1648 = vrot.lane.b32.xlu0 %v1614, 28
      %v1649 = vpop.permute.xlu0 %1648
      %1650 = vrot.lane.b32.xlu0 %v1615, 28
      %v1651 = vpop.permute.xlu0 %1650
      %1652 = vrot.lane.b32.xlu0 %v1616, 28
      %v1653 = vpop.permute.xlu0 %1652
      %1654 = vrot.lane.b32.xlu0 %v1617, 28
      %v1655 = vpop.permute.xlu0 %1654
      %1656 = vrot.lane.b32.xlu0 %v1618, 28
      %v1657 = vpop.permute.xlu0 %1656
      %1658 = vrot.lane.b32.xlu0 %v1619, 28
      %v1659 = vpop.permute.xlu0 %1658
      %1660 = vrot.lane.b32.xlu0 %v1620, 28
      %v1661 = vpop.permute.xlu0 %1660
      %1662 = vrot.lane.b32.xlu0 %v1621, 28
      %v1663 = vpop.permute.xlu0 %1662
      %1664 = vrot.lane.b32.xlu0 %v1622, 28
      %v1665 = vpop.permute.xlu0 %1664
      %1666 = vrot.lane.b32.xlu0 %v1623, 28
      %v1667 = vpop.permute.xlu0 %1666
      %1668 = vrot.lane.b32.xlu0 %v1624, 28
      %v1669 = vpop.permute.xlu0 %1668
      %1670 = vrot.lane.b32.xlu0 %v1625, 28
      %v1671 = vpop.permute.xlu0 %1670
      %1672 = vrot.lane.b32.xlu0 %v1626, 28
      %v1673 = vpop.permute.xlu0 %1672
      %1674 = vrot.lane.b32.xlu0 %v1627, 28
      %v1675 = vpop.permute.xlu0 %1674
      %vm1692 = vcmask 261344
      %1693 = vst.msk [vmem:[#allocation3] sm:$0xff] %vm1692, %v1645
      %1694 = vst.msk [vmem:[#allocation3 + $0x8] sm:$0xff] %vm1692, %v1647
      %1695 = vst.msk [vmem:[#allocation3 + $0x10] sm:$0xff] %vm1692, %v1649
      %1696 = vst.msk [vmem:[#allocation3 + $0x18] sm:$0xff] %vm1692, %v1651
      %1697 = vst.msk [vmem:[#allocation3 + $0x20] sm:$0xff] %vm1692, %v1653
      %1698 = vst.msk [vmem:[#allocation3 + $0x28] sm:$0xff] %vm1692, %v1655
      %1699 = vst.msk [vmem:[#allocation3 + $0x30] sm:$0xff] %vm1692, %v1657
      %1700 = vst.msk [vmem:[#allocation3 + $0x38] sm:$0xff] %vm1692, %v1659
      %1701 = vst.msk [vmem:[#allocation3 + $0x40] sm:$0xff] %vm1692, %v1661
      %1702 = vst.msk [vmem:[#allocation3 + $0x48] sm:$0xff] %vm1692, %v1663
      %1703 = vst.msk [vmem:[#allocation3 + $0x50] sm:$0xff] %vm1692, %v1665
      %1704 = vst.msk [vmem:[#allocation3 + $0x58] sm:$0xff] %vm1692, %v1667
      %1705 = vst.msk [vmem:[#allocation3 + $0x60] sm:$0xff] %vm1692, %v1669
      %1706 = vst.msk [vmem:[#allocation3 + $0x68] sm:$0xff] %vm1692, %v1671
      %1707 = vst.msk [vmem:[#allocation3 + $0x70] sm:$0xff] %vm1692, %v1673
      %1708 = vst.msk [vmem:[#allocation3 + $0x78] sm:$0xff] %vm1692, %v1675
      %v1709 = vld [vmem:[%s1450 + $0x2] sm:$0xff]
      %v1710 = vld [vmem:[%s1450 + $0xa] sm:$0xff]
      %v1711 = vld [vmem:[%s1450 + $0x1a] sm:$0xff]
      %v1712 = vld [vmem:[%s1450 + $0x22] sm:$0xff]
      %v1713 = vld [vmem:[%s1450 + $0x32] sm:$0xff]
      %v1714 = vld [vmem:[%s1450 + $0x3a] sm:$0xff]
      %v1715 = vld [vmem:[%s1450 + $0x4a] sm:$0xff]
      %v1716 = vld [vmem:[%s1450 + $0x52] sm:$0xff]
      %v1717 = vld [vmem:[%s1450 + $0x62] sm:$0xff]
      %v1718 = vld [vmem:[%s1450 + $0x6a] sm:$0xff]
      %v1719 = vld [vmem:[%s1450 + $0x7a] sm:$0xff]
      %v1720 = vld [vmem:[%s1450 + $0x82] sm:$0xff]
      %v1721 = vld [vmem:[%s1450 + $0x92] sm:$0xff]
      %v1722 = vld [vmem:[%s1450 + $0x9a] sm:$0xff]
      %v1723 = vld [vmem:[%s1450 + $0xaa] sm:$0xff]
      %v1724 = vld [vmem:[%s1450 + $0xb2] sm:$0xff]
      %v1725 = vld [vmem:[%s1450 + $0xc2] sm:$0xff]
      %v1726 = vld [vmem:[%s1450 + $0xca] sm:$0xff]
      %v1727 = vld [vmem:[%s1450 + $0xda] sm:$0xff]
      %v1728 = vld [vmem:[%s1450 + $0xe2] sm:$0xff]
      %v1729 = vld [vmem:[%s1450 + $0xf2] sm:$0xff]
      %v1730 = vld [vmem:[%s1450 + $0xfa] sm:$0xff]
      %v1731 = vld [vmem:[%s1450 + $0x10a] sm:$0xff]
      %v1732 = vld [vmem:[%s1450 + $0x112] sm:$0xff]
      %v1733 = vld [vmem:[%s1450 + $0x122] sm:$0xff]
      %v1734 = vld [vmem:[%s1450 + $0x12a] sm:$0xff]
      %v1735 = vld [vmem:[%s1450 + $0x13a] sm:$0xff]
      %v1736 = vld [vmem:[%s1450 + $0x142] sm:$0xff]
      %v1737 = vld [vmem:[%s1450 + $0x152] sm:$0xff]
      %v1738 = vld [vmem:[%s1450 + $0x15a] sm:$0xff]
      %v1739 = vld [vmem:[%s1450 + $0x16a] sm:$0xff]
      %v1740 = vld [vmem:[%s1450 + $0x172] sm:$0xff]
      %v1741 = vpack.c.bf16 %v1710, %v1709
      %v1742 = vpack.c.bf16 %v1712, %v1711
      %v1743 = vpack.c.bf16 %v1714, %v1713
      %v1744 = vpack.c.bf16 %v1716, %v1715
      %v1745 = vpack.c.bf16 %v1718, %v1717
      %v1746 = vpack.c.bf16 %v1720, %v1719
      %v1747 = vpack.c.bf16 %v1722, %v1721
      %v1748 = vpack.c.bf16 %v1724, %v1723
      %v1749 = vpack.c.bf16 %v1726, %v1725
      %v1750 = vpack.c.bf16 %v1728, %v1727
      %v1751 = vpack.c.bf16 %v1730, %v1729
      %v1752 = vpack.c.bf16 %v1732, %v1731
      %v1753 = vpack.c.bf16 %v1734, %v1733
      %v1754 = vpack.c.bf16 %v1736, %v1735
      %v1755 = vpack.c.bf16 %v1738, %v1737
      %v1756 = vpack.c.bf16 %v1740, %v1739
      %1773 = vrot.lane.b32.xlu0 %v1741, 32
      %v1774 = vpop.permute.xlu0 %1773
      %1775 = vrot.lane.b32.xlu0 %v1742, 32
      %v1776 = vpop.permute.xlu0 %1775
      %1777 = vrot.lane.b32.xlu0 %v1743, 32
      %v1778 = vpop.permute.xlu0 %1777
      %1779 = vrot.lane.b32.xlu0 %v1744, 32
      %v1780 = vpop.permute.xlu0 %1779
      %1781 = vrot.lane.b32.xlu0 %v1745, 32
      %v1782 = vpop.permute.xlu0 %1781
      %1783 = vrot.lane.b32.xlu0 %v1746, 32
      %v1784 = vpop.permute.xlu0 %1783
      %1785 = vrot.lane.b32.xlu0 %v1747, 32
      %v1786 = vpop.permute.xlu0 %1785
      %1787 = vrot.lane.b32.xlu0 %v1748, 32
      %v1788 = vpop.permute.xlu0 %1787
      %1789 = vrot.lane.b32.xlu0 %v1749, 32
      %v1790 = vpop.permute.xlu0 %1789
      %1791 = vrot.lane.b32.xlu0 %v1750, 32
      %v1792 = vpop.permute.xlu0 %1791
      %1793 = vrot.lane.b32.xlu0 %v1751, 32
      %v1794 = vpop.permute.xlu0 %1793
      %1795 = vrot.lane.b32.xlu0 %v1752, 32
      %v1796 = vpop.permute.xlu0 %1795
      %1797 = vrot.lane.b32.xlu0 %v1753, 32
      %v1798 = vpop.permute.xlu0 %1797
      %1799 = vrot.lane.b32.xlu0 %v1754, 32
      %v1800 = vpop.permute.xlu0 %1799
      %1801 = vrot.lane.b32.xlu0 %v1755, 32
      %v1802 = vpop.permute.xlu0 %1801
      %1803 = vrot.lane.b32.xlu0 %v1756, 32
      %v1804 = vpop.permute.xlu0 %1803
      %vm1821 = vcmask 294144
      %1822 = vst.msk [vmem:[#allocation3] sm:$0xff] %vm1821, %v1774
      %1823 = vst.msk [vmem:[#allocation3 + $0x8] sm:$0xff] %vm1821, %v1776
      %1824 = vst.msk [vmem:[#allocation3 + $0x10] sm:$0xff] %vm1821, %v1778
      %1825 = vst.msk [vmem:[#allocation3 + $0x18] sm:$0xff] %vm1821, %v1780
      %1826 = vst.msk [vmem:[#allocation3 + $0x20] sm:$0xff] %vm1821, %v1782
      %1827 = vst.msk [vmem:[#allocation3 + $0x28] sm:$0xff] %vm1821, %v1784
      %1828 = vst.msk [vmem:[#allocation3 + $0x30] sm:$0xff] %vm1821, %v1786
      %1829 = vst.msk [vmem:[#allocation3 + $0x38] sm:$0xff] %vm1821, %v1788
      %1830 = vst.msk [vmem:[#allocation3 + $0x40] sm:$0xff] %vm1821, %v1790
      %1831 = vst.msk [vmem:[#allocation3 + $0x48] sm:$0xff] %vm1821, %v1792
      %1832 = vst.msk [vmem:[#allocation3 + $0x50] sm:$0xff] %vm1821, %v1794
      %1833 = vst.msk [vmem:[#allocation3 + $0x58] sm:$0xff] %vm1821, %v1796
      %1834 = vst.msk [vmem:[#allocation3 + $0x60] sm:$0xff] %vm1821, %v1798
      %1835 = vst.msk [vmem:[#allocation3 + $0x68] sm:$0xff] %vm1821, %v1800
      %1836 = vst.msk [vmem:[#allocation3 + $0x70] sm:$0xff] %vm1821, %v1802
      %1837 = vst.msk [vmem:[#allocation3 + $0x78] sm:$0xff] %vm1821, %v1804
      %v1838 = vld [vmem:[#allocation3] sm:$0xff]
      %v1839 = vld [vmem:[#allocation3 + $0x8] sm:$0xff]
      %v1840 = vld [vmem:[#allocation3 + $0x10] sm:$0xff]
      %v1841 = vld [vmem:[#allocation3 + $0x18] sm:$0xff]
      %v1842 = vld [vmem:[#allocation3 + $0x20] sm:$0xff]
      %v1843 = vld [vmem:[#allocation3 + $0x28] sm:$0xff]
      %v1844 = vld [vmem:[#allocation3 + $0x30] sm:$0xff]
      %v1845 = vld [vmem:[#allocation3 + $0x38] sm:$0xff]
      %v1846 = vld [vmem:[#allocation3 + $0x40] sm:$0xff]
      %v1847 = vld [vmem:[#allocation3 + $0x48] sm:$0xff]
      %v1848 = vld [vmem:[#allocation3 + $0x50] sm:$0xff]
      %v1849 = vld [vmem:[#allocation3 + $0x58] sm:$0xff]
      %v1850 = vld [vmem:[#allocation3 + $0x60] sm:$0xff]
      %v1851 = vld [vmem:[#allocation3 + $0x68] sm:$0xff]
      %v1852 = vld [vmem:[#allocation3 + $0x70] sm:$0xff]
      %v1853 = vld [vmem:[#allocation3 + $0x78] sm:$0xff]
      %v1854 = vld [vmem:[%s4] sm:$0xf]
      %v1855 = vld [vmem:[%s4 + $0x4] sm:$0xf]
      %v1856 = vld [vmem:[%s4 + $0x8] sm:$0xf]
      %v1857 = vld [vmem:[%s4 + $0xc] sm:$0xf]
      %v1858 = vld [vmem:[%s4 + $0x10] sm:$0x3]
      %v1864 = vunpack.c.l.b16 %v1854
      %v1865 = vunpack.c.l.b16 %v1855
      %v1866 = vunpack.c.l.b16 %v1856
      %v1867 = vunpack.c.l.b16 %v1857
      %v1868 = vunpack.c.l.b16 %v1858
      %v1869 = vpack.c.b16 %v1865, %v1864
      %v1870 = vpack.c.b16 %v1867, %v1866
      %v1871 = vpack.c.b16 %v1868, %v1868
      %vm1874 = vcmask 293888
      %v1876 = vsel %vm1874, %v1838, 0
      %v1879 = vsel %vm1874, %v1839, 0
      %v1882 = vsel %vm1874, %v1840, 0
      %v1885 = vsel %vm1874, %v1841, 0
      %v1888 = vsel %vm1874, %v1842, 0
      %v1891 = vsel %vm1874, %v1843, 0
      %v1894 = vsel %vm1874, %v1844, 0
      %v1897 = vsel %vm1874, %v1845, 0
      %v1900 = vsel %vm1874, %v1846, 0
      %v1903 = vsel %vm1874, %v1847, 0
      %v1906 = vsel %vm1874, %v1848, 0
      %v1909 = vsel %vm1874, %v1849, 0
      %v1912 = vsel %vm1874, %v1850, 0
      %v1915 = vsel %vm1874, %v1851, 0
      %v1918 = vsel %vm1874, %v1852, 0
      %v1921 = vsel %vm1874, %v1853, 0
      %v1924 = vsel %vm378, %v1871, 0
      %1926 = vmatprep.subr.bf16.mxu0 0
      %1927 = vmatpush1.bf16.msra.mxu0 %v1869
      %1928 = vmatprep.subr.bf16.mxu0 0
      %1929 = vmatpush1.bf16.msra.mxu0 %v1870
      %1930 = vmatprep.subr.bf16.mxu0 0
      %1931 = vmatpush1.bf16.msra.mxu0 %v1924
      %1932 = vmatprep.subr.bf16.mxu0 0
      %1933 = vmatpush1.bf16.msra.mxu0 0
      %1934 = vmatprep.subr.bf16.mxu0 0
      %1935 = vmatpush1.bf16.msra.mxu0 0
      %1936 = vmatprep.subr.bf16.mxu0 0
      %1937 = vmatpush1.bf16.msra.mxu0 0
      %1938 = vmatprep.subr.bf16.mxu0 0
      %1939 = vmatpush1.bf16.msra.mxu0 0
      %1940 = vmatprep.subr.bf16.mxu0 0
      %1941 = vmatpush1.bf16.msra.mxu0 0
      %1942 = vmatprep.subr.bf16.mxu0 0
      %1943 = vmatpush1.bf16.msra.mxu0 0
      %1944 = vmatprep.subr.bf16.mxu0 0
      %1945 = vmatpush1.bf16.msra.mxu0 0
      %1946 = vmatprep.subr.bf16.mxu0 0
      %1947 = vmatpush1.bf16.msra.mxu0 0
      %1948 = vmatprep.subr.bf16.mxu0 0
      %1949 = vmatpush1.bf16.msra.mxu0 0
      %1950 = vmatprep.subr.bf16.mxu0 0
      %1951 = vmatpush1.bf16.msra.mxu0 0
      %1952 = vmatprep.subr.bf16.mxu0 0
      %1953 = vmatpush1.bf16.msra.mxu0 0
      %1954 = vmatprep.subr.bf16.mxu0 0
      %1955 = vmatpush1.bf16.msra.mxu0 0
      %1956 = vmatprep.subr.bf16.mxu0 0
      %1957 = vmatpush1.bf16.msra.mxu0 0
      %1958 = vmatprep.mubr.bf16.mxu0 0
      %1959 = vmatmul.mubr.bf16.gmra.mrb[0].mxu0 %v1876
      %v1960 = vpop.f32.mrb[0].mxu0
      %v1961 = vadd.f32 0.0, %v1960
      %v1962 = vpop.f32.mrb[0].mxu0
      %v1963 = vpop.f32.mrb[0].mxu0
      %v1964 = vadd.f32 0.0, %v1963
      %v1965 = vpop.f32.mrb[0].mxu0
      %1966 = vmatprep.mubr.bf16.mxu0 0
      %1967 = vmatmul.mubr.bf16.gmra.mrb[0].mxu0 %v1879
      %v1968 = vpop.f32.mrb[0].mxu0
      %v1969 = vadd.f32 0.0, %v1968
      %v1970 = vpop.f32.mrb[0].mxu0
      %v1971 = vpop.f32.mrb[0].mxu0
      %v1972 = vadd.f32 0.0, %v1971
      %v1973 = vpop.f32.mrb[0].mxu0
      %1974 = vmatprep.mubr.bf16.mxu0 0
      %1975 = vmatmul.mubr.bf16.gmra.mrb[0].mxu0 %v1882
      %v1976 = vpop.f32.mrb[0].mxu0
      %v1977 = vadd.f32 0.0, %v1976
      %v1978 = vpop.f32.mrb[0].mxu0
      %v1979 = vpop.f32.mrb[0].mxu0
      %v1980 = vadd.f32 0.0, %v1979
      %v1981 = vpop.f32.mrb[0].mxu0
      %1982 = vmatprep.mubr.bf16.mxu0 0
      %1983 = vmatmul.mubr.bf16.gmra.mrb[0].mxu0 %v1885
      %v1984 = vpop.f32.mrb[0].mxu0
      %v1985 = vadd.f32 0.0, %v1984
      %v1986 = vpop.f32.mrb[0].mxu0
      %v1987 = vpop.f32.mrb[0].mxu0
      %v1988 = vadd.f32 0.0, %v1987
      %v1989 = vpop.f32.mrb[0].mxu0
      %1990 = vmatprep.mubr.bf16.mxu0 0
      %1991 = vmatmul.mubr.bf16.gmra.mrb[0].mxu0 %v1888
      %v1992 = vpop.f32.mrb[0].mxu0
      %v1993 = vadd.f32 0.0, %v1992
      %v1994 = vpop.f32.mrb[0].mxu0
      %v1995 = vpop.f32.mrb[0].mxu0
      %v1996 = vadd.f32 0.0, %v1995
      %v1997 = vpop.f32.mrb[0].mxu0
      %1998 = vmatprep.mubr.bf16.mxu0 0
      %1999 = vmatmul.mubr.bf16.gmra.mrb[0].mxu0 %v1891
      %v2000 = vpop.f32.mrb[0].mxu0
      %v2001 = vadd.f32 0.0, %v2000
      %v2002 = vpop.f32.mrb[0].mxu0
      %v2003 = vpop.f32.mrb[0].mxu0
      %v2004 = vadd.f32 0.0, %v2003
      %v2005 = vpop.f32.mrb[0].mxu0
      %2006 = vmatprep.mubr.bf16.mxu0 0
      %2007 = vmatmul.mubr.bf16.gmra.mrb[0].mxu0 %v1894
      %v2008 = vpop.f32.mrb[0].mxu0
      %v2009 = vadd.f32 0.0, %v2008
      %v2010 = vpop.f32.mrb[0].mxu0
      %v2011 = vpop.f32.mrb[0].mxu0
      %v2012 = vadd.f32 0.0, %v2011
      %v2013 = vpop.f32.mrb[0].mxu0
      %2014 = vmatprep.mubr.bf16.mxu0 0
      %2015 = vmatmul.mubr.bf16.gmra.mrb[0].mxu0 %v1897
      %v2016 = vpop.f32.mrb[0].mxu0
      %v2017 = vadd.f32 0.0, %v2016
      %v2018 = vpop.f32.mrb[0].mxu0
      %v2019 = vpop.f32.mrb[0].mxu0
      %v2020 = vadd.f32 0.0, %v2019
      %v2021 = vpop.f32.mrb[0].mxu0
      %2022 = vmatprep.mubr.bf16.mxu0 0
      %2023 = vmatmul.mubr.bf16.gmra.mrb[0].mxu0 %v1900
      %v2024 = vpop.f32.mrb[0].mxu0
      %v2025 = vadd.f32 0.0, %v2024
      %v2026 = vpop.f32.mrb[0].mxu0
      %v2027 = vpop.f32.mrb[0].mxu0
      %v2028 = vadd.f32 0.0, %v2027
      %v2029 = vpop.f32.mrb[0].mxu0
      %2030 = vmatprep.mubr.bf16.mxu0 0
      %2031 = vmatmul.mubr.bf16.gmra.mrb[0].mxu0 %v1903
      %v2032 = vpop.f32.mrb[0].mxu0
      %v2033 = vadd.f32 0.0, %v2032
      %v2034 = vpop.f32.mrb[0].mxu0
      %v2035 = vpop.f32.mrb[0].mxu0
      %v2036 = vadd.f32 0.0, %v2035
      %v2037 = vpop.f32.mrb[0].mxu0
      %2038 = vmatprep.mubr.bf16.mxu0 0
      %2039 = vmatmul.mubr.bf16.gmra.mrb[0].mxu0 %v1906
      %v2040 = vpop.f32.mrb[0].mxu0
      %v2041 = vadd.f32 0.0, %v2040
      %v2042 = vpop.f32.mrb[0].mxu0
      %v2043 = vpop.f32.mrb[0].mxu0
      %v2044 = vadd.f32 0.0, %v2043
      %v2045 = vpop.f32.mrb[0].mxu0
      %2046 = vmatprep.mubr.bf16.mxu0 0
      %2047 = vmatmul.mubr.bf16.gmra.mrb[0].mxu0 %v1909
      %v2048 = vpop.f32.mrb[0].mxu0
      %v2049 = vadd.f32 0.0, %v2048
      %v2050 = vpop.f32.mrb[0].mxu0
      %v2051 = vpop.f32.mrb[0].mxu0
      %v2052 = vadd.f32 0.0, %v2051
      %v2053 = vpop.f32.mrb[0].mxu0
      %2054 = vmatprep.mubr.bf16.mxu0 0
      %2055 = vmatmul.mubr.bf16.gmra.mrb[0].mxu0 %v1912
      %v2056 = vpop.f32.mrb[0].mxu0
      %v2057 = vadd.f32 0.0, %v2056
      %v2058 = vpop.f32.mrb[0].mxu0
      %v2059 = vpop.f32.mrb[0].mxu0
      %v2060 = vadd.f32 0.0, %v2059
      %v2061 = vpop.f32.mrb[0].mxu0
      %2062 = vmatprep.mubr.bf16.mxu0 0
      %2063 = vmatmul.mubr.bf16.gmra.mrb[0].mxu0 %v1915
      %v2064 = vpop.f32.mrb[0].mxu0
      %v2065 = vadd.f32 0.0, %v2064
      %v2066 = vpop.f32.mrb[0].mxu0
      %v2067 = vpop.f32.mrb[0].mxu0
      %v2068 = vadd.f32 0.0, %v2067
      %v2069 = vpop.f32.mrb[0].mxu0
      %2070 = vmatprep.mubr.bf16.mxu0 0
      %2071 = vmatmul.mubr.bf16.gmra.mrb[0].mxu0 %v1918
      %v2072 = vpop.f32.mrb[0].mxu0
      %v2073 = vadd.f32 0.0, %v2072
      %v2074 = vpop.f32.mrb[0].mxu0
      %v2075 = vpop.f32.mrb[0].mxu0
      %v2076 = vadd.f32 0.0, %v2075
      %v2077 = vpop.f32.mrb[0].mxu0
      %2078 = vmatprep.mubr.bf16.mxu0 0
      %2079 = vmatmul.mubr.bf16.gmra.mrb[0].mxu0 %v1921
      %v2080 = vpop.f32.mrb[0].mxu0
      %v2081 = vadd.f32 0.0, %v2080
      %v2082 = vpop.f32.mrb[0].mxu0
      %v2083 = vpop.f32.mrb[0].mxu0
      %v2084 = vadd.f32 0.0, %v2083
      %v2085 = vpop.f32.mrb[0].mxu0
      %2086 = vdwg.mxu0
      %v2087 = vld [vmem:[%s273] sm:$0xff]
      %v2088 = vld [vmem:[%s273 + $0x8] sm:$0xff]
      %v2089 = vld [vmem:[%s273 + $0x10] sm:$0xff]
      %v2090 = vld [vmem:[%s273 + $0x18] sm:$0xff]
      %v2091 = vld [vmem:[%s273 + $0x20] sm:$0xff]
      %v2092 = vld [vmem:[%s273 + $0x28] sm:$0xff]
      %v2093 = vld [vmem:[%s273 + $0x30] sm:$0xff]
      %v2094 = vld [vmem:[%s273 + $0x38] sm:$0xff]
      %v2095 = vld [vmem:[%s273 + $0x40] sm:$0xff]
      %v2096 = vld [vmem:[%s273 + $0x48] sm:$0xff]
      %v2097 = vld [vmem:[%s273 + $0x50] sm:$0xff]
      %v2098 = vld [vmem:[%s273 + $0x58] sm:$0xff]
      %v2099 = vld [vmem:[%s273 + $0x60] sm:$0xff]
      %v2100 = vld [vmem:[%s273 + $0x68] sm:$0xff]
      %v2101 = vld [vmem:[%s273 + $0x70] sm:$0xff]
      %v2102 = vld [vmem:[%s273 + $0x78] sm:$0xff]
      %v2103 = vld [vmem:[%s273 + $0x80] sm:$0xff]
      %v2104 = vld [vmem:[%s273 + $0x88] sm:$0xff]
      %v2105 = vld [vmem:[%s273 + $0x90] sm:$0xff]
      %v2106 = vld [vmem:[%s273 + $0x98] sm:$0xff]
      %v2107 = vld [vmem:[%s273 + $0xa0] sm:$0xff]
      %v2108 = vld [vmem:[%s273 + $0xa8] sm:$0xff]
      %v2109 = vld [vmem:[%s273 + $0xb0] sm:$0xff]
      %v2110 = vld [vmem:[%s273 + $0xb8] sm:$0xff]
      %v2111 = vld [vmem:[%s273 + $0xc0] sm:$0xff]
      %v2112 = vld [vmem:[%s273 + $0xc8] sm:$0xff]
      %v2113 = vld [vmem:[%s273 + $0xd0] sm:$0xff]
      %v2114 = vld [vmem:[%s273 + $0xd8] sm:$0xff]
      %v2115 = vld [vmem:[%s273 + $0xe0] sm:$0xff]
      %v2116 = vld [vmem:[%s273 + $0xe8] sm:$0xff]
      %v2117 = vld [vmem:[%s273 + $0xf0] sm:$0xff]
      %v2118 = vld [vmem:[%s273 + $0xf8] sm:$0xff]
      %v2119 = vld [vmem:[%s5] sm:$0x1]
      %v2121 = vlaneseq
      %v2122 = vshrl.u32 %v2121, 7
      %v2123 = vsub.s32 0, %v2122
      %v2124 = vrot.slane %v2119, %v2123
      %v2126 = vmul.f32 %v1961, %v2124
      %v2127 = vmul.f32 %v1964, %v2124
      %v2128 = vmul.f32 %v1969, %v2124
      %v2129 = vmul.f32 %v1972, %v2124
      %v2130 = vmul.f32 %v1977, %v2124
      %v2131 = vmul.f32 %v1980, %v2124
      %v2132 = vmul.f32 %v1985, %v2124
      %v2133 = vmul.f32 %v1988, %v2124
      %v2134 = vmul.f32 %v1993, %v2124
      %v2135 = vmul.f32 %v1996, %v2124
      %v2136 = vmul.f32 %v2001, %v2124
      %v2137 = vmul.f32 %v2004, %v2124
      %v2138 = vmul.f32 %v2009, %v2124
      %v2139 = vmul.f32 %v2012, %v2124
      %v2140 = vmul.f32 %v2017, %v2124
      %v2141 = vmul.f32 %v2020, %v2124
      %v2142 = vmul.f32 %v2025, %v2124
      %v2143 = vmul.f32 %v2028, %v2124
      %v2144 = vmul.f32 %v2033, %v2124
      %v2145 = vmul.f32 %v2036, %v2124
      %v2146 = vmul.f32 %v2041, %v2124
      %v2147 = vmul.f32 %v2044, %v2124
      %v2148 = vmul.f32 %v2049, %v2124
      %v2149 = vmul.f32 %v2052, %v2124
      %v2150 = vmul.f32 %v2057, %v2124
      %v2151 = vmul.f32 %v2060, %v2124
      %v2152 = vmul.f32 %v2065, %v2124
      %v2153 = vmul.f32 %v2068, %v2124
      %v2154 = vmul.f32 %v2073, %v2124
      %v2155 = vmul.f32 %v2076, %v2124
      %v2156 = vmul.f32 %v2081, %v2124
      %v2157 = vmul.f32 %v2084, %v2124
      %v2158 = vld [vmem:[%s6] sm:$0x1]
      %v2160 = vlaneseq
      %v2161 = vshrl.u32 %v2160, 7
      %v2162 = vsub.s32 0, %v2161
      %v2163 = vrot.slane %v2158, %v2162
      %v2165 = vadd.f32 %v2126, %v2163
      %v2166 = vadd.f32 %v2127, %v2163
      %v2167 = vadd.f32 %v2128, %v2163
      %v2168 = vadd.f32 %v2129, %v2163
      %v2169 = vadd.f32 %v2130, %v2163
      %v2170 = vadd.f32 %v2131, %v2163
      %v2171 = vadd.f32 %v2132, %v2163
      %v2172 = vadd.f32 %v2133, %v2163
      %v2173 = vadd.f32 %v2134, %v2163
      %v2174 = vadd.f32 %v2135, %v2163
      %v2175 = vadd.f32 %v2136, %v2163
      %v2176 = vadd.f32 %v2137, %v2163
      %v2177 = vadd.f32 %v2138, %v2163
      %v2178 = vadd.f32 %v2139, %v2163
      %v2179 = vadd.f32 %v2140, %v2163
      %v2180 = vadd.f32 %v2141, %v2163
      %v2181 = vadd.f32 %v2142, %v2163
      %v2182 = vadd.f32 %v2143, %v2163
      %v2183 = vadd.f32 %v2144, %v2163
      %v2184 = vadd.f32 %v2145, %v2163
      %v2185 = vadd.f32 %v2146, %v2163
      %v2186 = vadd.f32 %v2147, %v2163
      %v2187 = vadd.f32 %v2148, %v2163
      %v2188 = vadd.f32 %v2149, %v2163
      %v2189 = vadd.f32 %v2150, %v2163
      %v2190 = vadd.f32 %v2151, %v2163
      %v2191 = vadd.f32 %v2152, %v2163
      %v2192 = vadd.f32 %v2153, %v2163
      %v2193 = vadd.f32 %v2154, %v2163
      %v2194 = vadd.f32 %v2155, %v2163
      %v2195 = vadd.f32 %v2156, %v2163
      %v2196 = vadd.f32 %v2157, %v2163
      %v2197 = vadd.f32 %v2165, %v2087
      %v2198 = vadd.f32 %v2166, %v2088
      %v2199 = vadd.f32 %v2167, %v2089
      %v2200 = vadd.f32 %v2168, %v2090
      %v2201 = vadd.f32 %v2169, %v2091
      %v2202 = vadd.f32 %v2170, %v2092
      %v2203 = vadd.f32 %v2171, %v2093
      %v2204 = vadd.f32 %v2172, %v2094
      %v2205 = vadd.f32 %v2173, %v2095
      %v2206 = vadd.f32 %v2174, %v2096
      %v2207 = vadd.f32 %v2175, %v2097
      %v2208 = vadd.f32 %v2176, %v2098
      %v2209 = vadd.f32 %v2177, %v2099
      %v2210 = vadd.f32 %v2178, %v2100
      %v2211 = vadd.f32 %v2179, %v2101
      %v2212 = vadd.f32 %v2180, %v2102
      %v2213 = vadd.f32 %v2181, %v2103
      %v2214 = vadd.f32 %v2182, %v2104
      %v2215 = vadd.f32 %v2183, %v2105
      %v2216 = vadd.f32 %v2184, %v2106
      %v2217 = vadd.f32 %v2185, %v2107
      %v2218 = vadd.f32 %v2186, %v2108
      %v2219 = vadd.f32 %v2187, %v2109
      %v2220 = vadd.f32 %v2188, %v2110
      %v2221 = vadd.f32 %v2189, %v2111
      %v2222 = vadd.f32 %v2190, %v2112
      %v2223 = vadd.f32 %v2191, %v2113
      %v2224 = vadd.f32 %v2192, %v2114
      %v2225 = vadd.f32 %v2193, %v2115
      %v2226 = vadd.f32 %v2194, %v2116
      %v2227 = vadd.f32 %v2195, %v2117
      %v2228 = vadd.f32 %v2196, %v2118
      %v2229 = vmax.f32 %v2197, 0.0
      %v2230 = vmax.f32 %v2198, 0.0
      %v2231 = vmax.f32 %v2199, 0.0
      %v2232 = vmax.f32 %v2200, 0.0
      %v2233 = vmax.f32 %v2201, 0.0
      %v2234 = vmax.f32 %v2202, 0.0
      %v2235 = vmax.f32 %v2203, 0.0
      %v2236 = vmax.f32 %v2204, 0.0
      %v2237 = vmax.f32 %v2205, 0.0
      %v2238 = vmax.f32 %v2206, 0.0
      %v2239 = vmax.f32 %v2207, 0.0
      %v2240 = vmax.f32 %v2208, 0.0
      %v2241 = vmax.f32 %v2209, 0.0
      %v2242 = vmax.f32 %v2210, 0.0
      %v2243 = vmax.f32 %v2211, 0.0
      %v2244 = vmax.f32 %v2212, 0.0
      %v2245 = vmax.f32 %v2213, 0.0
      %v2246 = vmax.f32 %v2214, 0.0
      %v2247 = vmax.f32 %v2215, 0.0
      %v2248 = vmax.f32 %v2216, 0.0
      %v2249 = vmax.f32 %v2217, 0.0
      %v2250 = vmax.f32 %v2218, 0.0
      %v2251 = vmax.f32 %v2219, 0.0
      %v2252 = vmax.f32 %v2220, 0.0
      %v2253 = vmax.f32 %v2221, 0.0
      %v2254 = vmax.f32 %v2222, 0.0
      %v2255 = vmax.f32 %v2223, 0.0
      %v2256 = vmax.f32 %v2224, 0.0
      %v2257 = vmax.f32 %v2225, 0.0
      %v2258 = vmax.f32 %v2226, 0.0
      %v2259 = vmax.f32 %v2227, 0.0
      %v2260 = vmax.f32 %v2228, 0.0
      %2261 = vst.msk [vmem:[%s278] sm:$0xff] %vm329, %v2229
      %2262 = vst.msk [vmem:[%s278 + $0x8] sm:$0xff] %vm329, %v2230
      %2263 = vst.msk [vmem:[%s278 + $0x10] sm:$0xff] %vm329, %v2231
      %2264 = vst.msk [vmem:[%s278 + $0x18] sm:$0xff] %vm329, %v2232
      %2265 = vst.msk [vmem:[%s278 + $0x20] sm:$0xff] %vm329, %v2233
      %2266 = vst.msk [vmem:[%s278 + $0x28] sm:$0xff] %vm329, %v2234
      %2267 = vst.msk [vmem:[%s278 + $0x30] sm:$0xff] %vm329, %v2235
      %2268 = vst.msk [vmem:[%s278 + $0x38] sm:$0xff] %vm329, %v2236
      %2269 = vst.msk [vmem:[%s278 + $0x40] sm:$0xff] %vm329, %v2237
      %2270 = vst.msk [vmem:[%s278 + $0x48] sm:$0xff] %vm329, %v2238
      %2271 = vst.msk [vmem:[%s278 + $0x50] sm:$0xff] %vm329, %v2239
      %2272 = vst.msk [vmem:[%s278 + $0x58] sm:$0xff] %vm329, %v2240
      %2273 = vst.msk [vmem:[%s278 + $0x60] sm:$0xff] %vm329, %v2241
      %2274 = vst.msk [vmem:[%s278 + $0x68] sm:$0xff] %vm329, %v2242
      %2275 = vst.msk [vmem:[%s278 + $0x70] sm:$0xff] %vm329, %v2243
      %2276 = vst.msk [vmem:[%s278 + $0x78] sm:$0xff] %vm329, %v2244
      %2277 = vst.msk [vmem:[%s278 + $0x80] sm:$0xff] %vm329, %v2245
      %2278 = vst.msk [vmem:[%s278 + $0x88] sm:$0xff] %vm329, %v2246
      %2279 = vst.msk [vmem:[%s278 + $0x90] sm:$0xff] %vm329, %v2247
      %2280 = vst.msk [vmem:[%s278 + $0x98] sm:$0xff] %vm329, %v2248
      %2281 = vst.msk [vmem:[%s278 + $0xa0] sm:$0xff] %vm329, %v2249
      %2282 = vst.msk [vmem:[%s278 + $0xa8] sm:$0xff] %vm329, %v2250
      %2283 = vst.msk [vmem:[%s278 + $0xb0] sm:$0xff] %vm329, %v2251
      %2284 = vst.msk [vmem:[%s278 + $0xb8] sm:$0xff] %vm329, %v2252
      %2285 = vst.msk [vmem:[%s278 + $0xc0] sm:$0xff] %vm329, %v2253
      %2286 = vst.msk [vmem:[%s278 + $0xc8] sm:$0xff] %vm329, %v2254
      %2287 = vst.msk [vmem:[%s278 + $0xd0] sm:$0xff] %vm329, %v2255
      %2288 = vst.msk [vmem:[%s278 + $0xd8] sm:$0xff] %vm329, %v2256
      %2289 = vst.msk [vmem:[%s278 + $0xe0] sm:$0xff] %vm329, %v2257
      %2290 = vst.msk [vmem:[%s278 + $0xe8] sm:$0xff] %vm329, %v2258
      %2291 = vst.msk [vmem:[%s278 + $0xf0] sm:$0xff] %vm329, %v2259
      %2292 = vst.msk [vmem:[%s278 + $0xf8] sm:$0xff] %vm329, %v2260
      %p2293 = scmp.lt.s32.totalorder %s18, 1
      %s2294 = scalar_select %p2293, %s18, 1
      %s2295 = smul.addr %s2294, 32
      %s2296 = smul.addr %s2295, 8
      %s2297 = scalar_lea.vmem %s7, %s2296
      // Predicated region
      $region49: #{bottleneck_forward.5} parent=47 // pred_check
        %p2298 = pneg %p188
      $region50: #{bottleneck_forward.5} parent=47 // pred_check_branch
        %2300 = sbr.rel (%p2298) target = $region52
      $region51: #{bottleneck_forward.5} parent=47 // pred_region
        _
      $region52: #{bottleneck_forward.5} parent=47 // pred_fallthru
        _
    $region48: #{bottleneck_forward.5} parent=5 // pred_fallthru
      _
    %p2301 = scmp.le.s32.totalorder 2, %s13
    // Predicated region
    $region53: #{bottleneck_forward.5} parent=5 // pred_check
      %p2302 = pneg %p2301
    $region54: #{bottleneck_forward.5} parent=5 // pred_check_branch
      %2304 = sbr.rel (%p2302) target = $region56
    $region55: #{bottleneck_forward.5} parent=5 // pred_region
      %s2305 = ssub.s32 %s13, 2
      // Predicated region
      $region57: #{bottleneck_forward.5} parent=55 // pred_check
        %p2306 = pneg %p194
      $region58: #{bottleneck_forward.5} parent=55 // pred_check_branch
        %2308 = sbr.rel (%p2306) target = $region60
      $region59: #{bottleneck_forward.5} parent=55 // pred_region
        %p2309 = scmp.lt.s32.totalorder %s19, 1
        %s2310 = scalar_select %p2309, %s19, 1
        %s2311 = smul.addr %s2310, 32
        %s2312 = smul.addr %s2311, 8
        %s2313 = scalar_lea.vmem %s7, %s2312
      $region60: #{bottleneck_forward.5} parent=55 // pred_fallthru
        _
    $region56: #{bottleneck_forward.5} parent=5 // pred_fallthru
      _
  $region6: #{bottleneck_forward.5} parent=0 // loop_footer
    %s17 = sadd.s32 1, %s13
  $region7: #{bottleneck_forward.5} parent=0 // loop_footer_branch
    %12 = sbr.rel target = $region3
  $region8: #{bottleneck_forward.5} parent=0 // loop_exit
    _

</llo_original>
